<compile_context>
chip_gen: v5e
topology: v5e:2x2
jax: 0.10.0
libtpu: 0.0.40
codegen_flags: <defaults>
</compile_context>

<pallas_src>
import functools

import jax
import jax.numpy as jnp
from jax.experimental import pallas as pl
from jax.experimental.pallas import tpu as pltpu


def _round_up(x, m):
    return ((x + m - 1) // m) * m


# ------------------------------ fused kernel ---------------------------------

def make_lstmlm_kernel(n_layers, T, B, E, H, Vp):
    """Build the fused forward kernel; all shapes are static (closed over)."""
    N = T * B
    HIGHEST = jax.lax.Precision.HIGHEST

    def kernel(ids_ref, emb_ref, *rest):
        lw = rest[:3 * n_layers]
        w1_ref, b1_ref, w2_ref, b2_ref = rest[3 * n_layers:3 * n_layers + 4]
        o_ref = rest[3 * n_layers + 4]

        # ---- embedding lookup as an exact one-hot matmul (fused gather) ----
        ids = ids_ref[...]                                   # (N, 1) i32, time-major rows
        vocab = emb_ref.shape[0]
        onehot = (jax.lax.broadcasted_iota(jnp.int32, (N, vocab), 1)
                  == ids).astype(jnp.float32)                # (N, vocab)
        x = jnp.dot(onehot, emb_ref[...],
                    preferred_element_type=jnp.float32,
                    precision=HIGHEST)                       # (N, E), exact lookup

        # ---- load all weights once into traced values ----
        wih = [lw[3 * l][...] for l in range(n_layers)]       # (Din, 4H)
        whh = [lw[3 * l + 1][...] for l in range(n_layers)]   # (H, 4H)
        bias = [lw[3 * l + 2][...] for l in range(n_layers)]  # (1, 4H) = b_ih + b_hh
        w1 = w1_ref[...]; b1 = b1_ref[...]                    # (H, H/2), (1, H/2)
        w2 = w2_ref[...]; b2 = b2_ref[...]                    # (H/2, Vp), (1, Vp)

        # ---- layer-0 input projection hoisted over all timesteps ----
        g0 = jnp.dot(x, wih[0],
                     preferred_element_type=jnp.float32) + bias[0]       # (N, 4H)

        def cell(pre, h_prev, c_prev, whh_l):
            # PyTorch nn.LSTM gate order: [i | f | g | o].
            gates = pre + jnp.dot(h_prev, whh_l,
                                  preferred_element_type=jnp.float32)    # (B, 4H)
            sg = jax.nn.sigmoid(gates)     # one full 128-lane EUP pass
            th = jnp.tanh(gates)           # one full 128-lane EUP pass
            i = sg[:, 0:H]
            f = sg[:, H:2 * H]
            g = th[:, 2 * H:3 * H]
            o = sg[:, 3 * H:4 * H]
            c_new = f * c_prev + i * g
            h_new = o * jnp.tanh(c_new)
            return h_new, c_new

        h = [jnp.zeros((B, H), jnp.float32) for _ in range(n_layers)]
        c = [jnp.zeros((B, H), jnp.float32) for _ in range(n_layers)]
        h_out = [[None] * T for _ in range(n_layers)]

        # Wavefront over (layer, time): at step s, layer l processes t = s - l.
        # T and n_layers are static & tiny -> fully unrolled at trace time.
        for s in range(T + n_layers - 1):
            for l in range(n_layers):
                t = s - l
                if not (0 <= t < T):
                    continue
                if l == 0:
                    pre = g0[t * B:(t + 1) * B, :]            # hoisted, static slice
                else:
                    # per-step input projection from the layer below (available
                    # since the previous wavefront step; off this layer's chain)
                    pre = jnp.dot(h_out[l - 1][t], wih[l],
                                  preferred_element_type=jnp.float32) + bias[l]
                h[l], c[l] = cell(pre, h[l], c[l], whh[l])
                h_out[l][t] = h[l]

                # ---- fused head on the top layer's h as soon as it exists ----
                if l == n_layers - 1:
                    h1 = jnp.dot(h[l], w1, preferred_element_type=jnp.float32,
                                 precision=HIGHEST) + b1                  # (B, H/2)
                    logits = jnp.dot(h1, w2, preferred_element_type=jnp.float32,
                                     precision=HIGHEST) + b2              # (B, Vp)
                    # Padded lanes carry bias -1e30 -> never win max, exp()==0.
                    m = jnp.max(logits, axis=-1, keepdims=True)
                    sh = logits - m
                    lse = jnp.log(jnp.sum(jnp.exp(sh), axis=-1, keepdims=True))
                    lp = sh - lse                                         # LogSoftmax
                    # Store directly in batch-major (b*T + t) row order so the
                    # wrapper needs no transpose, only the vocab-pad slice.
                    for b in range(B):
                        o_ref[b * T + t: b * T + t + 1, :] = lp[b:b + 1, :]

    return kernel


# ------------------------------ model wrapper --------------------------------

def init_params(key, input_size, embedding_size, hidden_size, output_size, n_layers):
    H = hidden_size
    h2 = H // 2
    keys = jax.random.split(key, 1 + 4 * n_layers + 4)
    idx = 0
    params = {}
    # nn.Embedding default init: N(0, 1)
    params["embedding"] = jax.random.normal(
        keys[idx], (input_size, embedding_size), jnp.float32); idx += 1

    k = 1.0 / jnp.sqrt(jnp.float32(H))
    lstm = []
    for layer in range(n_layers):
        din = embedding_size if layer == 0 else H
        wih = jax.random.uniform(keys[idx], (4 * H, din), jnp.float32, -k, k); idx += 1
        whh = jax.random.uniform(keys[idx], (4 * H, H), jnp.float32, -k, k); idx += 1
        bih = jax.random.uniform(keys[idx], (4 * H,), jnp.float32, -k, k); idx += 1
        bhh = jax.random.uniform(keys[idx], (4 * H,), jnp.float32, -k, k); idx += 1
        lstm.append({"wih_t": wih.T,                         # (Din, 4H)
                     "whh_t": whh.T,                         # (H, 4H)
                     "b": (bih + bhh).reshape(1, 4 * H)})    # summed LSTM biases
    params["lstm"] = lstm

    kf = 1.0 / jnp.sqrt(jnp.float32(H))
    fc_w = jax.random.uniform(keys[idx], (h2, H), jnp.float32, -kf, kf); idx += 1
    fc_b = jax.random.uniform(keys[idx], (h2,), jnp.float32, -kf, kf); idx += 1
    kf2 = 1.0 / jnp.sqrt(jnp.float32(h2))
    fc2_w = jax.random.uniform(keys[idx], (output_size, h2), jnp.float32, -kf2, kf2); idx += 1
    fc2_b = jax.random.uniform(keys[idx], (output_size,), jnp.float32, -kf2, kf2); idx += 1

    params["fc_w_t"] = fc_w.T                    # (H, H/2)
    params["fc_b"] = fc_b.reshape(1, h2)

    # Pad vocab dim to a multiple of 128 -> lane-dense head output store.
    Vp = _round_up(output_size, 128)
    params["fc2_w_t_pad"] = (jnp.zeros((h2, Vp), jnp.float32)
                             .at[:, :output_size].set(fc2_w.T))        # (H/2, Vp)
    params["fc2_b_pad"] = (jnp.full((1, Vp), -1e30, jnp.float32)
                           .at[0, :output_size].set(fc2_b))            # (1, Vp)
    params["output_size"] = output_size
    return params


def lstmlm_forward(params, token_ids):
    """token_ids: (B, T) int -> log-probs (B, T, output_size) f32."""
    B, T = token_ids.shape
    emb = params["embedding"]
    E = emb.shape[1]
    H = params["lstm"][0]["whh_t"].shape[0]
    n_layers = len(params["lstm"])
    Vp = params["fc2_w_t_pad"].shape[1]
    V = params["output_size"]
    N = T * B

    # time-major row order (row = t*B + b) for the recurrence; tiny int op.
    ids_tb = jnp.transpose(token_ids.astype(jnp.int32), (1, 0)).reshape(N, 1)

    flat = []
    for layer in params["lstm"]:
        flat += [layer["wih_t"], layer["whh_t"], layer["b"]]
    flat += [params["fc_w_t"], params["fc_b"],
             params["fc2_w_t_pad"], params["fc2_b_pad"]]

    kernel = make_lstmlm_kernel(n_layers, T, B, E, H, Vp)
    n_inputs = 2 + len(flat)
    out = pl.pallas_call(
        kernel,
        out_shape=jax.ShapeDtypeStruct((N, Vp), jnp.float32),   # rows = b*T + t
        in_specs=[pl.BlockSpec(memory_space=pltpu.MemorySpace.VMEM)] * n_inputs,
        out_specs=pl.BlockSpec(memory_space=pltpu.MemorySpace.VMEM),
    )(ids_tb, emb, *flat)

    # Output is already batch-major; only the vocab padding needs slicing off.
    return out.reshape(B, T, Vp)[:, :, :V]


if __name__ == "__main__":
    # LSTMLM(input_size=50, embedding_size=16, hidden_size=32, output_size=50,
    #        n_layers=2, dropout_p=0.1)
    input_size = 50
    embedding_size = 16
    hidden_size = 32
    output_size = 50
    n_layers = 2

    key = jax.random.PRNGKey(0)
    k_param, k_data = jax.random.split(key)
    params = init_params(k_param, input_size, embedding_size,
                         hidden_size, output_size, n_layers)

    batch, seq = 2, 8
    token_ids = jax.random.randint(k_data, (batch, seq), 0, input_size, dtype=jnp.int32)

    fwd = jax.jit(functools.partial(lstmlm_forward, params))
    out = jax.block_until_ready(fwd(token_ids))

    assert out.shape == (batch, seq, output_size), out.shape
    assert out.dtype == jnp.float32
    assert bool(jnp.all(jnp.isfinite(out)))
    # log_softmax rows must exponentiate-sum to ~1
    row_sums = jnp.sum(jnp.exp(out), axis=-1)
    assert bool(jnp.all(jnp.abs(row_sums - 1.0) < 1e-3))
    print("KERNEL_OK")
</pallas_src>

<mosaic_0001>
module attributes {stable_mosaic.version = 11 : i64} {
  func.func @kernel(%arg0: memref<16x1xi32, #tpu.memory_space<vmem>>, %arg1: memref<50x16xf32, #tpu.memory_space<vmem>>, %arg2: memref<16x128xf32, #tpu.memory_space<vmem>>, %arg3: memref<32x128xf32, #tpu.memory_space<vmem>>, %arg4: memref<1x128xf32, #tpu.memory_space<vmem>>, %arg5: memref<32x128xf32, #tpu.memory_space<vmem>>, %arg6: memref<32x128xf32, #tpu.memory_space<vmem>>, %arg7: memref<1x128xf32, #tpu.memory_space<vmem>>, %arg8: memref<32x16xf32, #tpu.memory_space<vmem>>, %arg9: memref<1x16xf32, #tpu.memory_space<vmem>>, %arg10: memref<16x128xf32, #tpu.memory_space<vmem>>, %arg11: memref<1x128xf32, #tpu.memory_space<vmem>>, %arg12: memref<16x128xf32, #tpu.memory_space<vmem>>) attributes {dimension_semantics = [], scalar_prefetch = 0 : i64, scratch_operands = 0 : i64, tpu.core_type = #tpu.core_type<tc>} {
    %c0 = arith.constant 0 : index
    %c0_0 = arith.constant 0 : index
    %0 = vector.load %arg0[%c0, %c0_0] : memref<16x1xi32, #tpu.memory_space<vmem>>, vector<16x1xi32>
    %1 = tpu.iota {dimensions = array<i32: 1>} : vector<16x50xi32>
    %2 = vector.broadcast %0 : vector<16x1xi32> to vector<16x50xi32>
    %3 = arith.cmpi eq, %1, %2 : vector<16x50xi32>
    %4 = arith.extui %3 : vector<16x50xi1> to vector<16x50xi32>
    %5 = arith.sitofp %4 : vector<16x50xi32> to vector<16x50xf32>
    %c0_1 = arith.constant 0 : index
    %c0_2 = arith.constant 0 : index
    %6 = vector.load %arg1[%c0_1, %c0_2] : memref<50x16xf32, #tpu.memory_space<vmem>>, vector<50x16xf32>
    %cst = arith.constant dense<0.000000e+00> : vector<16x16xf32>
    %7 = tpu.matmul %5, %6, %cst {dimension_numbers = #tpu.dot_dimension_numbers<[1], [0], [0], [1], [0, 0, 1, 1], [], []>, precision = #tpu.contract_precision<fp32>} : vector<16x50xf32>, vector<50x16xf32>, vector<16x16xf32> -> vector<16x16xf32>
    %c0_3 = arith.constant 0 : index
    %c0_4 = arith.constant 0 : index
    %8 = vector.load %arg2[%c0_3, %c0_4] : memref<16x128xf32, #tpu.memory_space<vmem>>, vector<16x128xf32>
    %c0_5 = arith.constant 0 : index
    %c0_6 = arith.constant 0 : index
    %9 = vector.load %arg5[%c0_5, %c0_6] : memref<32x128xf32, #tpu.memory_space<vmem>>, vector<32x128xf32>
    %c0_7 = arith.constant 0 : index
    %c0_8 = arith.constant 0 : index
    %10 = vector.load %arg3[%c0_7, %c0_8] : memref<32x128xf32, #tpu.memory_space<vmem>>, vector<32x128xf32>
    %c0_9 = arith.constant 0 : index
    %c0_10 = arith.constant 0 : index
    %11 = vector.load %arg6[%c0_9, %c0_10] : memref<32x128xf32, #tpu.memory_space<vmem>>, vector<32x128xf32>
    %c0_11 = arith.constant 0 : index
    %c0_12 = arith.constant 0 : index
    %12 = vector.load %arg4[%c0_11, %c0_12] : memref<1x128xf32, #tpu.memory_space<vmem>>, vector<1x128xf32>
    %c0_13 = arith.constant 0 : index
    %c0_14 = arith.constant 0 : index
    %13 = vector.load %arg7[%c0_13, %c0_14] : memref<1x128xf32, #tpu.memory_space<vmem>>, vector<1x128xf32>
    %c0_15 = arith.constant 0 : index
    %c0_16 = arith.constant 0 : index
    %14 = vector.load %arg8[%c0_15, %c0_16] : memref<32x16xf32, #tpu.memory_space<vmem>>, vector<32x16xf32>
    %c0_17 = arith.constant 0 : index
    %c0_18 = arith.constant 0 : index
    %15 = vector.load %arg9[%c0_17, %c0_18] : memref<1x16xf32, #tpu.memory_space<vmem>>, vector<1x16xf32>
    %c0_19 = arith.constant 0 : index
    %c0_20 = arith.constant 0 : index
    %16 = vector.load %arg10[%c0_19, %c0_20] : memref<16x128xf32, #tpu.memory_space<vmem>>, vector<16x128xf32>
    %c0_21 = arith.constant 0 : index
    %c0_22 = arith.constant 0 : index
    %17 = vector.load %arg11[%c0_21, %c0_22] : memref<1x128xf32, #tpu.memory_space<vmem>>, vector<1x128xf32>
    %cst_23 = arith.constant dense<0.000000e+00> : vector<16x128xf32>
    %18 = tpu.matmul %7, %8, %cst_23 {dimension_numbers = #tpu.dot_dimension_numbers<[1], [0], [0], [1], [0, 0, 1, 1], [], []>} : vector<16x16xf32>, vector<16x128xf32>, vector<16x128xf32> -> vector<16x128xf32>
    %19 = vector.broadcast %12 : vector<1x128xf32> to vector<16x128xf32>
    %20 = arith.addf %18, %19 : vector<16x128xf32>
    %cst_24 = arith.constant 0.000000e+00 : f32
    %21 = vector.broadcast %cst_24 : f32 to vector<2x32xf32>
    %cst_25 = arith.constant 0.000000e+00 : f32
    %22 = vector.broadcast %cst_25 : f32 to vector<2x32xf32>
    %cst_26 = arith.constant 0.000000e+00 : f32
    %23 = vector.broadcast %cst_26 : f32 to vector<2x32xf32>
    %cst_27 = arith.constant 0.000000e+00 : f32
    %24 = vector.broadcast %cst_27 : f32 to vector<2x32xf32>
    %25 = vector.extract_strided_slice %20 {offsets = [0, 0], sizes = [2, 128], strides = [1, 1]} : vector<16x128xf32> to vector<2x128xf32>
    %cst_28 = arith.constant dense<0.000000e+00> : vector<2x128xf32>
    %26 = tpu.matmul %21, %10, %cst_28 {dimension_numbers = #tpu.dot_dimension_numbers<[1], [0], [0], [1], [0, 0, 1, 1], [], []>} : vector<2x32xf32>, vector<32x128xf32>, vector<2x128xf32> -> vector<2x128xf32>
    %27 = arith.addf %25, %26 : vector<2x128xf32>
    %28 = arith.negf %27 : vector<2x128xf32>
    %29 = math.exp %28 : vector<2x128xf32>
    %cst_29 = arith.constant 1.000000e+00 : f32
    %30 = vector.broadcast %cst_29 : f32 to vector<2x128xf32>
    %31 = arith.addf %30, %29 : vector<2x128xf32>
    %32 = arith.divf %30, %31 : vector<2x128xf32>
    %33 = math.tanh %27 : vector<2x128xf32>
    %34 = vector.extract_strided_slice %32 {offsets = [0, 0], sizes = [2, 32], strides = [1, 1]} : vector<2x128xf32> to vector<2x32xf32>
    %35 = vector.extract_strided_slice %32 {offsets = [0, 32], sizes = [2, 32], strides = [1, 1]} : vector<2x128xf32> to vector<2x32xf32>
    %36 = vector.extract_strided_slice %33 {offsets = [0, 64], sizes = [2, 32], strides = [1, 1]} : vector<2x128xf32> to vector<2x32xf32>
    %37 = vector.extract_strided_slice %32 {offsets = [0, 96], sizes = [2, 32], strides = [1, 1]} : vector<2x128xf32> to vector<2x32xf32>
    %38 = arith.mulf %35, %23 : vector<2x32xf32>
    %39 = arith.mulf %34, %36 : vector<2x32xf32>
    %40 = arith.addf %38, %39 : vector<2x32xf32>
    %41 = math.tanh %40 : vector<2x32xf32>
    %42 = arith.mulf %37, %41 : vector<2x32xf32>
    %43 = vector.extract_strided_slice %20 {offsets = [2, 0], sizes = [2, 128], strides = [1, 1]} : vector<16x128xf32> to vector<2x128xf32>
    %cst_30 = arith.constant dense<0.000000e+00> : vector<2x128xf32>
    %44 = tpu.matmul %42, %10, %cst_30 {dimension_numbers = #tpu.dot_dimension_numbers<[1], [0], [0], [1], [0, 0, 1, 1], [], []>} : vector<2x32xf32>, vector<32x128xf32>, vector<2x128xf32> -> vector<2x128xf32>
    %45 = arith.addf %43, %44 : vector<2x128xf32>
    %46 = arith.negf %45 : vector<2x128xf32>
    %47 = math.exp %46 : vector<2x128xf32>
    %cst_31 = arith.constant 1.000000e+00 : f32
    %48 = vector.broadcast %cst_31 : f32 to vector<2x128xf32>
    %49 = arith.addf %48, %47 : vector<2x128xf32>
    %50 = arith.divf %48, %49 : vector<2x128xf32>
    %51 = math.tanh %45 : vector<2x128xf32>
    %52 = vector.extract_strided_slice %50 {offsets = [0, 0], sizes = [2, 32], strides = [1, 1]} : vector<2x128xf32> to vector<2x32xf32>
    %53 = vector.extract_strided_slice %50 {offsets = [0, 32], sizes = [2, 32], strides = [1, 1]} : vector<2x128xf32> to vector<2x32xf32>
    %54 = vector.extract_strided_slice %51 {offsets = [0, 64], sizes = [2, 32], strides = [1, 1]} : vector<2x128xf32> to vector<2x32xf32>
    %55 = vector.extract_strided_slice %50 {offsets = [0, 96], sizes = [2, 32], strides = [1, 1]} : vector<2x128xf32> to vector<2x32xf32>
    %56 = arith.mulf %53, %40 : vector<2x32xf32>
    %57 = arith.mulf %52, %54 : vector<2x32xf32>
    %58 = arith.addf %56, %57 : vector<2x32xf32>
    %59 = math.tanh %58 : vector<2x32xf32>
    %60 = arith.mulf %55, %59 : vector<2x32xf32>
    %cst_32 = arith.constant dense<0.000000e+00> : vector<2x128xf32>
    %61 = tpu.matmul %42, %9, %cst_32 {dimension_numbers = #tpu.dot_dimension_numbers<[1], [0], [0], [1], [0, 0, 1, 1], [], []>} : vector<2x32xf32>, vector<32x128xf32>, vector<2x128xf32> -> vector<2x128xf32>
    %62 = vector.broadcast %13 : vector<1x128xf32> to vector<2x128xf32>
    %63 = arith.addf %61, %62 : vector<2x128xf32>
    %cst_33 = arith.constant dense<0.000000e+00> : vector<2x128xf32>
    %64 = tpu.matmul %22, %11, %cst_33 {dimension_numbers = #tpu.dot_dimension_numbers<[1], [0], [0], [1], [0, 0, 1, 1], [], []>} : vector<2x32xf32>, vector<32x128xf32>, vector<2x128xf32> -> vector<2x128xf32>
    %65 = arith.addf %63, %64 : vector<2x128xf32>
    %66 = arith.negf %65 : vector<2x128xf32>
    %67 = math.exp %66 : vector<2x128xf32>
    %cst_34 = arith.constant 1.000000e+00 : f32
    %68 = vector.broadcast %cst_34 : f32 to vector<2x128xf32>
    %69 = arith.addf %68, %67 : vector<2x128xf32>
    %70 = arith.divf %68, %69 : vector<2x128xf32>
    %71 = math.tanh %65 : vector<2x128xf32>
    %72 = vector.extract_strided_slice %70 {offsets = [0, 0], sizes = [2, 32], strides = [1, 1]} : vector<2x128xf32> to vector<2x32xf32>
    %73 = vector.extract_strided_slice %70 {offsets = [0, 32], sizes = [2, 32], strides = [1, 1]} : vector<2x128xf32> to vector<2x32xf32>
    %74 = vector.extract_strided_slice %71 {offsets = [0, 64], sizes = [2, 32], strides = [1, 1]} : vector<2x128xf32> to vector<2x32xf32>
    %75 = vector.extract_strided_slice %70 {offsets = [0, 96], sizes = [2, 32], strides = [1, 1]} : vector<2x128xf32> to vector<2x32xf32>
    %76 = arith.mulf %73, %24 : vector<2x32xf32>
    %77 = arith.mulf %72, %74 : vector<2x32xf32>
    %78 = arith.addf %76, %77 : vector<2x32xf32>
    %79 = math.tanh %78 : vector<2x32xf32>
    %80 = arith.mulf %75, %79 : vector<2x32xf32>
    %cst_35 = arith.constant dense<0.000000e+00> : vector<2x16xf32>
    %81 = tpu.matmul %80, %14, %cst_35 {dimension_numbers = #tpu.dot_dimension_numbers<[1], [0], [0], [1], [0, 0, 1, 1], [], []>, precision = #tpu.contract_precision<fp32>} : vector<2x32xf32>, vector<32x16xf32>, vector<2x16xf32> -> vector<2x16xf32>
    %82 = vector.broadcast %15 : vector<1x16xf32> to vector<2x16xf32>
    %83 = arith.addf %81, %82 : vector<2x16xf32>
    %cst_36 = arith.constant dense<0.000000e+00> : vector<2x128xf32>
    %84 = tpu.matmul %83, %16, %cst_36 {dimension_numbers = #tpu.dot_dimension_numbers<[1], [0], [0], [1], [0, 0, 1, 1], [], []>, precision = #tpu.contract_precision<fp32>} : vector<2x16xf32>, vector<16x128xf32>, vector<2x128xf32> -> vector<2x128xf32>
    %85 = vector.broadcast %17 : vector<1x128xf32> to vector<2x128xf32>
    %86 = arith.addf %84, %85 : vector<2x128xf32>
    %cst_37 = arith.constant dense<0xFF800000> : vector<2xf32>
    %87 = vector.multi_reduction <maximumf>, %86, %cst_37 [1] : vector<2x128xf32> to vector<2xf32>
    %88 = vector.shape_cast %87 : vector<2xf32> to vector<2x1xf32>
    %89 = vector.broadcast %88 : vector<2x1xf32> to vector<2x128xf32>
    %90 = arith.subf %86, %89 : vector<2x128xf32>
    %91 = math.exp %90 : vector<2x128xf32>
    %cst_38 = arith.constant dense<0.000000e+00> : vector<2xf32>
    %92 = vector.multi_reduction <add>, %91, %cst_38 [1] : vector<2x128xf32> to vector<2xf32>
    %93 = vector.shape_cast %92 : vector<2xf32> to vector<2x1xf32>
    %94 = math.log %93 : vector<2x1xf32>
    %95 = vector.broadcast %94 : vector<2x1xf32> to vector<2x128xf32>
    %96 = arith.subf %90, %95 : vector<2x128xf32>
    %97 = vector.extract_strided_slice %96 {offsets = [0, 0], sizes = [1, 128], strides = [1, 1]} : vector<2x128xf32> to vector<1x128xf32>
    %c0_39 = arith.constant 0 : index
    %c0_40 = arith.constant 0 : index
    %98 = vector.load %arg12[%c0_39, %c0_40] : memref<16x128xf32, #tpu.memory_space<vmem>>, vector<1x128xf32>
    tpu.vector_store %arg12[%c0_39, %c0_40], %97 {strides = array<i32>} : memref<16x128xf32, #tpu.memory_space<vmem>>, vector<1x128xf32>,
    %99 = vector.extract_strided_slice %96 {offsets = [1, 0], sizes = [1, 128], strides = [1, 1]} : vector<2x128xf32> to vector<1x128xf32>
    %c8 = arith.constant 8 : index
    %c0_41 = arith.constant 0 : index
    %100 = vector.load %arg12[%c8, %c0_41] : memref<16x128xf32, #tpu.memory_space<vmem>>, vector<1x128xf32>
    tpu.vector_store %arg12[%c8, %c0_41], %99 {strides = array<i32>} : memref<16x128xf32, #tpu.memory_space<vmem>>, vector<1x128xf32>,
    %101 = vector.extract_strided_slice %20 {offsets = [4, 0], sizes = [2, 128], strides = [1, 1]} : vector<16x128xf32> to vector<2x128xf32>
    %cst_42 = arith.constant dense<0.000000e+00> : vector<2x128xf32>
    %102 = tpu.matmul %60, %10, %cst_42 {dimension_numbers = #tpu.dot_dimension_numbers<[1], [0], [0], [1], [0, 0, 1, 1], [], []>} : vector<2x32xf32>, vector<32x128xf32>, vector<2x128xf32> -> vector<2x128xf32>
    %103 = arith.addf %101, %102 : vector<2x128xf32>
    %104 = arith.negf %103 : vector<2x128xf32>
    %105 = math.exp %104 : vector<2x128xf32>
    %cst_43 = arith.constant 1.000000e+00 : f32
    %106 = vector.broadcast %cst_43 : f32 to vector<2x128xf32>
    %107 = arith.addf %106, %105 : vector<2x128xf32>
    %108 = arith.divf %106, %107 : vector<2x128xf32>
    %109 = math.tanh %103 : vector<2x128xf32>
    %110 = vector.extract_strided_slice %108 {offsets = [0, 0], sizes = [2, 32], strides = [1, 1]} : vector<2x128xf32> to vector<2x32xf32>
    %111 = vector.extract_strided_slice %108 {offsets = [0, 32], sizes = [2, 32], strides = [1, 1]} : vector<2x128xf32> to vector<2x32xf32>
    %112 = vector.extract_strided_slice %109 {offsets = [0, 64], sizes = [2, 32], strides = [1, 1]} : vector<2x128xf32> to vector<2x32xf32>
    %113 = vector.extract_strided_slice %108 {offsets = [0, 96], sizes = [2, 32], strides = [1, 1]} : vector<2x128xf32> to vector<2x32xf32>
    %114 = arith.mulf %111, %58 : vector<2x32xf32>
    %115 = arith.mulf %110, %112 : vector<2x32xf32>
    %116 = arith.addf %114, %115 : vector<2x32xf32>
    %117 = math.tanh %116 : vector<2x32xf32>
    %118 = arith.mulf %113, %117 : vector<2x32xf32>
    %cst_44 = arith.constant dense<0.000000e+00> : vector<2x128xf32>
    %119 = tpu.matmul %60, %9, %cst_44 {dimension_numbers = #tpu.dot_dimension_numbers<[1], [0], [0], [1], [0, 0, 1, 1], [], []>} : vector<2x32xf32>, vector<32x128xf32>, vector<2x128xf32> -> vector<2x128xf32>
    %120 = vector.broadcast %13 : vector<1x128xf32> to vector<2x128xf32>
    %121 = arith.addf %119, %120 : vector<2x128xf32>
    %cst_45 = arith.constant dense<0.000000e+00> : vector<2x128xf32>
    %122 = tpu.matmul %80, %11, %cst_45 {dimension_numbers = #tpu.dot_dimension_numbers<[1], [0], [0], [1], [0, 0, 1, 1], [], []>} : vector<2x32xf32>, vector<32x128xf32>, vector<2x128xf32> -> vector<2x128xf32>
    %123 = arith.addf %121, %122 : vector<2x128xf32>
    %124 = arith.negf %123 : vector<2x128xf32>
    %125 = math.exp %124 : vector<2x128xf32>
    %cst_46 = arith.constant 1.000000e+00 : f32
    %126 = vector.broadcast %cst_46 : f32 to vector<2x128xf32>
    %127 = arith.addf %126, %125 : vector<2x128xf32>
    %128 = arith.divf %126, %127 : vector<2x128xf32>
    %129 = math.tanh %123 : vector<2x128xf32>
    %130 = vector.extract_strided_slice %128 {offsets = [0, 0], sizes = [2, 32], strides = [1, 1]} : vector<2x128xf32> to vector<2x32xf32>
    %131 = vector.extract_strided_slice %128 {offsets = [0, 32], sizes = [2, 32], strides = [1, 1]} : vector<2x128xf32> to vector<2x32xf32>
    %132 = vector.extract_strided_slice %129 {offsets = [0, 64], sizes = [2, 32], strides = [1, 1]} : vector<2x128xf32> to vector<2x32xf32>
    %133 = vector.extract_strided_slice %128 {offsets = [0, 96], sizes = [2, 32], strides = [1, 1]} : vector<2x128xf32> to vector<2x32xf32>
    %134 = arith.mulf %131, %78 : vector<2x32xf32>
    %135 = arith.mulf %130, %132 : vector<2x32xf32>
    %136 = arith.addf %134, %135 : vector<2x32xf32>
    %137 = math.tanh %136 : vector<2x32xf32>
    %138 = arith.mulf %133, %137 : vector<2x32xf32>
    %cst_47 = arith.constant dense<0.000000e+00> : vector<2x16xf32>
    %139 = tpu.matmul %138, %14, %cst_47 {dimension_numbers = #tpu.dot_dimension_numbers<[1], [0], [0], [1], [0, 0, 1, 1], [], []>, precision = #tpu.contract_precision<fp32>} : vector<2x32xf32>, vector<32x16xf32>, vector<2x16xf32> -> vector<2x16xf32>
    %140 = vector.broadcast %15 : vector<1x16xf32> to vector<2x16xf32>
    %141 = arith.addf %139, %140 : vector<2x16xf32>
    %cst_48 = arith.constant dense<0.000000e+00> : vector<2x128xf32>
    %142 = tpu.matmul %141, %16, %cst_48 {dimension_numbers = #tpu.dot_dimension_numbers<[1], [0], [0], [1], [0, 0, 1, 1], [], []>, precision = #tpu.contract_precision<fp32>} : vector<2x16xf32>, vector<16x128xf32>, vector<2x128xf32> -> vector<2x128xf32>
    %143 = vector.broadcast %17 : vector<1x128xf32> to vector<2x128xf32>
    %144 = arith.addf %142, %143 : vector<2x128xf32>
    %cst_49 = arith.constant dense<0xFF800000> : vector<2xf32>
    %145 = vector.multi_reduction <maximumf>, %144, %cst_49 [1] : vector<2x128xf32> to vector<2xf32>
    %146 = vector.shape_cast %145 : vector<2xf32> to vector<2x1xf32>
    %147 = vector.broadcast %146 : vector<2x1xf32> to vector<2x128xf32>
    %148 = arith.subf %144, %147 : vector<2x128xf32>
    %149 = math.exp %148 : vector<2x128xf32>
    %cst_50 = arith.constant dense<0.000000e+00> : vector<2xf32>
    %150 = vector.multi_reduction <add>, %149, %cst_50 [1] : vector<2x128xf32> to vector<2xf32>
    %151 = vector.shape_cast %150 : vector<2xf32> to vector<2x1xf32>
    %152 = math.log %151 : vector<2x1xf32>
    %153 = vector.broadcast %152 : vector<2x1xf32> to vector<2x128xf32>
    %154 = arith.subf %148, %153 : vector<2x128xf32>
    %155 = vector.extract_strided_slice %154 {offsets = [0, 0], sizes = [1, 128], strides = [1, 1]} : vector<2x128xf32> to vector<1x128xf32>
    %c1 = arith.constant 1 : index
    %c0_51 = arith.constant 0 : index
    %156 = vector.load %arg12[%c1, %c0_51] : memref<16x128xf32, #tpu.memory_space<vmem>>, vector<1x128xf32>
    tpu.vector_store %arg12[%c1, %c0_51], %155 {strides = array<i32>} : memref<16x128xf32, #tpu.memory_space<vmem>>, vector<1x128xf32>,
    %157 = vector.extract_strided_slice %154 {offsets = [1, 0], sizes = [1, 128], strides = [1, 1]} : vector<2x128xf32> to vector<1x128xf32>
    %c9 = arith.constant 9 : index
    %c0_52 = arith.constant 0 : index
    %158 = vector.load %arg12[%c9, %c0_52] : memref<16x128xf32, #tpu.memory_space<vmem>>, vector<1x128xf32>
    tpu.vector_store %arg12[%c9, %c0_52], %157 {strides = array<i32>} : memref<16x128xf32, #tpu.memory_space<vmem>>, vector<1x128xf32>,
    %159 = vector.extract_strided_slice %20 {offsets = [6, 0], sizes = [2, 128], strides = [1, 1]} : vector<16x128xf32> to vector<2x128xf32>
    %cst_53 = arith.constant dense<0.000000e+00> : vector<2x128xf32>
    %160 = tpu.matmul %118, %10, %cst_53 {dimension_numbers = #tpu.dot_dimension_numbers<[1], [0], [0], [1], [0, 0, 1, 1], [], []>} : vector<2x32xf32>, vector<32x128xf32>, vector<2x128xf32> -> vector<2x128xf32>
    %161 = arith.addf %159, %160 : vector<2x128xf32>
    %162 = arith.negf %161 : vector<2x128xf32>
    %163 = math.exp %162 : vector<2x128xf32>
    %cst_54 = arith.constant 1.000000e+00 : f32
    %164 = vector.broadcast %cst_54 : f32 to vector<2x128xf32>
    %165 = arith.addf %164, %163 : vector<2x128xf32>
    %166 = arith.divf %164, %165 : vector<2x128xf32>
    %167 = math.tanh %161 : vector<2x128xf32>
    %168 = vector.extract_strided_slice %166 {offsets = [0, 0], sizes = [2, 32], strides = [1, 1]} : vector<2x128xf32> to vector<2x32xf32>
    %169 = vector.extract_strided_slice %166 {offsets = [0, 32], sizes = [2, 32], strides = [1, 1]} : vector<2x128xf32> to vector<2x32xf32>
    %170 = vector.extract_strided_slice %167 {offsets = [0, 64], sizes = [2, 32], strides = [1, 1]} : vector<2x128xf32> to vector<2x32xf32>
    %171 = vector.extract_strided_slice %166 {offsets = [0, 96], sizes = [2, 32], strides = [1, 1]} : vector<2x128xf32> to vector<2x32xf32>
    %172 = arith.mulf %169, %116 : vector<2x32xf32>
    %173 = arith.mulf %168, %170 : vector<2x32xf32>
    %174 = arith.addf %172, %173 : vector<2x32xf32>
    %175 = math.tanh %174 : vector<2x32xf32>
    %176 = arith.mulf %171, %175 : vector<2x32xf32>
    %cst_55 = arith.constant dense<0.000000e+00> : vector<2x128xf32>
    %177 = tpu.matmul %118, %9, %cst_55 {dimension_numbers = #tpu.dot_dimension_numbers<[1], [0], [0], [1], [0, 0, 1, 1], [], []>} : vector<2x32xf32>, vector<32x128xf32>, vector<2x128xf32> -> vector<2x128xf32>
    %178 = vector.broadcast %13 : vector<1x128xf32> to vector<2x128xf32>
    %179 = arith.addf %177, %178 : vector<2x128xf32>
    %cst_56 = arith.constant dense<0.000000e+00> : vector<2x128xf32>
    %180 = tpu.matmul %138, %11, %cst_56 {dimension_numbers = #tpu.dot_dimension_numbers<[1], [0], [0], [1], [0, 0, 1, 1], [], []>} : vector<2x32xf32>, vector<32x128xf32>, vector<2x128xf32> -> vector<2x128xf32>
    %181 = arith.addf %179, %180 : vector<2x128xf32>
    %182 = arith.negf %181 : vector<2x128xf32>
    %183 = math.exp %182 : vector<2x128xf32>
    %cst_57 = arith.constant 1.000000e+00 : f32
    %184 = vector.broadcast %cst_57 : f32 to vector<2x128xf32>
    %185 = arith.addf %184, %183 : vector<2x128xf32>
    %186 = arith.divf %184, %185 : vector<2x128xf32>
    %187 = math.tanh %181 : vector<2x128xf32>
    %188 = vector.extract_strided_slice %186 {offsets = [0, 0], sizes = [2, 32], strides = [1, 1]} : vector<2x128xf32> to vector<2x32xf32>
    %189 = vector.extract_strided_slice %186 {offsets = [0, 32], sizes = [2, 32], strides = [1, 1]} : vector<2x128xf32> to vector<2x32xf32>
    %190 = vector.extract_strided_slice %187 {offsets = [0, 64], sizes = [2, 32], strides = [1, 1]} : vector<2x128xf32> to vector<2x32xf32>
    %191 = vector.extract_strided_slice %186 {offsets = [0, 96], sizes = [2, 32], strides = [1, 1]} : vector<2x128xf32> to vector<2x32xf32>
    %192 = arith.mulf %189, %136 : vector<2x32xf32>
    %193 = arith.mulf %188, %190 : vector<2x32xf32>
    %194 = arith.addf %192, %193 : vector<2x32xf32>
    %195 = math.tanh %194 : vector<2x32xf32>
    %196 = arith.mulf %191, %195 : vector<2x32xf32>
    %cst_58 = arith.constant dense<0.000000e+00> : vector<2x16xf32>
    %197 = tpu.matmul %196, %14, %cst_58 {dimension_numbers = #tpu.dot_dimension_numbers<[1], [0], [0], [1], [0, 0, 1, 1], [], []>, precision = #tpu.contract_precision<fp32>} : vector<2x32xf32>, vector<32x16xf32>, vector<2x16xf32> -> vector<2x16xf32>
    %198 = vector.broadcast %15 : vector<1x16xf32> to vector<2x16xf32>
    %199 = arith.addf %197, %198 : vector<2x16xf32>
    %cst_59 = arith.constant dense<0.000000e+00> : vector<2x128xf32>
    %200 = tpu.matmul %199, %16, %cst_59 {dimension_numbers = #tpu.dot_dimension_numbers<[1], [0], [0], [1], [0, 0, 1, 1], [], []>, precision = #tpu.contract_precision<fp32>} : vector<2x16xf32>, vector<16x128xf32>, vector<2x128xf32> -> vector<2x128xf32>
    %201 = vector.broadcast %17 : vector<1x128xf32> to vector<2x128xf32>
    %202 = arith.addf %200, %201 : vector<2x128xf32>
    %cst_60 = arith.constant dense<0xFF800000> : vector<2xf32>
    %203 = vector.multi_reduction <maximumf>, %202, %cst_60 [1] : vector<2x128xf32> to vector<2xf32>
    %204 = vector.shape_cast %203 : vector<2xf32> to vector<2x1xf32>
    %205 = vector.broadcast %204 : vector<2x1xf32> to vector<2x128xf32>
    %206 = arith.subf %202, %205 : vector<2x128xf32>
    %207 = math.exp %206 : vector<2x128xf32>
    %cst_61 = arith.constant dense<0.000000e+00> : vector<2xf32>
    %208 = vector.multi_reduction <add>, %207, %cst_61 [1] : vector<2x128xf32> to vector<2xf32>
    %209 = vector.shape_cast %208 : vector<2xf32> to vector<2x1xf32>
    %210 = math.log %209 : vector<2x1xf32>
    %211 = vector.broadcast %210 : vector<2x1xf32> to vector<2x128xf32>
    %212 = arith.subf %206, %211 : vector<2x128xf32>
    %213 = vector.extract_strided_slice %212 {offsets = [0, 0], sizes = [1, 128], strides = [1, 1]} : vector<2x128xf32> to vector<1x128xf32>
    %c2 = arith.constant 2 : index
    %c0_62 = arith.constant 0 : index
    %214 = vector.load %arg12[%c2, %c0_62] : memref<16x128xf32, #tpu.memory_space<vmem>>, vector<1x128xf32>
    tpu.vector_store %arg12[%c2, %c0_62], %213 {strides = array<i32>} : memref<16x128xf32, #tpu.memory_space<vmem>>, vector<1x128xf32>,
    %215 = vector.extract_strided_slice %212 {offsets = [1, 0], sizes = [1, 128], strides = [1, 1]} : vector<2x128xf32> to vector<1x128xf32>
    %c10 = arith.constant 10 : index
    %c0_63 = arith.constant 0 : index
    %216 = vector.load %arg12[%c10, %c0_63] : memref<16x128xf32, #tpu.memory_space<vmem>>, vector<1x128xf32>
    tpu.vector_store %arg12[%c10, %c0_63], %215 {strides = array<i32>} : memref<16x128xf32, #tpu.memory_space<vmem>>, vector<1x128xf32>,
    %217 = vector.extract_strided_slice %20 {offsets = [8, 0], sizes = [2, 128], strides = [1, 1]} : vector<16x128xf32> to vector<2x128xf32>
    %cst_64 = arith.constant dense<0.000000e+00> : vector<2x128xf32>
    %218 = tpu.matmul %176, %10, %cst_64 {dimension_numbers = #tpu.dot_dimension_numbers<[1], [0], [0], [1], [0, 0, 1, 1], [], []>} : vector<2x32xf32>, vector<32x128xf32>, vector<2x128xf32> -> vector<2x128xf32>
    %219 = arith.addf %217, %218 : vector<2x128xf32>
    %220 = arith.negf %219 : vector<2x128xf32>
    %221 = math.exp %220 : vector<2x128xf32>
    %cst_65 = arith.constant 1.000000e+00 : f32
    %222 = vector.broadcast %cst_65 : f32 to vector<2x128xf32>
    %223 = arith.addf %222, %221 : vector<2x128xf32>
    %224 = arith.divf %222, %223 : vector<2x128xf32>
    %225 = math.tanh %219 : vector<2x128xf32>
    %226 = vector.extract_strided_slice %224 {offsets = [0, 0], sizes = [2, 32], strides = [1, 1]} : vector<2x128xf32> to vector<2x32xf32>
    %227 = vector.extract_strided_slice %224 {offsets = [0, 32], sizes = [2, 32], strides = [1, 1]} : vector<2x128xf32> to vector<2x32xf32>
    %228 = vector.extract_strided_slice %225 {offsets = [0, 64], sizes = [2, 32], strides = [1, 1]} : vector<2x128xf32> to vector<2x32xf32>
    %229 = vector.extract_strided_slice %224 {offsets = [0, 96], sizes = [2, 32], strides = [1, 1]} : vector<2x128xf32> to vector<2x32xf32>
    %230 = arith.mulf %227, %174 : vector<2x32xf32>
    %231 = arith.mulf %226, %228 : vector<2x32xf32>
    %232 = arith.addf %230, %231 : vector<2x32xf32>
    %233 = math.tanh %232 : vector<2x32xf32>
    %234 = arith.mulf %229, %233 : vector<2x32xf32>
    %cst_66 = arith.constant dense<0.000000e+00> : vector<2x128xf32>
    %235 = tpu.matmul %176, %9, %cst_66 {dimension_numbers = #tpu.dot_dimension_numbers<[1], [0], [0], [1], [0, 0, 1, 1], [], []>} : vector<2x32xf32>, vector<32x128xf32>, vector<2x128xf32> -> vector<2x128xf32>
    %236 = vector.broadcast %13 : vector<1x128xf32> to vector<2x128xf32>
    %237 = arith.addf %235, %236 : vector<2x128xf32>
    %cst_67 = arith.constant dense<0.000000e+00> : vector<2x128xf32>
    %238 = tpu.matmul %196, %11, %cst_67 {dimension_numbers = #tpu.dot_dimension_numbers<[1], [0], [0], [1], [0, 0, 1, 1], [], []>} : vector<2x32xf32>, vector<32x128xf32>, vector<2x128xf32> -> vector<2x128xf32>
    %239 = arith.addf %237, %238 : vector<2x128xf32>
    %240 = arith.negf %239 : vector<2x128xf32>
    %241 = math.exp %240 : vector<2x128xf32>
    %cst_68 = arith.constant 1.000000e+00 : f32
    %242 = vector.broadcast %cst_68 : f32 to vector<2x128xf32>
    %243 = arith.addf %242, %241 : vector<2x128xf32>
    %244 = arith.divf %242, %243 : vector<2x128xf32>
    %245 = math.tanh %239 : vector<2x128xf32>
    %246 = vector.extract_strided_slice %244 {offsets = [0, 0], sizes = [2, 32], strides = [1, 1]} : vector<2x128xf32> to vector<2x32xf32>
    %247 = vector.extract_strided_slice %244 {offsets = [0, 32], sizes = [2, 32], strides = [1, 1]} : vector<2x128xf32> to vector<2x32xf32>
    %248 = vector.extract_strided_slice %245 {offsets = [0, 64], sizes = [2, 32], strides = [1, 1]} : vector<2x128xf32> to vector<2x32xf32>
    %249 = vector.extract_strided_slice %244 {offsets = [0, 96], sizes = [2, 32], strides = [1, 1]} : vector<2x128xf32> to vector<2x32xf32>
    %250 = arith.mulf %247, %194 : vector<2x32xf32>
    %251 = arith.mulf %246, %248 : vector<2x32xf32>
    %252 = arith.addf %250, %251 : vector<2x32xf32>
    %253 = math.tanh %252 : vector<2x32xf32>
    %254 = arith.mulf %249, %253 : vector<2x32xf32>
    %cst_69 = arith.constant dense<0.000000e+00> : vector<2x16xf32>
    %255 = tpu.matmul %254, %14, %cst_69 {dimension_numbers = #tpu.dot_dimension_numbers<[1], [0], [0], [1], [0, 0, 1, 1], [], []>, precision = #tpu.contract_precision<fp32>} : vector<2x32xf32>, vector<32x16xf32>, vector<2x16xf32> -> vector<2x16xf32>
    %256 = vector.broadcast %15 : vector<1x16xf32> to vector<2x16xf32>
    %257 = arith.addf %255, %256 : vector<2x16xf32>
    %cst_70 = arith.constant dense<0.000000e+00> : vector<2x128xf32>
    %258 = tpu.matmul %257, %16, %cst_70 {dimension_numbers = #tpu.dot_dimension_numbers<[1], [0], [0], [1], [0, 0, 1, 1], [], []>, precision = #tpu.contract_precision<fp32>} : vector<2x16xf32>, vector<16x128xf32>, vector<2x128xf32> -> vector<2x128xf32>
    %259 = vector.broadcast %17 : vector<1x128xf32> to vector<2x128xf32>
    %260 = arith.addf %258, %259 : vector<2x128xf32>
    %cst_71 = arith.constant dense<0xFF800000> : vector<2xf32>
    %261 = vector.multi_reduction <maximumf>, %260, %cst_71 [1] : vector<2x128xf32> to vector<2xf32>
    %262 = vector.shape_cast %261 : vector<2xf32> to vector<2x1xf32>
    %263 = vector.broadcast %262 : vector<2x1xf32> to vector<2x128xf32>
    %264 = arith.subf %260, %263 : vector<2x128xf32>
    %265 = math.exp %264 : vector<2x128xf32>
    %cst_72 = arith.constant dense<0.000000e+00> : vector<2xf32>
    %266 = vector.multi_reduction <add>, %265, %cst_72 [1] : vector<2x128xf32> to vector<2xf32>
    %267 = vector.shape_cast %266 : vector<2xf32> to vector<2x1xf32>
    %268 = math.log %267 : vector<2x1xf32>
    %269 = vector.broadcast %268 : vector<2x1xf32> to vector<2x128xf32>
    %270 = arith.subf %264, %269 : vector<2x128xf32>
    %271 = vector.extract_strided_slice %270 {offsets = [0, 0], sizes = [1, 128], strides = [1, 1]} : vector<2x128xf32> to vector<1x128xf32>
    %c3 = arith.constant 3 : index
    %c0_73 = arith.constant 0 : index
    %272 = vector.load %arg12[%c3, %c0_73] : memref<16x128xf32, #tpu.memory_space<vmem>>, vector<1x128xf32>
    tpu.vector_store %arg12[%c3, %c0_73], %271 {strides = array<i32>} : memref<16x128xf32, #tpu.memory_space<vmem>>, vector<1x128xf32>,
    %273 = vector.extract_strided_slice %270 {offsets = [1, 0], sizes = [1, 128], strides = [1, 1]} : vector<2x128xf32> to vector<1x128xf32>
    %c11 = arith.constant 11 : index
    %c0_74 = arith.constant 0 : index
    %274 = vector.load %arg12[%c11, %c0_74] : memref<16x128xf32, #tpu.memory_space<vmem>>, vector<1x128xf32>
    tpu.vector_store %arg12[%c11, %c0_74], %273 {strides = array<i32>} : memref<16x128xf32, #tpu.memory_space<vmem>>, vector<1x128xf32>,
    %275 = vector.extract_strided_slice %20 {offsets = [10, 0], sizes = [2, 128], strides = [1, 1]} : vector<16x128xf32> to vector<2x128xf32>
    %cst_75 = arith.constant dense<0.000000e+00> : vector<2x128xf32>
    %276 = tpu.matmul %234, %10, %cst_75 {dimension_numbers = #tpu.dot_dimension_numbers<[1], [0], [0], [1], [0, 0, 1, 1], [], []>} : vector<2x32xf32>, vector<32x128xf32>, vector<2x128xf32> -> vector<2x128xf32>
    %277 = arith.addf %275, %276 : vector<2x128xf32>
    %278 = arith.negf %277 : vector<2x128xf32>
    %279 = math.exp %278 : vector<2x128xf32>
    %cst_76 = arith.constant 1.000000e+00 : f32
    %280 = vector.broadcast %cst_76 : f32 to vector<2x128xf32>
    %281 = arith.addf %280, %279 : vector<2x128xf32>
    %282 = arith.divf %280, %281 : vector<2x128xf32>
    %283 = math.tanh %277 : vector<2x128xf32>
    %284 = vector.extract_strided_slice %282 {offsets = [0, 0], sizes = [2, 32], strides = [1, 1]} : vector<2x128xf32> to vector<2x32xf32>
    %285 = vector.extract_strided_slice %282 {offsets = [0, 32], sizes = [2, 32], strides = [1, 1]} : vector<2x128xf32> to vector<2x32xf32>
    %286 = vector.extract_strided_slice %283 {offsets = [0, 64], sizes = [2, 32], strides = [1, 1]} : vector<2x128xf32> to vector<2x32xf32>
    %287 = vector.extract_strided_slice %282 {offsets = [0, 96], sizes = [2, 32], strides = [1, 1]} : vector<2x128xf32> to vector<2x32xf32>
    %288 = arith.mulf %285, %232 : vector<2x32xf32>
    %289 = arith.mulf %284, %286 : vector<2x32xf32>
    %290 = arith.addf %288, %289 : vector<2x32xf32>
    %291 = math.tanh %290 : vector<2x32xf32>
    %292 = arith.mulf %287, %291 : vector<2x32xf32>
    %cst_77 = arith.constant dense<0.000000e+00> : vector<2x128xf32>
    %293 = tpu.matmul %234, %9, %cst_77 {dimension_numbers = #tpu.dot_dimension_numbers<[1], [0], [0], [1], [0, 0, 1, 1], [], []>} : vector<2x32xf32>, vector<32x128xf32>, vector<2x128xf32> -> vector<2x128xf32>
    %294 = vector.broadcast %13 : vector<1x128xf32> to vector<2x128xf32>
    %295 = arith.addf %293, %294 : vector<2x128xf32>
    %cst_78 = arith.constant dense<0.000000e+00> : vector<2x128xf32>
    %296 = tpu.matmul %254, %11, %cst_78 {dimension_numbers = #tpu.dot_dimension_numbers<[1], [0], [0], [1], [0, 0, 1, 1], [], []>} : vector<2x32xf32>, vector<32x128xf32>, vector<2x128xf32> -> vector<2x128xf32>
    %297 = arith.addf %295, %296 : vector<2x128xf32>
    %298 = arith.negf %297 : vector<2x128xf32>
    %299 = math.exp %298 : vector<2x128xf32>
    %cst_79 = arith.constant 1.000000e+00 : f32
    %300 = vector.broadcast %cst_79 : f32 to vector<2x128xf32>
    %301 = arith.addf %300, %299 : vector<2x128xf32>
    %302 = arith.divf %300, %301 : vector<2x128xf32>
    %303 = math.tanh %297 : vector<2x128xf32>
    %304 = vector.extract_strided_slice %302 {offsets = [0, 0], sizes = [2, 32], strides = [1, 1]} : vector<2x128xf32> to vector<2x32xf32>
    %305 = vector.extract_strided_slice %302 {offsets = [0, 32], sizes = [2, 32], strides = [1, 1]} : vector<2x128xf32> to vector<2x32xf32>
    %306 = vector.extract_strided_slice %303 {offsets = [0, 64], sizes = [2, 32], strides = [1, 1]} : vector<2x128xf32> to vector<2x32xf32>
    %307 = vector.extract_strided_slice %302 {offsets = [0, 96], sizes = [2, 32], strides = [1, 1]} : vector<2x128xf32> to vector<2x32xf32>
    %308 = arith.mulf %305, %252 : vector<2x32xf32>
    %309 = arith.mulf %304, %306 : vector<2x32xf32>
    %310 = arith.addf %308, %309 : vector<2x32xf32>
    %311 = math.tanh %310 : vector<2x32xf32>
    %312 = arith.mulf %307, %311 : vector<2x32xf32>
    %cst_80 = arith.constant dense<0.000000e+00> : vector<2x16xf32>
    %313 = tpu.matmul %312, %14, %cst_80 {dimension_numbers = #tpu.dot_dimension_numbers<[1], [0], [0], [1], [0, 0, 1, 1], [], []>, precision = #tpu.contract_precision<fp32>} : vector<2x32xf32>, vector<32x16xf32>, vector<2x16xf32> -> vector<2x16xf32>
    %314 = vector.broadcast %15 : vector<1x16xf32> to vector<2x16xf32>
    %315 = arith.addf %313, %314 : vector<2x16xf32>
    %cst_81 = arith.constant dense<0.000000e+00> : vector<2x128xf32>
    %316 = tpu.matmul %315, %16, %cst_81 {dimension_numbers = #tpu.dot_dimension_numbers<[1], [0], [0], [1], [0, 0, 1, 1], [], []>, precision = #tpu.contract_precision<fp32>} : vector<2x16xf32>, vector<16x128xf32>, vector<2x128xf32> -> vector<2x128xf32>
    %317 = vector.broadcast %17 : vector<1x128xf32> to vector<2x128xf32>
    %318 = arith.addf %316, %317 : vector<2x128xf32>
    %cst_82 = arith.constant dense<0xFF800000> : vector<2xf32>
    %319 = vector.multi_reduction <maximumf>, %318, %cst_82 [1] : vector<2x128xf32> to vector<2xf32>
    %320 = vector.shape_cast %319 : vector<2xf32> to vector<2x1xf32>
    %321 = vector.broadcast %320 : vector<2x1xf32> to vector<2x128xf32>
    %322 = arith.subf %318, %321 : vector<2x128xf32>
    %323 = math.exp %322 : vector<2x128xf32>
    %cst_83 = arith.constant dense<0.000000e+00> : vector<2xf32>
    %324 = vector.multi_reduction <add>, %323, %cst_83 [1] : vector<2x128xf32> to vector<2xf32>
    %325 = vector.shape_cast %324 : vector<2xf32> to vector<2x1xf32>
    %326 = math.log %325 : vector<2x1xf32>
    %327 = vector.broadcast %326 : vector<2x1xf32> to vector<2x128xf32>
    %328 = arith.subf %322, %327 : vector<2x128xf32>
    %329 = vector.extract_strided_slice %328 {offsets = [0, 0], sizes = [1, 128], strides = [1, 1]} : vector<2x128xf32> to vector<1x128xf32>
    %c4 = arith.constant 4 : index
    %c0_84 = arith.constant 0 : index
    %330 = vector.load %arg12[%c4, %c0_84] : memref<16x128xf32, #tpu.memory_space<vmem>>, vector<1x128xf32>
    tpu.vector_store %arg12[%c4, %c0_84], %329 {strides = array<i32>} : memref<16x128xf32, #tpu.memory_space<vmem>>, vector<1x128xf32>,
    %331 = vector.extract_strided_slice %328 {offsets = [1, 0], sizes = [1, 128], strides = [1, 1]} : vector<2x128xf32> to vector<1x128xf32>
    %c12 = arith.constant 12 : index
    %c0_85 = arith.constant 0 : index
    %332 = vector.load %arg12[%c12, %c0_85] : memref<16x128xf32, #tpu.memory_space<vmem>>, vector<1x128xf32>
    tpu.vector_store %arg12[%c12, %c0_85], %331 {strides = array<i32>} : memref<16x128xf32, #tpu.memory_space<vmem>>, vector<1x128xf32>,
    %333 = vector.extract_strided_slice %20 {offsets = [12, 0], sizes = [2, 128], strides = [1, 1]} : vector<16x128xf32> to vector<2x128xf32>
    %cst_86 = arith.constant dense<0.000000e+00> : vector<2x128xf32>
    %334 = tpu.matmul %292, %10, %cst_86 {dimension_numbers = #tpu.dot_dimension_numbers<[1], [0], [0], [1], [0, 0, 1, 1], [], []>} : vector<2x32xf32>, vector<32x128xf32>, vector<2x128xf32> -> vector<2x128xf32>
    %335 = arith.addf %333, %334 : vector<2x128xf32>
    %336 = arith.negf %335 : vector<2x128xf32>
    %337 = math.exp %336 : vector<2x128xf32>
    %cst_87 = arith.constant 1.000000e+00 : f32
    %338 = vector.broadcast %cst_87 : f32 to vector<2x128xf32>
    %339 = arith.addf %338, %337 : vector<2x128xf32>
    %340 = arith.divf %338, %339 : vector<2x128xf32>
    %341 = math.tanh %335 : vector<2x128xf32>
    %342 = vector.extract_strided_slice %340 {offsets = [0, 0], sizes = [2, 32], strides = [1, 1]} : vector<2x128xf32> to vector<2x32xf32>
    %343 = vector.extract_strided_slice %340 {offsets = [0, 32], sizes = [2, 32], strides = [1, 1]} : vector<2x128xf32> to vector<2x32xf32>
    %344 = vector.extract_strided_slice %341 {offsets = [0, 64], sizes = [2, 32], strides = [1, 1]} : vector<2x128xf32> to vector<2x32xf32>
    %345 = vector.extract_strided_slice %340 {offsets = [0, 96], sizes = [2, 32], strides = [1, 1]} : vector<2x128xf32> to vector<2x32xf32>
    %346 = arith.mulf %343, %290 : vector<2x32xf32>
    %347 = arith.mulf %342, %344 : vector<2x32xf32>
    %348 = arith.addf %346, %347 : vector<2x32xf32>
    %349 = math.tanh %348 : vector<2x32xf32>
    %350 = arith.mulf %345, %349 : vector<2x32xf32>
    %cst_88 = arith.constant dense<0.000000e+00> : vector<2x128xf32>
    %351 = tpu.matmul %292, %9, %cst_88 {dimension_numbers = #tpu.dot_dimension_numbers<[1], [0], [0], [1], [0, 0, 1, 1], [], []>} : vector<2x32xf32>, vector<32x128xf32>, vector<2x128xf32> -> vector<2x128xf32>
    %352 = vector.broadcast %13 : vector<1x128xf32> to vector<2x128xf32>
    %353 = arith.addf %351, %352 : vector<2x128xf32>
    %cst_89 = arith.constant dense<0.000000e+00> : vector<2x128xf32>
    %354 = tpu.matmul %312, %11, %cst_89 {dimension_numbers = #tpu.dot_dimension_numbers<[1], [0], [0], [1], [0, 0, 1, 1], [], []>} : vector<2x32xf32>, vector<32x128xf32>, vector<2x128xf32> -> vector<2x128xf32>
    %355 = arith.addf %353, %354 : vector<2x128xf32>
    %356 = arith.negf %355 : vector<2x128xf32>
    %357 = math.exp %356 : vector<2x128xf32>
    %cst_90 = arith.constant 1.000000e+00 : f32
    %358 = vector.broadcast %cst_90 : f32 to vector<2x128xf32>
    %359 = arith.addf %358, %357 : vector<2x128xf32>
    %360 = arith.divf %358, %359 : vector<2x128xf32>
    %361 = math.tanh %355 : vector<2x128xf32>
    %362 = vector.extract_strided_slice %360 {offsets = [0, 0], sizes = [2, 32], strides = [1, 1]} : vector<2x128xf32> to vector<2x32xf32>
    %363 = vector.extract_strided_slice %360 {offsets = [0, 32], sizes = [2, 32], strides = [1, 1]} : vector<2x128xf32> to vector<2x32xf32>
    %364 = vector.extract_strided_slice %361 {offsets = [0, 64], sizes = [2, 32], strides = [1, 1]} : vector<2x128xf32> to vector<2x32xf32>
    %365 = vector.extract_strided_slice %360 {offsets = [0, 96], sizes = [2, 32], strides = [1, 1]} : vector<2x128xf32> to vector<2x32xf32>
    %366 = arith.mulf %363, %310 : vector<2x32xf32>
    %367 = arith.mulf %362, %364 : vector<2x32xf32>
    %368 = arith.addf %366, %367 : vector<2x32xf32>
    %369 = math.tanh %368 : vector<2x32xf32>
    %370 = arith.mulf %365, %369 : vector<2x32xf32>
    %cst_91 = arith.constant dense<0.000000e+00> : vector<2x16xf32>
    %371 = tpu.matmul %370, %14, %cst_91 {dimension_numbers = #tpu.dot_dimension_numbers<[1], [0], [0], [1], [0, 0, 1, 1], [], []>, precision = #tpu.contract_precision<fp32>} : vector<2x32xf32>, vector<32x16xf32>, vector<2x16xf32> -> vector<2x16xf32>
    %372 = vector.broadcast %15 : vector<1x16xf32> to vector<2x16xf32>
    %373 = arith.addf %371, %372 : vector<2x16xf32>
    %cst_92 = arith.constant dense<0.000000e+00> : vector<2x128xf32>
    %374 = tpu.matmul %373, %16, %cst_92 {dimension_numbers = #tpu.dot_dimension_numbers<[1], [0], [0], [1], [0, 0, 1, 1], [], []>, precision = #tpu.contract_precision<fp32>} : vector<2x16xf32>, vector<16x128xf32>, vector<2x128xf32> -> vector<2x128xf32>
    %375 = vector.broadcast %17 : vector<1x128xf32> to vector<2x128xf32>
    %376 = arith.addf %374, %375 : vector<2x128xf32>
    %cst_93 = arith.constant dense<0xFF800000> : vector<2xf32>
    %377 = vector.multi_reduction <maximumf>, %376, %cst_93 [1] : vector<2x128xf32> to vector<2xf32>
    %378 = vector.shape_cast %377 : vector<2xf32> to vector<2x1xf32>
    %379 = vector.broadcast %378 : vector<2x1xf32> to vector<2x128xf32>
    %380 = arith.subf %376, %379 : vector<2x128xf32>
    %381 = math.exp %380 : vector<2x128xf32>
    %cst_94 = arith.constant dense<0.000000e+00> : vector<2xf32>
    %382 = vector.multi_reduction <add>, %381, %cst_94 [1] : vector<2x128xf32> to vector<2xf32>
    %383 = vector.shape_cast %382 : vector<2xf32> to vector<2x1xf32>
    %384 = math.log %383 : vector<2x1xf32>
    %385 = vector.broadcast %384 : vector<2x1xf32> to vector<2x128xf32>
    %386 = arith.subf %380, %385 : vector<2x128xf32>
    %387 = vector.extract_strided_slice %386 {offsets = [0, 0], sizes = [1, 128], strides = [1, 1]} : vector<2x128xf32> to vector<1x128xf32>
    %c5 = arith.constant 5 : index
    %c0_95 = arith.constant 0 : index
    %388 = vector.load %arg12[%c5, %c0_95] : memref<16x128xf32, #tpu.memory_space<vmem>>, vector<1x128xf32>
    tpu.vector_store %arg12[%c5, %c0_95], %387 {strides = array<i32>} : memref<16x128xf32, #tpu.memory_space<vmem>>, vector<1x128xf32>,
    %389 = vector.extract_strided_slice %386 {offsets = [1, 0], sizes = [1, 128], strides = [1, 1]} : vector<2x128xf32> to vector<1x128xf32>
    %c13 = arith.constant 13 : index
    %c0_96 = arith.constant 0 : index
    %390 = vector.load %arg12[%c13, %c0_96] : memref<16x128xf32, #tpu.memory_space<vmem>>, vector<1x128xf32>
    tpu.vector_store %arg12[%c13, %c0_96], %389 {strides = array<i32>} : memref<16x128xf32, #tpu.memory_space<vmem>>, vector<1x128xf32>,
    %391 = vector.extract_strided_slice %20 {offsets = [14, 0], sizes = [2, 128], strides = [1, 1]} : vector<16x128xf32> to vector<2x128xf32>
    %cst_97 = arith.constant dense<0.000000e+00> : vector<2x128xf32>
    %392 = tpu.matmul %350, %10, %cst_97 {dimension_numbers = #tpu.dot_dimension_numbers<[1], [0], [0], [1], [0, 0, 1, 1], [], []>} : vector<2x32xf32>, vector<32x128xf32>, vector<2x128xf32> -> vector<2x128xf32>
    %393 = arith.addf %391, %392 : vector<2x128xf32>
    %394 = arith.negf %393 : vector<2x128xf32>
    %395 = math.exp %394 : vector<2x128xf32>
    %cst_98 = arith.constant 1.000000e+00 : f32
    %396 = vector.broadcast %cst_98 : f32 to vector<2x128xf32>
    %397 = arith.addf %396, %395 : vector<2x128xf32>
    %398 = arith.divf %396, %397 : vector<2x128xf32>
    %399 = math.tanh %393 : vector<2x128xf32>
    %400 = vector.extract_strided_slice %398 {offsets = [0, 0], sizes = [2, 32], strides = [1, 1]} : vector<2x128xf32> to vector<2x32xf32>
    %401 = vector.extract_strided_slice %398 {offsets = [0, 32], sizes = [2, 32], strides = [1, 1]} : vector<2x128xf32> to vector<2x32xf32>
    %402 = vector.extract_strided_slice %399 {offsets = [0, 64], sizes = [2, 32], strides = [1, 1]} : vector<2x128xf32> to vector<2x32xf32>
    %403 = vector.extract_strided_slice %398 {offsets = [0, 96], sizes = [2, 32], strides = [1, 1]} : vector<2x128xf32> to vector<2x32xf32>
    %404 = arith.mulf %401, %348 : vector<2x32xf32>
    %405 = arith.mulf %400, %402 : vector<2x32xf32>
    %406 = arith.addf %404, %405 : vector<2x32xf32>
    %407 = math.tanh %406 : vector<2x32xf32>
    %408 = arith.mulf %403, %407 : vector<2x32xf32>
    %cst_99 = arith.constant dense<0.000000e+00> : vector<2x128xf32>
    %409 = tpu.matmul %350, %9, %cst_99 {dimension_numbers = #tpu.dot_dimension_numbers<[1], [0], [0], [1], [0, 0, 1, 1], [], []>} : vector<2x32xf32>, vector<32x128xf32>, vector<2x128xf32> -> vector<2x128xf32>
    %410 = vector.broadcast %13 : vector<1x128xf32> to vector<2x128xf32>
    %411 = arith.addf %409, %410 : vector<2x128xf32>
    %cst_100 = arith.constant dense<0.000000e+00> : vector<2x128xf32>
    %412 = tpu.matmul %370, %11, %cst_100 {dimension_numbers = #tpu.dot_dimension_numbers<[1], [0], [0], [1], [0, 0, 1, 1], [], []>} : vector<2x32xf32>, vector<32x128xf32>, vector<2x128xf32> -> vector<2x128xf32>
    %413 = arith.addf %411, %412 : vector<2x128xf32>
    %414 = arith.negf %413 : vector<2x128xf32>
    %415 = math.exp %414 : vector<2x128xf32>
    %cst_101 = arith.constant 1.000000e+00 : f32
    %416 = vector.broadcast %cst_101 : f32 to vector<2x128xf32>
    %417 = arith.addf %416, %415 : vector<2x128xf32>
    %418 = arith.divf %416, %417 : vector<2x128xf32>
    %419 = math.tanh %413 : vector<2x128xf32>
    %420 = vector.extract_strided_slice %418 {offsets = [0, 0], sizes = [2, 32], strides = [1, 1]} : vector<2x128xf32> to vector<2x32xf32>
    %421 = vector.extract_strided_slice %418 {offsets = [0, 32], sizes = [2, 32], strides = [1, 1]} : vector<2x128xf32> to vector<2x32xf32>
    %422 = vector.extract_strided_slice %419 {offsets = [0, 64], sizes = [2, 32], strides = [1, 1]} : vector<2x128xf32> to vector<2x32xf32>
    %423 = vector.extract_strided_slice %418 {offsets = [0, 96], sizes = [2, 32], strides = [1, 1]} : vector<2x128xf32> to vector<2x32xf32>
    %424 = arith.mulf %421, %368 : vector<2x32xf32>
    %425 = arith.mulf %420, %422 : vector<2x32xf32>
    %426 = arith.addf %424, %425 : vector<2x32xf32>
    %427 = math.tanh %426 : vector<2x32xf32>
    %428 = arith.mulf %423, %427 : vector<2x32xf32>
    %cst_102 = arith.constant dense<0.000000e+00> : vector<2x16xf32>
    %429 = tpu.matmul %428, %14, %cst_102 {dimension_numbers = #tpu.dot_dimension_numbers<[1], [0], [0], [1], [0, 0, 1, 1], [], []>, precision = #tpu.contract_precision<fp32>} : vector<2x32xf32>, vector<32x16xf32>, vector<2x16xf32> -> vector<2x16xf32>
    %430 = vector.broadcast %15 : vector<1x16xf32> to vector<2x16xf32>
    %431 = arith.addf %429, %430 : vector<2x16xf32>
    %cst_103 = arith.constant dense<0.000000e+00> : vector<2x128xf32>
    %432 = tpu.matmul %431, %16, %cst_103 {dimension_numbers = #tpu.dot_dimension_numbers<[1], [0], [0], [1], [0, 0, 1, 1], [], []>, precision = #tpu.contract_precision<fp32>} : vector<2x16xf32>, vector<16x128xf32>, vector<2x128xf32> -> vector<2x128xf32>
    %433 = vector.broadcast %17 : vector<1x128xf32> to vector<2x128xf32>
    %434 = arith.addf %432, %433 : vector<2x128xf32>
    %cst_104 = arith.constant dense<0xFF800000> : vector<2xf32>
    %435 = vector.multi_reduction <maximumf>, %434, %cst_104 [1] : vector<2x128xf32> to vector<2xf32>
    %436 = vector.shape_cast %435 : vector<2xf32> to vector<2x1xf32>
    %437 = vector.broadcast %436 : vector<2x1xf32> to vector<2x128xf32>
    %438 = arith.subf %434, %437 : vector<2x128xf32>
    %439 = math.exp %438 : vector<2x128xf32>
    %cst_105 = arith.constant dense<0.000000e+00> : vector<2xf32>
    %440 = vector.multi_reduction <add>, %439, %cst_105 [1] : vector<2x128xf32> to vector<2xf32>
    %441 = vector.shape_cast %440 : vector<2xf32> to vector<2x1xf32>
    %442 = math.log %441 : vector<2x1xf32>
    %443 = vector.broadcast %442 : vector<2x1xf32> to vector<2x128xf32>
    %444 = arith.subf %438, %443 : vector<2x128xf32>
    %445 = vector.extract_strided_slice %444 {offsets = [0, 0], sizes = [1, 128], strides = [1, 1]} : vector<2x128xf32> to vector<1x128xf32>
    %c6 = arith.constant 6 : index
    %c0_106 = arith.constant 0 : index
    %446 = vector.load %arg12[%c6, %c0_106] : memref<16x128xf32, #tpu.memory_space<vmem>>, vector<1x128xf32>
    tpu.vector_store %arg12[%c6, %c0_106], %445 {strides = array<i32>} : memref<16x128xf32, #tpu.memory_space<vmem>>, vector<1x128xf32>,
    %447 = vector.extract_strided_slice %444 {offsets = [1, 0], sizes = [1, 128], strides = [1, 1]} : vector<2x128xf32> to vector<1x128xf32>
    %c14 = arith.constant 14 : index
    %c0_107 = arith.constant 0 : index
    %448 = vector.load %arg12[%c14, %c0_107] : memref<16x128xf32, #tpu.memory_space<vmem>>, vector<1x128xf32>
    tpu.vector_store %arg12[%c14, %c0_107], %447 {strides = array<i32>} : memref<16x128xf32, #tpu.memory_space<vmem>>, vector<1x128xf32>,
    %cst_108 = arith.constant dense<0.000000e+00> : vector<2x128xf32>
    %449 = tpu.matmul %408, %9, %cst_108 {dimension_numbers = #tpu.dot_dimension_numbers<[1], [0], [0], [1], [0, 0, 1, 1], [], []>} : vector<2x32xf32>, vector<32x128xf32>, vector<2x128xf32> -> vector<2x128xf32>
    %450 = vector.broadcast %13 : vector<1x128xf32> to vector<2x128xf32>
    %451 = arith.addf %449, %450 : vector<2x128xf32>
    %cst_109 = arith.constant dense<0.000000e+00> : vector<2x128xf32>
    %452 = tpu.matmul %428, %11, %cst_109 {dimension_numbers = #tpu.dot_dimension_numbers<[1], [0], [0], [1], [0, 0, 1, 1], [], []>} : vector<2x32xf32>, vector<32x128xf32>, vector<2x128xf32> -> vector<2x128xf32>
    %453 = arith.addf %451, %452 : vector<2x128xf32>
    %454 = arith.negf %453 : vector<2x128xf32>
    %455 = math.exp %454 : vector<2x128xf32>
    %cst_110 = arith.constant 1.000000e+00 : f32
    %456 = vector.broadcast %cst_110 : f32 to vector<2x128xf32>
    %457 = arith.addf %456, %455 : vector<2x128xf32>
    %458 = arith.divf %456, %457 : vector<2x128xf32>
    %459 = math.tanh %453 : vector<2x128xf32>
    %460 = vector.extract_strided_slice %458 {offsets = [0, 0], sizes = [2, 32], strides = [1, 1]} : vector<2x128xf32> to vector<2x32xf32>
    %461 = vector.extract_strided_slice %458 {offsets = [0, 32], sizes = [2, 32], strides = [1, 1]} : vector<2x128xf32> to vector<2x32xf32>
    %462 = vector.extract_strided_slice %459 {offsets = [0, 64], sizes = [2, 32], strides = [1, 1]} : vector<2x128xf32> to vector<2x32xf32>
    %463 = vector.extract_strided_slice %458 {offsets = [0, 96], sizes = [2, 32], strides = [1, 1]} : vector<2x128xf32> to vector<2x32xf32>
    %464 = arith.mulf %461, %426 : vector<2x32xf32>
    %465 = arith.mulf %460, %462 : vector<2x32xf32>
    %466 = arith.addf %464, %465 : vector<2x32xf32>
    %467 = math.tanh %466 : vector<2x32xf32>
    %468 = arith.mulf %463, %467 : vector<2x32xf32>
    %cst_111 = arith.constant dense<0.000000e+00> : vector<2x16xf32>
    %469 = tpu.matmul %468, %14, %cst_111 {dimension_numbers = #tpu.dot_dimension_numbers<[1], [0], [0], [1], [0, 0, 1, 1], [], []>, precision = #tpu.contract_precision<fp32>} : vector<2x32xf32>, vector<32x16xf32>, vector<2x16xf32> -> vector<2x16xf32>
    %470 = vector.broadcast %15 : vector<1x16xf32> to vector<2x16xf32>
    %471 = arith.addf %469, %470 : vector<2x16xf32>
    %cst_112 = arith.constant dense<0.000000e+00> : vector<2x128xf32>
    %472 = tpu.matmul %471, %16, %cst_112 {dimension_numbers = #tpu.dot_dimension_numbers<[1], [0], [0], [1], [0, 0, 1, 1], [], []>, precision = #tpu.contract_precision<fp32>} : vector<2x16xf32>, vector<16x128xf32>, vector<2x128xf32> -> vector<2x128xf32>
    %473 = vector.broadcast %17 : vector<1x128xf32> to vector<2x128xf32>
    %474 = arith.addf %472, %473 : vector<2x128xf32>
    %cst_113 = arith.constant dense<0xFF800000> : vector<2xf32>
    %475 = vector.multi_reduction <maximumf>, %474, %cst_113 [1] : vector<2x128xf32> to vector<2xf32>
    %476 = vector.shape_cast %475 : vector<2xf32> to vector<2x1xf32>
    %477 = vector.broadcast %476 : vector<2x1xf32> to vector<2x128xf32>
    %478 = arith.subf %474, %477 : vector<2x128xf32>
    %479 = math.exp %478 : vector<2x128xf32>
    %cst_114 = arith.constant dense<0.000000e+00> : vector<2xf32>
    %480 = vector.multi_reduction <add>, %479, %cst_114 [1] : vector<2x128xf32> to vector<2xf32>
    %481 = vector.shape_cast %480 : vector<2xf32> to vector<2x1xf32>
    %482 = math.log %481 : vector<2x1xf32>
    %483 = vector.broadcast %482 : vector<2x1xf32> to vector<2x128xf32>
    %484 = arith.subf %478, %483 : vector<2x128xf32>
    %485 = vector.extract_strided_slice %484 {offsets = [0, 0], sizes = [1, 128], strides = [1, 1]} : vector<2x128xf32> to vector<1x128xf32>
    %c7 = arith.constant 7 : index
    %c0_115 = arith.constant 0 : index
    %486 = vector.load %arg12[%c7, %c0_115] : memref<16x128xf32, #tpu.memory_space<vmem>>, vector<1x128xf32>
    tpu.vector_store %arg12[%c7, %c0_115], %485 {strides = array<i32>} : memref<16x128xf32, #tpu.memory_space<vmem>>, vector<1x128xf32>,
    %487 = vector.extract_strided_slice %484 {offsets = [1, 0], sizes = [1, 128], strides = [1, 1]} : vector<2x128xf32> to vector<1x128xf32>
    %c15 = arith.constant 15 : index
    %c0_116 = arith.constant 0 : index
    %488 = vector.load %arg12[%c15, %c0_116] : memref<16x128xf32, #tpu.memory_space<vmem>>, vector<1x128xf32>
    tpu.vector_store %arg12[%c15, %c0_116], %487 {strides = array<i32>} : memref<16x128xf32, #tpu.memory_space<vmem>>, vector<1x128xf32>,
    return
  }
}

</mosaic_0001>

<llo_original>
// kernel: lstmlm_forward.1
$region0: #{lstmlm_forward.1}
  #allocation0 [shape = 'u32[]', space=smem, size = 0x4, offset = 0x4, fixed_abs, tag = 'smem constant byte address 0x4 - core index']
  #allocation1 [shape = 'u32[72,128]{1,0:T(1,128)}', space=vmem, size = 0x9000, scoped, tag = 'internal scratch']
  %s0 = inlined_call_operand.vmem [shape: s32[16,1], index: 0, kind: input, shape index: {}]
  %s1 = inlined_call_operand.hbm [shape: f32[50,16], index: 1, kind: input, shape index: {}]
  %s2 = inlined_call_operand.hbm [shape: f32[16,128], index: 2, kind: input, shape index: {}]
  %s3 = inlined_call_operand.hbm [shape: f32[32,128], index: 3, kind: input, shape index: {}]
  %s4 = inlined_call_operand.vmem [shape: f32[1,128], index: 4, kind: input, shape index: {}]
  %s5 = inlined_call_operand.hbm [shape: f32[32,128], index: 5, kind: input, shape index: {}]
  %s6 = inlined_call_operand.hbm [shape: f32[32,128], index: 6, kind: input, shape index: {}]
  %s7 = inlined_call_operand.vmem [shape: f32[1,128], index: 7, kind: input, shape index: {}]
  %s8 = inlined_call_operand.vmem [shape: f32[32,16], index: 8, kind: input, shape index: {}]
  %s9 = inlined_call_operand.vmem [shape: f32[1,16], index: 9, kind: input, shape index: {}]
  %s10 = inlined_call_operand.hbm [shape: f32[16,128], index: 10, kind: input, shape index: {}]
  %s11 = inlined_call_operand.vmem [shape: f32[1,128], index: 11, kind: input, shape index: {}]
  %s12 = inlined_call_operand.hbm [shape: f32[16,128], index: 12, kind: output, shape index: {}]
  %s13 = sld [smem:[#allocation0]]
  $region82: #{lstmlm_forward.1} parent=0
    _
  %s15 = ssub.s32 1, %s13
  %s16 = scalar_select 0, %s15, %s13
  $region1: #{lstmlm_forward.1} parent=0
    #allocation2 [shape = 'u8[28672]{0}', space=vmem, size = 0x7000, scoped, tag = 'input window, operand 1, single buffered']
    #allocation3 [shape = 's32[1]{0}', space=sflag, size = 0x4, scoped, tag = 'scoped memory for lstmlm_forward.1']
    #allocation4 [shape = 's32[1]{0}', space=sflag, size = 0x4, scoped, tag = 'scoped memory for lstmlm_forward.1']
    #allocation5 [shape = 'u8[8192]{0}', space=vmem, size = 0x2000, scoped, tag = 'input window, operand 2, single buffered']
    #allocation6 [shape = 's32[1]{0}', space=sflag, size = 0x4, scoped, tag = 'scoped memory for lstmlm_forward.1']
    #allocation7 [shape = 'u8[16384]{0}', space=vmem, size = 0x4000, scoped, tag = 'input window, operand 3, single buffered']
    #allocation8 [shape = 'u8[16384]{0}', space=vmem, size = 0x4000, scoped, tag = 'input window, operand 5, single buffered']
    #allocation9 [shape = 's32[1]{0}', space=sflag, size = 0x4, scoped, tag = 'scoped memory for lstmlm_forward.1']
    #allocation10 [shape = 'u8[16384]{0}', space=vmem, size = 0x4000, scoped, tag = 'input window, operand 6, single buffered']
    #allocation11 [shape = 'u8[8192]{0}', space=vmem, size = 0x2000, scoped, tag = 'input window, operand 10, single buffered']
    #allocation12 [shape = 's32[1]{0}', space=sflag, size = 0x4, scoped, tag = 'scoped memory for lstmlm_forward.1']
    #allocation13 [shape = 'u8[8192]{0}', space=vmem, size = 0x2000, scoped, tag = 'output window, operand 0, single buffered']
    %17 = vsyncpa [#allocation3], 0
    %18 = vsyncpa [#allocation6], 0
    %19 = vsyncpa [#allocation9], 0
    %20 = vsyncpa [#allocation12], 0
    %21 = vsyncpa [#allocation4], 0
    // Predicated region
    $region2: #{lstmlm_forward.1} parent=1 // pred_check
      _
    $region3: #{lstmlm_forward.1} parent=1 // pred_check_branch
      %23 = sbr.rel (0) target = $region5
    $region4: #{lstmlm_forward.1} parent=1 // pred_region
      _
    $region5: #{lstmlm_forward.1} parent=1 // pred_fallthru
      _
    // Predicated region
    $region6: #{lstmlm_forward.1} parent=1 // pred_check
      _
    $region7: #{lstmlm_forward.1} parent=1 // pred_check_branch
      %25 = sbr.rel (0) target = $region9
    $region8: #{lstmlm_forward.1} parent=1 // pred_region
      %27 = vsyncadd [#allocation3], 0
      %s28 = sshll.u32 %s1, 4
      %s29 = int_to_ptr.hbm [resolvable:$true] %s28
      %s30 = sshll.u32 [#allocation2], 4
      %s31 = int_to_ptr.vmem [resolvable:$true] %s30
      %36 = dma.hbm_to_vmem [thread:$0]  %s29, 896, %s31, [#allocation3], 128, 128, 8
    $region9: #{lstmlm_forward.1} parent=1 // pred_fallthru
      _
    // Predicated region
    $region10: #{lstmlm_forward.1} parent=1 // pred_check
      _
    $region11: #{lstmlm_forward.1} parent=1 // pred_check_branch
      %38 = sbr.rel (0) target = $region13
    $region12: #{lstmlm_forward.1} parent=1 // pred_region
      %40 = vsyncadd [#allocation6], 0
      %s41 = sshll.u32 %s2, 4
      %s42 = int_to_ptr.hbm [resolvable:$true] %s41
      %s43 = sshll.u32 [#allocation5], 4
      %s44 = int_to_ptr.vmem [resolvable:$true] %s43
      %49 = dma.hbm_to_vmem [thread:$0]  %s42, 256, %s44, [#allocation6], 128, 128, 8
    $region13: #{lstmlm_forward.1} parent=1 // pred_fallthru
      _
    // Predicated region
    $region14: #{lstmlm_forward.1} parent=1 // pred_check
      _
    $region15: #{lstmlm_forward.1} parent=1 // pred_check_branch
      %51 = sbr.rel (0) target = $region17
    $region16: #{lstmlm_forward.1} parent=1 // pred_region
      %53 = vsyncadd [#allocation6], 0
      %s54 = sshll.u32 %s3, 4
      %s55 = int_to_ptr.hbm [resolvable:$true] %s54
      %s56 = sshll.u32 [#allocation7], 4
      %s57 = int_to_ptr.vmem [resolvable:$true] %s56
      %62 = dma.hbm_to_vmem [thread:$0]  %s55, 512, %s57, [#allocation6], 128, 128, 8
    $region17: #{lstmlm_forward.1} parent=1 // pred_fallthru
      _
    // Predicated region
    $region18: #{lstmlm_forward.1} parent=1 // pred_check
      _
    $region19: #{lstmlm_forward.1} parent=1 // pred_check_branch
      %64 = sbr.rel (0) target = $region21
    $region20: #{lstmlm_forward.1} parent=1 // pred_region
      _
    $region21: #{lstmlm_forward.1} parent=1 // pred_fallthru
      _
    // Predicated region
    $region22: #{lstmlm_forward.1} parent=1 // pred_check
      _
    $region23: #{lstmlm_forward.1} parent=1 // pred_check_branch
      %66 = sbr.rel (0) target = $region25
    $region24: #{lstmlm_forward.1} parent=1 // pred_region
      %68 = vsyncadd [#allocation9], 0
      %s69 = sshll.u32 %s5, 4
      %s70 = int_to_ptr.hbm [resolvable:$true] %s69
      %s71 = sshll.u32 [#allocation8], 4
      %s72 = int_to_ptr.vmem [resolvable:$true] %s71
      %77 = dma.hbm_to_vmem [thread:$0]  %s70, 512, %s72, [#allocation9], 128, 128, 8
    $region25: #{lstmlm_forward.1} parent=1 // pred_fallthru
      _
    // Predicated region
    $region26: #{lstmlm_forward.1} parent=1 // pred_check
      _
    $region27: #{lstmlm_forward.1} parent=1 // pred_check_branch
      %79 = sbr.rel (0) target = $region29
    $region28: #{lstmlm_forward.1} parent=1 // pred_region
      %81 = vsyncadd [#allocation9], 0
      %s82 = sshll.u32 %s6, 4
      %s83 = int_to_ptr.hbm [resolvable:$true] %s82
      %s84 = sshll.u32 [#allocation10], 4
      %s85 = int_to_ptr.vmem [resolvable:$true] %s84
      %90 = dma.hbm_to_vmem [thread:$0]  %s83, 512, %s85, [#allocation9], 128, 128, 8
    $region29: #{lstmlm_forward.1} parent=1 // pred_fallthru
      _
    // Predicated region
    $region30: #{lstmlm_forward.1} parent=1 // pred_check
      _
    $region31: #{lstmlm_forward.1} parent=1 // pred_check_branch
      %92 = sbr.rel (0) target = $region33
    $region32: #{lstmlm_forward.1} parent=1 // pred_region
      _
    $region33: #{lstmlm_forward.1} parent=1 // pred_fallthru
      _
    // Predicated region
    $region34: #{lstmlm_forward.1} parent=1 // pred_check
      _
    $region35: #{lstmlm_forward.1} parent=1 // pred_check_branch
      %94 = sbr.rel (0) target = $region37
    $region36: #{lstmlm_forward.1} parent=1 // pred_region
      _
    $region37: #{lstmlm_forward.1} parent=1 // pred_fallthru
      _
    // Predicated region
    $region38: #{lstmlm_forward.1} parent=1 // pred_check
      _
    $region39: #{lstmlm_forward.1} parent=1 // pred_check_branch
      %96 = sbr.rel (0) target = $region41
    $region40: #{lstmlm_forward.1} parent=1 // pred_region
      _
    $region41: #{lstmlm_forward.1} parent=1 // pred_fallthru
      _
    // Predicated region
    $region42: #{lstmlm_forward.1} parent=1 // pred_check
      _
    $region43: #{lstmlm_forward.1} parent=1 // pred_check_branch
      %98 = sbr.rel (0) target = $region45
    $region44: #{lstmlm_forward.1} parent=1 // pred_region
      %100 = vsyncadd [#allocation12], 0
      %s101 = sshll.u32 %s10, 4
      %s102 = int_to_ptr.hbm [resolvable:$true] %s101
      %s103 = sshll.u32 [#allocation11], 4
      %s104 = int_to_ptr.vmem [resolvable:$true] %s103
      %109 = dma.hbm_to_vmem [thread:$0]  %s102, 256, %s104, [#allocation12], 128, 128, 8
    $region45: #{lstmlm_forward.1} parent=1 // pred_fallthru
      _
    // Predicated region
    $region46: #{lstmlm_forward.1} parent=1 // pred_check
      _
    $region47: #{lstmlm_forward.1} parent=1 // pred_check_branch
      %111 = sbr.rel (0) target = $region49
    $region48: #{lstmlm_forward.1} parent=1 // pred_region
      _
    $region49: #{lstmlm_forward.1} parent=1 // pred_fallthru
      _
    // Predicated region
    $region50: #{lstmlm_forward.1} parent=1 // pred_check
      _
    $region51: #{lstmlm_forward.1} parent=1 // pred_check_branch
      %113 = sbr.rel (0) target = $region53
    $region52: #{lstmlm_forward.1} parent=1 // pred_region
      %115 = dma.done [#allocation3], 896
    $region53: #{lstmlm_forward.1} parent=1 // pred_fallthru
      _
    // Predicated region
    $region54: #{lstmlm_forward.1} parent=1 // pred_check
      _
    $region55: #{lstmlm_forward.1} parent=1 // pred_check_branch
      %117 = sbr.rel (0) target = $region57
    $region56: #{lstmlm_forward.1} parent=1 // pred_region
      %119 = dma.done [#allocation6], 256
    $region57: #{lstmlm_forward.1} parent=1 // pred_fallthru
      _
    // Predicated region
    $region58: #{lstmlm_forward.1} parent=1 // pred_check
      _
    $region59: #{lstmlm_forward.1} parent=1 // pred_check_branch
      %121 = sbr.rel (0) target = $region61
    $region60: #{lstmlm_forward.1} parent=1 // pred_region
      %123 = dma.done [#allocation6], 512
    $region61: #{lstmlm_forward.1} parent=1 // pred_fallthru
      _
    // Predicated region
    $region62: #{lstmlm_forward.1} parent=1 // pred_check
      _
    $region63: #{lstmlm_forward.1} parent=1 // pred_check_branch
      %125 = sbr.rel (0) target = $region65
    $region64: #{lstmlm_forward.1} parent=1 // pred_region
      %127 = dma.done [#allocation9], 512
    $region65: #{lstmlm_forward.1} parent=1 // pred_fallthru
      _
    // Predicated region
    $region66: #{lstmlm_forward.1} parent=1 // pred_check
      _
    $region67: #{lstmlm_forward.1} parent=1 // pred_check_branch
      %129 = sbr.rel (0) target = $region69
    $region68: #{lstmlm_forward.1} parent=1 // pred_region
      %131 = dma.done [#allocation9], 512
    $region69: #{lstmlm_forward.1} parent=1 // pred_fallthru
      _
    // Predicated region
    $region70: #{lstmlm_forward.1} parent=1 // pred_check
      _
    $region71: #{lstmlm_forward.1} parent=1 // pred_check_branch
      %133 = sbr.rel (0) target = $region73
    $region72: #{lstmlm_forward.1} parent=1 // pred_region
      %135 = dma.done [#allocation12], 256
    $region73: #{lstmlm_forward.1} parent=1 // pred_fallthru
      _
    %v136 = vld [vmem:[%s0] sm:$0xff]
    %v137 = vld [vmem:[%s0 + $0x8] sm:$0xff]
    %v138 = vlaneseq
    %v139 = vand.u32 %v138, 127
    %140 = vset.pattern.permute.xlu0 0
    %141 = vperm.xlu0 %140, %v136
    %v142 = vpop.permute.xlu0 %141
    %143 = vset.pattern.permute.xlu0 0
    %144 = vperm.xlu0 %143, %v137
    %v145 = vpop.permute.xlu0 %144
    %vm146 = vcmp.eq.s32.totalorder %v139, %v142
    %vm147 = vcmp.eq.s32.totalorder %v139, %v145
    %v148 = vsel %vm146, 1, 0
    %v149 = vsel %vm147, 1, 0
    %v150 = vcvt.s32.f32 %v148
    %v151 = vcvt.s32.f32 %v149
    %v152 = vld [vmem:[#allocation2] sm:$0xff]
    %v153 = vld [vmem:[#allocation2 + $0x8] sm:$0xff]
    %v154 = vld [vmem:[#allocation2 + $0x10] sm:$0xff]
    %v155 = vld [vmem:[#allocation2 + $0x18] sm:$0xff]
    %v156 = vld [vmem:[#allocation2 + $0x20] sm:$0xff]
    %v157 = vld [vmem:[#allocation2 + $0x28] sm:$0xff]
    %v158 = vld [vmem:[#allocation2 + $0x30] sm:$0x3]
    %vm159 = vcmask 408576
    %v161 = vsel %vm159, %v150, 0
    %v164 = vsel %vm159, %v151, 0
    %vm166 = vcmask 1041408
    %v168 = vsel %vm166, %v158, 0
    %170 = vmatpush.msra.mxu0 0.0
    %171 = vmatpush.msra.mxu0 0.0
    %172 = vmatpush.msra.mxu0 0.0
    %173 = vmatpush.msra.mxu0 0.0
    %174 = vmatpush.msra.mxu0 0.0
    %175 = vmatpush.msra.mxu0 0.0
    %176 = vmatpush.msra.mxu0 0.0
    %177 = vmatpush.msra.mxu0 0.0
    %178 = vmatpush.msra.mxu0 0.0
    %v179 = vand.u32 %v168, 4294901760
    %180 = vmatpush.msra.mxu0 %v179
    %v181 = vand.u32 %v157, 4294901760
    %182 = vmatpush.msra.mxu0 %v181
    %v183 = vand.u32 %v156, 4294901760
    %184 = vmatpush.msra.mxu0 %v183
    %v185 = vand.u32 %v155, 4294901760
    %186 = vmatpush.msra.mxu0 %v185
    %v187 = vand.u32 %v154, 4294901760
    %188 = vmatpush.msra.mxu0 %v187
    %v189 = vand.u32 %v153, 4294901760
    %190 = vmatpush.msra.mxu0 %v189
    %v191 = vand.u32 %v152, 4294901760
    %192 = vmatpush.msra.mxu0 %v191
    %v193 = vand.u32 %v161, 4294901760
    %v194 = vsub.f32 %v161, %v193
    %v195 = vand.u32 %v194, 4294901760
    %v196 = vsub.f32 %v194, %v195
    %v197 = vand.u32 %v196, 4294901760
    %198 = vmatmul.f32.gmra.mxu0 %v197
    %v199 = vpop.f32.mrf.mxu0
    %v200 = vadd.f32 0.0, %v199
    %v201 = vand.u32 %v164, 4294901760
    %v202 = vsub.f32 %v164, %v201
    %v203 = vand.u32 %v202, 4294901760
    %v204 = vsub.f32 %v202, %v203
    %v205 = vand.u32 %v204, 4294901760
    %206 = vmatmul.f32.gmra.mxu0 %v205
    %v207 = vpop.f32.mrf.mxu0
    %v208 = vadd.f32 0.0, %v207
    %209 = vdwg.mxu0
    %210 = vmatpush.msra.mxu0 0.0
    %211 = vmatpush.msra.mxu0 0.0
    %212 = vmatpush.msra.mxu0 0.0
    %213 = vmatpush.msra.mxu0 0.0
    %214 = vmatpush.msra.mxu0 0.0
    %215 = vmatpush.msra.mxu0 0.0
    %216 = vmatpush.msra.mxu0 0.0
    %217 = vmatpush.msra.mxu0 0.0
    %218 = vmatpush.msra.mxu0 0.0
    %v219 = vand.u32 %v168, 4294901760
    %v220 = vsub.f32 %v168, %v219
    %v221 = vand.u32 %v220, 4294901760
    %v222 = vsub.f32 %v220, %v221
    %v223 = vand.u32 %v222, 4294901760
    %224 = vmatpush.msra.mxu0 %v223
    %v225 = vand.u32 %v157, 4294901760
    %v226 = vsub.f32 %v157, %v225
    %v227 = vand.u32 %v226, 4294901760
    %v228 = vsub.f32 %v226, %v227
    %v229 = vand.u32 %v228, 4294901760
    %230 = vmatpush.msra.mxu0 %v229
    %v231 = vand.u32 %v156, 4294901760
    %v232 = vsub.f32 %v156, %v231
    %v233 = vand.u32 %v232, 4294901760
    %v234 = vsub.f32 %v232, %v233
    %v235 = vand.u32 %v234, 4294901760
    %236 = vmatpush.msra.mxu0 %v235
    %v237 = vand.u32 %v155, 4294901760
    %v238 = vsub.f32 %v155, %v237
    %v239 = vand.u32 %v238, 4294901760
    %v240 = vsub.f32 %v238, %v239
    %v241 = vand.u32 %v240, 4294901760
    %242 = vmatpush.msra.mxu0 %v241
    %v243 = vand.u32 %v154, 4294901760
    %v244 = vsub.f32 %v154, %v243
    %v245 = vand.u32 %v244, 4294901760
    %v246 = vsub.f32 %v244, %v245
    %v247 = vand.u32 %v246, 4294901760
    %248 = vmatpush.msra.mxu0 %v247
    %v249 = vand.u32 %v153, 4294901760
    %v250 = vsub.f32 %v153, %v249
    %v251 = vand.u32 %v250, 4294901760
    %v252 = vsub.f32 %v250, %v251
    %v253 = vand.u32 %v252, 4294901760
    %254 = vmatpush.msra.mxu0 %v253
    %v255 = vand.u32 %v152, 4294901760
    %v256 = vsub.f32 %v152, %v255
    %v257 = vand.u32 %v256, 4294901760
    %v258 = vsub.f32 %v256, %v257
    %v259 = vand.u32 %v258, 4294901760
    %260 = vmatpush.msra.mxu0 %v259
    %v261 = vand.u32 %v161, 4294901760
    %262 = vmatmul.f32.gmra.mxu0 %v261
    %v263 = vpop.f32.mrf.mxu0
    %v264 = vadd.f32 %v200, %v263
    %v265 = vand.u32 %v164, 4294901760
    %266 = vmatmul.f32.gmra.mxu0 %v265
    %v267 = vpop.f32.mrf.mxu0
    %v268 = vadd.f32 %v208, %v267
    %269 = vdwg.mxu0
    %270 = vmatpush.msra.mxu0 0.0
    %271 = vmatpush.msra.mxu0 0.0
    %272 = vmatpush.msra.mxu0 0.0
    %273 = vmatpush.msra.mxu0 0.0
    %274 = vmatpush.msra.mxu0 0.0
    %275 = vmatpush.msra.mxu0 0.0
    %276 = vmatpush.msra.mxu0 0.0
    %277 = vmatpush.msra.mxu0 0.0
    %278 = vmatpush.msra.mxu0 0.0
    %v279 = vand.u32 %v168, 4294901760
    %v280 = vsub.f32 %v168, %v279
    %281 = vmatpush.msra.mxu0 %v280
    %v282 = vand.u32 %v157, 4294901760
    %v283 = vsub.f32 %v157, %v282
    %284 = vmatpush.msra.mxu0 %v283
    %v285 = vand.u32 %v156, 4294901760
    %v286 = vsub.f32 %v156, %v285
    %287 = vmatpush.msra.mxu0 %v286
    %v288 = vand.u32 %v155, 4294901760
    %v289 = vsub.f32 %v155, %v288
    %290 = vmatpush.msra.mxu0 %v289
    %v291 = vand.u32 %v154, 4294901760
    %v292 = vsub.f32 %v154, %v291
    %293 = vmatpush.msra.mxu0 %v292
    %v294 = vand.u32 %v153, 4294901760
    %v295 = vsub.f32 %v153, %v294
    %296 = vmatpush.msra.mxu0 %v295
    %v297 = vand.u32 %v152, 4294901760
    %v298 = vsub.f32 %v152, %v297
    %299 = vmatpush.msra.mxu0 %v298
    %v300 = vand.u32 %v161, 4294901760
    %v301 = vsub.f32 %v161, %v300
    %302 = vmatmul.f32.gmra.mxu0 %v301
    %v303 = vpop.f32.mrf.mxu0
    %v304 = vadd.f32 %v264, %v303
    %v305 = vand.u32 %v164, 4294901760
    %v306 = vsub.f32 %v164, %v305
    %307 = vmatmul.f32.gmra.mxu0 %v306
    %v308 = vpop.f32.mrf.mxu0
    %v309 = vadd.f32 %v268, %v308
    %310 = vdwg.mxu0
    %311 = vmatpush.msra.mxu0 0.0
    %312 = vmatpush.msra.mxu0 0.0
    %313 = vmatpush.msra.mxu0 0.0
    %314 = vmatpush.msra.mxu0 0.0
    %315 = vmatpush.msra.mxu0 0.0
    %316 = vmatpush.msra.mxu0 0.0
    %317 = vmatpush.msra.mxu0 0.0
    %318 = vmatpush.msra.mxu0 0.0
    %319 = vmatpush.msra.mxu0 0.0
    %v320 = vand.u32 %v168, 4294901760
    %321 = vmatpush.msra.mxu0 %v320
    %v322 = vand.u32 %v157, 4294901760
    %323 = vmatpush.msra.mxu0 %v322
    %v324 = vand.u32 %v156, 4294901760
    %325 = vmatpush.msra.mxu0 %v324
    %v326 = vand.u32 %v155, 4294901760
    %327 = vmatpush.msra.mxu0 %v326
    %v328 = vand.u32 %v154, 4294901760
    %329 = vmatpush.msra.mxu0 %v328
    %v330 = vand.u32 %v153, 4294901760
    %331 = vmatpush.msra.mxu0 %v330
    %v332 = vand.u32 %v152, 4294901760
    %333 = vmatpush.msra.mxu0 %v332
    %v334 = vand.u32 %v161, 4294901760
    %v335 = vsub.f32 %v161, %v334
    %v336 = vand.u32 %v335, 4294901760
    %337 = vmatmul.f32.gmra.mxu0 %v336
    %v338 = vpop.f32.mrf.mxu0
    %v339 = vadd.f32 %v304, %v338
    %v340 = vand.u32 %v164, 4294901760
    %v341 = vsub.f32 %v164, %v340
    %v342 = vand.u32 %v341, 4294901760
    %343 = vmatmul.f32.gmra.mxu0 %v342
    %v344 = vpop.f32.mrf.mxu0
    %v345 = vadd.f32 %v309, %v344
    %346 = vdwg.mxu0
    %347 = vmatpush.msra.mxu0 0.0
    %348 = vmatpush.msra.mxu0 0.0
    %349 = vmatpush.msra.mxu0 0.0
    %350 = vmatpush.msra.mxu0 0.0
    %351 = vmatpush.msra.mxu0 0.0
    %352 = vmatpush.msra.mxu0 0.0
    %353 = vmatpush.msra.mxu0 0.0
    %354 = vmatpush.msra.mxu0 0.0
    %355 = vmatpush.msra.mxu0 0.0
    %v356 = vand.u32 %v168, 4294901760
    %v357 = vsub.f32 %v168, %v356
    %v358 = vand.u32 %v357, 4294901760
    %359 = vmatpush.msra.mxu0 %v358
    %v360 = vand.u32 %v157, 4294901760
    %v361 = vsub.f32 %v157, %v360
    %v362 = vand.u32 %v361, 4294901760
    %363 = vmatpush.msra.mxu0 %v362
    %v364 = vand.u32 %v156, 4294901760
    %v365 = vsub.f32 %v156, %v364
    %v366 = vand.u32 %v365, 4294901760
    %367 = vmatpush.msra.mxu0 %v366
    %v368 = vand.u32 %v155, 4294901760
    %v369 = vsub.f32 %v155, %v368
    %v370 = vand.u32 %v369, 4294901760
    %371 = vmatpush.msra.mxu0 %v370
    %v372 = vand.u32 %v154, 4294901760
    %v373 = vsub.f32 %v154, %v372
    %v374 = vand.u32 %v373, 4294901760
    %375 = vmatpush.msra.mxu0 %v374
    %v376 = vand.u32 %v153, 4294901760
    %v377 = vsub.f32 %v153, %v376
    %v378 = vand.u32 %v377, 4294901760
    %379 = vmatpush.msra.mxu0 %v378
    %v380 = vand.u32 %v152, 4294901760
    %v381 = vsub.f32 %v152, %v380
    %v382 = vand.u32 %v381, 4294901760
    %383 = vmatpush.msra.mxu0 %v382
    %v384 = vand.u32 %v161, 4294901760
    %385 = vmatmul.f32.gmra.mxu0 %v384
    %v386 = vpop.f32.mrf.mxu0
    %v387 = vadd.f32 %v339, %v386
    %v388 = vand.u32 %v164, 4294901760
    %389 = vmatmul.f32.gmra.mxu0 %v388
    %v390 = vpop.f32.mrf.mxu0
    %v391 = vadd.f32 %v345, %v390
    %392 = vdwg.mxu0
    %393 = vmatpush.msra.mxu0 0.0
    %394 = vmatpush.msra.mxu0 0.0
    %395 = vmatpush.msra.mxu0 0.0
    %396 = vmatpush.msra.mxu0 0.0
    %397 = vmatpush.msra.mxu0 0.0
    %398 = vmatpush.msra.mxu0 0.0
    %399 = vmatpush.msra.mxu0 0.0
    %400 = vmatpush.msra.mxu0 0.0
    %401 = vmatpush.msra.mxu0 0.0
    %v402 = vand.u32 %v168, 4294901760
    %403 = vmatpush.msra.mxu0 %v402
    %v404 = vand.u32 %v157, 4294901760
    %405 = vmatpush.msra.mxu0 %v404
    %v406 = vand.u32 %v156, 4294901760
    %407 = vmatpush.msra.mxu0 %v406
    %v408 = vand.u32 %v155, 4294901760
    %409 = vmatpush.msra.mxu0 %v408
    %v410 = vand.u32 %v154, 4294901760
    %411 = vmatpush.msra.mxu0 %v410
    %v412 = vand.u32 %v153, 4294901760
    %413 = vmatpush.msra.mxu0 %v412
    %v414 = vand.u32 %v152, 4294901760
    %415 = vmatpush.msra.mxu0 %v414
    %v416 = vand.u32 %v161, 4294901760
    %417 = vmatmul.f32.gmra.mxu0 %v416
    %v418 = vpop.f32.mrf.mxu0
    %v419 = vadd.f32 %v387, %v418
    %v420 = vand.u32 %v164, 4294901760
    %421 = vmatmul.f32.gmra.mxu0 %v420
    %v422 = vpop.f32.mrf.mxu0
    %v423 = vadd.f32 %v391, %v422
    %424 = vdwg.mxu0
    %v425 = vld [vmem:[#allocation5] sm:$0xff]
    %v426 = vld [vmem:[#allocation5 + $0x8] sm:$0xff]
    %v427 = vld [vmem:[#allocation8] sm:$0xff]
    %v428 = vld [vmem:[#allocation8 + $0x8] sm:$0xff]
    %v429 = vld [vmem:[#allocation8 + $0x10] sm:$0xff]
    %v430 = vld [vmem:[#allocation8 + $0x18] sm:$0xff]
    %v431 = vld [vmem:[#allocation7] sm:$0xff]
    %v432 = vld [vmem:[#allocation7 + $0x8] sm:$0xff]
    %v433 = vld [vmem:[#allocation7 + $0x10] sm:$0xff]
    %v434 = vld [vmem:[#allocation7 + $0x18] sm:$0xff]
    %v435 = vld [vmem:[#allocation10] sm:$0xff]
    %v436 = vld [vmem:[#allocation10 + $0x8] sm:$0xff]
    %v437 = vld [vmem:[#allocation10 + $0x10] sm:$0xff]
    %v438 = vld [vmem:[#allocation10 + $0x18] sm:$0xff]
    %v439 = vld [vmem:[%s4] sm:$0x1]
    %v440 = vld [vmem:[%s7] sm:$0x1]
    %v441 = vld [vmem:[%s8] sm:$0xff]
    %v442 = vld [vmem:[%s8 + $0x8] sm:$0xff]
    %v443 = vld [vmem:[%s8 + $0x10] sm:$0xff]
    %v444 = vld [vmem:[%s8 + $0x18] sm:$0xff]
    %v445 = vld [vmem:[%s9] sm:$0x1]
    %v446 = vld [vmem:[#allocation11] sm:$0xff]
    %v447 = vld [vmem:[#allocation11 + $0x8] sm:$0xff]
    %v448 = vld [vmem:[%s11] sm:$0x1]
    %v450 = vperm.slane %v439, 0
    %vm452 = vcmask 130048
    %v454 = vsel %vm452, %v419, 0
    %v457 = vsel %vm452, %v423, 0
    %459 = vmatpush.msra.mxu0 0.0
    %460 = vmatpush.msra.mxu0 0.0
    %461 = vmatpush.msra.mxu0 0.0
    %462 = vmatpush.msra.mxu0 0.0
    %463 = vmatpush.msra.mxu0 0.0
    %464 = vmatpush.msra.mxu0 0.0
    %465 = vmatpush.msra.mxu0 0.0
    %466 = vmatpush.msra.mxu0 0.0
    %467 = vmatpush.msra.mxu0 0.0
    %468 = vmatpush.msra.mxu0 0.0
    %469 = vmatpush.msra.mxu0 0.0
    %470 = vmatpush.msra.mxu0 0.0
    %471 = vmatpush.msra.mxu0 0.0
    %472 = vmatpush.msra.mxu0 0.0
    %473 = vmatpush.msra.mxu0 %v426
    %474 = vmatpush.msra.mxu0 %v425
    %475 = vmatmul.f32.gmra.mxu0 %v454
    %v476 = vpop.f32.mrf.mxu0
    %v477 = vadd.f32 %v450, %v476
    %478 = vmatmul.f32.gmra.mxu0 %v457
    %v479 = vpop.f32.mrf.mxu0
    %v480 = vadd.f32 %v450, %v479
    %481 = vdwg.mxu0
    %vm482 = vcmask 261120
    %v484 = vsel %vm482, 0.0, 0
    %486 = vmatpush.msra.mxu0 0.0
    %487 = vmatpush.msra.mxu0 0.0
    %488 = vmatpush.msra.mxu0 0.0
    %489 = vmatpush.msra.mxu0 0.0
    %490 = vmatpush.msra.mxu0 0.0
    %491 = vmatpush.msra.mxu0 0.0
    %492 = vmatpush.msra.mxu0 0.0
    %493 = vmatpush.msra.mxu0 0.0
    %494 = vmatpush.msra.mxu0 0.0
    %495 = vmatpush.msra.mxu0 0.0
    %496 = vmatpush.msra.mxu0 0.0
    %497 = vmatpush.msra.mxu0 0.0
    %498 = vmatpush.msra.mxu0 %v434
    %499 = vmatpush.msra.mxu0 %v433
    %500 = vmatpush.msra.mxu0 %v432
    %501 = vmatpush.msra.mxu0 %v431
    %502 = vmatmul.f32.gmra.mxu0 %v484
    %v503 = vpop.f32.mrf.mxu0
    %v504 = vadd.f32 0.0, %v503
    %505 = vdwg.mxu0
    %v506 = vadd.f32 %v477, %v504
    %v507 = vxor.u32 %v506, 2147483648
    %v508 = vmul.f32 %v507, 1.442695
    %v509 = vpow.pop %v508
    %v510 = vadd.f32 %v509, 1.0
    %v511 = vrcp.pop %v510
    %v512 = vmul.f32 %v510, %v511
    %v513 = vsub.f32 1.0, %v512
    %v514 = vmul.f32 %v511, %v513
    %v515 = vadd.f32 %v511, %v514
    %vm516 = vweird.f32 %v510
    %vm517 = vweird.f32 %v511
    %vm518 = vmor %vm516, %vm517
    %v519 = vsel %vm518, %v511, %v515
    %v520 = vand.u32 2147483647, %v510
    %vm521 = vcmp.eq.f32.partialorder %v520, 8.507059e+37
    %v522 = vand.u32 %v510, 2147483648
    %v523 = vor.u32 1.1754944e-38, %v522
    %v524 = vsel %vm521, %v523, %v519
    %v525 = vmul.f32 1.0, %v524
    %v526 = vtanh.pop %v506
    %v527 = vmul.f32 %v525, 0.0
    %529 = vrot.lane.b32.xlu0 %v526, 64
    %v530 = vpop.permute.xlu0 %529
    %v532 = vmul.f32 %v525, %v530
    %534 = vrot.lane.b32.xlu0 %v532, 32
    %v535 = vpop.permute.xlu0 %534
    %v537 = vadd.f32 %v527, %v535
    %v538 = vtanh.pop %v537
    %540 = vrot.lane.b32.xlu0 %v538, 64
    %v541 = vpop.permute.xlu0 %540
    %v543 = vmul.f32 %v525, %v541
    %545 = vrot.lane.b32.xlu0 %v543, 32
    %v546 = vpop.permute.xlu0 %545
    %v547 = vsel %vm482, %v546, 0
    %549 = vmatpush.msra.mxu0 0.0
    %550 = vmatpush.msra.mxu0 0.0
    %551 = vmatpush.msra.mxu0 0.0
    %552 = vmatpush.msra.mxu0 0.0
    %553 = vmatpush.msra.mxu0 0.0
    %554 = vmatpush.msra.mxu0 0.0
    %555 = vmatpush.msra.mxu0 0.0
    %556 = vmatpush.msra.mxu0 0.0
    %557 = vmatpush.msra.mxu0 0.0
    %558 = vmatpush.msra.mxu0 0.0
    %559 = vmatpush.msra.mxu0 0.0
    %560 = vmatpush.msra.mxu0 0.0
    %561 = vmatpush.msra.mxu0 %v434
    %562 = vmatpush.msra.mxu0 %v433
    %563 = vmatpush.msra.mxu0 %v432
    %564 = vmatpush.msra.mxu0 %v431
    %565 = vmatmul.f32.gmra.mxu0 %v547
    %v566 = vpop.f32.mrf.mxu0
    %v567 = vadd.f32 0.0, %v566
    %568 = vdwg.mxu0
    %v570 = vrot.slane %v567, 6
    %v572 = vadd.f32 %v477, %v570
    %v573 = vxor.u32 %v572, 2147483648
    %v574 = vmul.f32 %v573, 1.442695
    %v575 = vpow.pop %v574
    %v576 = vadd.f32 %v575, 1.0
    %v577 = vrcp.pop %v576
    %v578 = vmul.f32 %v576, %v577
    %v579 = vsub.f32 1.0, %v578
    %v580 = vmul.f32 %v577, %v579
    %v581 = vadd.f32 %v577, %v580
    %vm582 = vweird.f32 %v576
    %vm583 = vweird.f32 %v577
    %vm584 = vmor %vm582, %vm583
    %v585 = vsel %vm584, %v577, %v581
    %v586 = vand.u32 2147483647, %v576
    %vm587 = vcmp.eq.f32.partialorder %v586, 8.507059e+37
    %v588 = vand.u32 %v576, 2147483648
    %v589 = vor.u32 1.1754944e-38, %v588
    %v590 = vsel %vm587, %v589, %v585
    %v591 = vmul.f32 1.0, %v590
    %v592 = vtanh.pop %v572
    %v594 = vrot.slane %v537, 6
    %v596 = vmul.f32 %v591, %v594
    %598 = vrot.lane.b32.xlu0 %v592, 64
    %v599 = vpop.permute.xlu0 %598
    %v601 = vmul.f32 %v591, %v599
    %603 = vrot.lane.b32.xlu0 %v601, 32
    %v604 = vpop.permute.xlu0 %603
    %v606 = vadd.f32 %v596, %v604
    %v607 = vtanh.pop %v606
    %609 = vrot.lane.b32.xlu0 %v607, 64
    %v610 = vpop.permute.xlu0 %609
    %v612 = vmul.f32 %v591, %v610
    %v614 = vperm.slane %v440, 0
    %616 = vmatpush.msra.mxu0 0.0
    %617 = vmatpush.msra.mxu0 0.0
    %618 = vmatpush.msra.mxu0 0.0
    %619 = vmatpush.msra.mxu0 0.0
    %620 = vmatpush.msra.mxu0 0.0
    %621 = vmatpush.msra.mxu0 0.0
    %622 = vmatpush.msra.mxu0 0.0
    %623 = vmatpush.msra.mxu0 0.0
    %624 = vmatpush.msra.mxu0 0.0
    %625 = vmatpush.msra.mxu0 0.0
    %626 = vmatpush.msra.mxu0 0.0
    %627 = vmatpush.msra.mxu0 0.0
    %628 = vmatpush.msra.mxu0 %v430
    %629 = vmatpush.msra.mxu0 %v429
    %630 = vmatpush.msra.mxu0 %v428
    %631 = vmatpush.msra.mxu0 %v427
    %632 = vmatmul.f32.gmra.mxu0 %v547
    %v633 = vpop.f32.mrf.mxu0
    %v634 = vadd.f32 %v614, %v633
    %635 = vdwg.mxu0
    %636 = vmatpush.msra.mxu0 0.0
    %637 = vmatpush.msra.mxu0 0.0
    %638 = vmatpush.msra.mxu0 0.0
    %639 = vmatpush.msra.mxu0 0.0
    %640 = vmatpush.msra.mxu0 0.0
    %641 = vmatpush.msra.mxu0 0.0
    %642 = vmatpush.msra.mxu0 0.0
    %643 = vmatpush.msra.mxu0 0.0
    %644 = vmatpush.msra.mxu0 0.0
    %645 = vmatpush.msra.mxu0 0.0
    %646 = vmatpush.msra.mxu0 0.0
    %647 = vmatpush.msra.mxu0 0.0
    %648 = vmatpush.msra.mxu0 %v438
    %649 = vmatpush.msra.mxu0 %v437
    %650 = vmatpush.msra.mxu0 %v436
    %651 = vmatpush.msra.mxu0 %v435
    %652 = vmatmul.f32.gmra.mxu0 %v484
    %v653 = vpop.f32.mrf.mxu0
    %v654 = vadd.f32 0.0, %v653
    %655 = vdwg.mxu0
    %v656 = vadd.f32 %v634, %v654
    %v657 = vxor.u32 %v656, 2147483648
    %v658 = vmul.f32 %v657, 1.442695
    %v659 = vpow.pop %v658
    %v660 = vadd.f32 %v659, 1.0
    %v661 = vrcp.pop %v660
    %v662 = vmul.f32 %v660, %v661
    %v663 = vsub.f32 1.0, %v662
    %v664 = vmul.f32 %v661, %v663
    %v665 = vadd.f32 %v661, %v664
    %vm666 = vweird.f32 %v660
    %vm667 = vweird.f32 %v661
    %vm668 = vmor %vm666, %vm667
    %v669 = vsel %vm668, %v661, %v665
    %v670 = vand.u32 2147483647, %v660
    %vm671 = vcmp.eq.f32.partialorder %v670, 8.507059e+37
    %v672 = vand.u32 %v660, 2147483648
    %v673 = vor.u32 1.1754944e-38, %v672
    %v674 = vsel %vm671, %v673, %v669
    %v675 = vmul.f32 1.0, %v674
    %v676 = vtanh.pop %v656
    %v677 = vmul.f32 %v675, 0.0
    %679 = vrot.lane.b32.xlu0 %v676, 64
    %v680 = vpop.permute.xlu0 %679
    %v682 = vmul.f32 %v675, %v680
    %684 = vrot.lane.b32.xlu0 %v682, 32
    %v685 = vpop.permute.xlu0 %684
    %v687 = vadd.f32 %v677, %v685
    %v688 = vtanh.pop %v687
    %690 = vrot.lane.b32.xlu0 %v688, 64
    %v691 = vpop.permute.xlu0 %690
    %v693 = vmul.f32 %v675, %v691
    %v695 = vperm.slane %v445, 0
    %698 = vrot.lane.b32.xlu0 %v693, 32
    %v699 = vpop.permute.xlu0 %698
    %v700 = vsel %vm482, %v699, 0
    %702 = vmatpush.msra.mxu0 0.0
    %703 = vmatpush.msra.mxu0 0.0
    %704 = vmatpush.msra.mxu0 0.0
    %705 = vmatpush.msra.mxu0 0.0
    %706 = vmatpush.msra.mxu0 0.0
    %707 = vmatpush.msra.mxu0 0.0
    %708 = vmatpush.msra.mxu0 0.0
    %709 = vmatpush.msra.mxu0 0.0
    %710 = vmatpush.msra.mxu0 0.0
    %711 = vmatpush.msra.mxu0 0.0
    %712 = vmatpush.msra.mxu0 0.0
    %713 = vmatpush.msra.mxu0 0.0
    %v714 = vand.u32 %v444, 4294901760
    %715 = vmatpush.msra.mxu0 %v714
    %v716 = vand.u32 %v443, 4294901760
    %717 = vmatpush.msra.mxu0 %v716
    %v718 = vand.u32 %v442, 4294901760
    %719 = vmatpush.msra.mxu0 %v718
    %v720 = vand.u32 %v441, 4294901760
    %721 = vmatpush.msra.mxu0 %v720
    %v722 = vand.u32 %v700, 4294901760
    %v723 = vsub.f32 %v700, %v722
    %v724 = vand.u32 %v723, 4294901760
    %v725 = vsub.f32 %v723, %v724
    %v726 = vand.u32 %v725, 4294901760
    %727 = vmatmul.f32.gmra.mxu0 %v726
    %v728 = vpop.f32.mrf.mxu0
    %v729 = vadd.f32 %v695, %v728
    %730 = vdwg.mxu0
    %731 = vmatpush.msra.mxu0 0.0
    %732 = vmatpush.msra.mxu0 0.0
    %733 = vmatpush.msra.mxu0 0.0
    %734 = vmatpush.msra.mxu0 0.0
    %735 = vmatpush.msra.mxu0 0.0
    %736 = vmatpush.msra.mxu0 0.0
    %737 = vmatpush.msra.mxu0 0.0
    %738 = vmatpush.msra.mxu0 0.0
    %739 = vmatpush.msra.mxu0 0.0
    %740 = vmatpush.msra.mxu0 0.0
    %741 = vmatpush.msra.mxu0 0.0
    %742 = vmatpush.msra.mxu0 0.0
    %v743 = vand.u32 %v444, 4294901760
    %v744 = vsub.f32 %v444, %v743
    %v745 = vand.u32 %v744, 4294901760
    %v746 = vsub.f32 %v744, %v745
    %v747 = vand.u32 %v746, 4294901760
    %748 = vmatpush.msra.mxu0 %v747
    %v749 = vand.u32 %v443, 4294901760
    %v750 = vsub.f32 %v443, %v749
    %v751 = vand.u32 %v750, 4294901760
    %v752 = vsub.f32 %v750, %v751
    %v753 = vand.u32 %v752, 4294901760
    %754 = vmatpush.msra.mxu0 %v753
    %v755 = vand.u32 %v442, 4294901760
    %v756 = vsub.f32 %v442, %v755
    %v757 = vand.u32 %v756, 4294901760
    %v758 = vsub.f32 %v756, %v757
    %v759 = vand.u32 %v758, 4294901760
    %760 = vmatpush.msra.mxu0 %v759
    %v761 = vand.u32 %v441, 4294901760
    %v762 = vsub.f32 %v441, %v761
    %v763 = vand.u32 %v762, 4294901760
    %v764 = vsub.f32 %v762, %v763
    %v765 = vand.u32 %v764, 4294901760
    %766 = vmatpush.msra.mxu0 %v765
    %v767 = vand.u32 %v700, 4294901760
    %768 = vmatmul.f32.gmra.mxu0 %v767
    %v769 = vpop.f32.mrf.mxu0
    %v770 = vadd.f32 %v729, %v769
    %771 = vdwg.mxu0
    %772 = vmatpush.msra.mxu0 0.0
    %773 = vmatpush.msra.mxu0 0.0
    %774 = vmatpush.msra.mxu0 0.0
    %775 = vmatpush.msra.mxu0 0.0
    %776 = vmatpush.msra.mxu0 0.0
    %777 = vmatpush.msra.mxu0 0.0
    %778 = vmatpush.msra.mxu0 0.0
    %779 = vmatpush.msra.mxu0 0.0
    %780 = vmatpush.msra.mxu0 0.0
    %781 = vmatpush.msra.mxu0 0.0
    %782 = vmatpush.msra.mxu0 0.0
    %783 = vmatpush.msra.mxu0 0.0
    %v784 = vand.u32 %v444, 4294901760
    %v785 = vsub.f32 %v444, %v784
    %786 = vmatpush.msra.mxu0 %v785
    %v787 = vand.u32 %v443, 4294901760
    %v788 = vsub.f32 %v443, %v787
    %789 = vmatpush.msra.mxu0 %v788
    %v790 = vand.u32 %v442, 4294901760
    %v791 = vsub.f32 %v442, %v790
    %792 = vmatpush.msra.mxu0 %v791
    %v793 = vand.u32 %v441, 4294901760
    %v794 = vsub.f32 %v441, %v793
    %795 = vmatpush.msra.mxu0 %v794
    %v796 = vand.u32 %v700, 4294901760
    %v797 = vsub.f32 %v700, %v796
    %798 = vmatmul.f32.gmra.mxu0 %v797
    %v799 = vpop.f32.mrf.mxu0
    %v800 = vadd.f32 %v770, %v799
    %801 = vdwg.mxu0
    %802 = vmatpush.msra.mxu0 0.0
    %803 = vmatpush.msra.mxu0 0.0
    %804 = vmatpush.msra.mxu0 0.0
    %805 = vmatpush.msra.mxu0 0.0
    %806 = vmatpush.msra.mxu0 0.0
    %807 = vmatpush.msra.mxu0 0.0
    %808 = vmatpush.msra.mxu0 0.0
    %809 = vmatpush.msra.mxu0 0.0
    %810 = vmatpush.msra.mxu0 0.0
    %811 = vmatpush.msra.mxu0 0.0
    %812 = vmatpush.msra.mxu0 0.0
    %813 = vmatpush.msra.mxu0 0.0
    %v814 = vand.u32 %v444, 4294901760
    %815 = vmatpush.msra.mxu0 %v814
    %v816 = vand.u32 %v443, 4294901760
    %817 = vmatpush.msra.mxu0 %v816
    %v818 = vand.u32 %v442, 4294901760
    %819 = vmatpush.msra.mxu0 %v818
    %v820 = vand.u32 %v441, 4294901760
    %821 = vmatpush.msra.mxu0 %v820
    %v822 = vand.u32 %v700, 4294901760
    %v823 = vsub.f32 %v700, %v822
    %v824 = vand.u32 %v823, 4294901760
    %825 = vmatmul.f32.gmra.mxu0 %v824
    %v826 = vpop.f32.mrf.mxu0
    %v827 = vadd.f32 %v800, %v826
    %828 = vdwg.mxu0
    %829 = vmatpush.msra.mxu0 0.0
    %830 = vmatpush.msra.mxu0 0.0
    %831 = vmatpush.msra.mxu0 0.0
    %832 = vmatpush.msra.mxu0 0.0
    %833 = vmatpush.msra.mxu0 0.0
    %834 = vmatpush.msra.mxu0 0.0
    %835 = vmatpush.msra.mxu0 0.0
    %836 = vmatpush.msra.mxu0 0.0
    %837 = vmatpush.msra.mxu0 0.0
    %838 = vmatpush.msra.mxu0 0.0
    %839 = vmatpush.msra.mxu0 0.0
    %840 = vmatpush.msra.mxu0 0.0
    %v841 = vand.u32 %v444, 4294901760
    %v842 = vsub.f32 %v444, %v841
    %v843 = vand.u32 %v842, 4294901760
    %844 = vmatpush.msra.mxu0 %v843
    %v845 = vand.u32 %v443, 4294901760
    %v846 = vsub.f32 %v443, %v845
    %v847 = vand.u32 %v846, 4294901760
    %848 = vmatpush.msra.mxu0 %v847
    %v849 = vand.u32 %v442, 4294901760
    %v850 = vsub.f32 %v442, %v849
    %v851 = vand.u32 %v850, 4294901760
    %852 = vmatpush.msra.mxu0 %v851
    %v853 = vand.u32 %v441, 4294901760
    %v854 = vsub.f32 %v441, %v853
    %v855 = vand.u32 %v854, 4294901760
    %856 = vmatpush.msra.mxu0 %v855
    %v857 = vand.u32 %v700, 4294901760
    %858 = vmatmul.f32.gmra.mxu0 %v857
    %v859 = vpop.f32.mrf.mxu0
    %v860 = vadd.f32 %v827, %v859
    %861 = vdwg.mxu0
    %862 = vmatpush.msra.mxu0 0.0
    %863 = vmatpush.msra.mxu0 0.0
    %864 = vmatpush.msra.mxu0 0.0
    %865 = vmatpush.msra.mxu0 0.0
    %866 = vmatpush.msra.mxu0 0.0
    %867 = vmatpush.msra.mxu0 0.0
    %868 = vmatpush.msra.mxu0 0.0
    %869 = vmatpush.msra.mxu0 0.0
    %870 = vmatpush.msra.mxu0 0.0
    %871 = vmatpush.msra.mxu0 0.0
    %872 = vmatpush.msra.mxu0 0.0
    %873 = vmatpush.msra.mxu0 0.0
    %v874 = vand.u32 %v444, 4294901760
    %875 = vmatpush.msra.mxu0 %v874
    %v876 = vand.u32 %v443, 4294901760
    %877 = vmatpush.msra.mxu0 %v876
    %v878 = vand.u32 %v442, 4294901760
    %879 = vmatpush.msra.mxu0 %v878
    %v880 = vand.u32 %v441, 4294901760
    %881 = vmatpush.msra.mxu0 %v880
    %v882 = vand.u32 %v700, 4294901760
    %883 = vmatmul.f32.gmra.mxu0 %v882
    %v884 = vpop.f32.mrf.mxu0
    %v885 = vadd.f32 %v860, %v884
    %886 = vdwg.mxu0
    %v888 = vperm.slane %v448, 0
    %v891 = vsel %vm452, %v885, 0
    %893 = vmatpush.msra.mxu0 0.0
    %894 = vmatpush.msra.mxu0 0.0
    %895 = vmatpush.msra.mxu0 0.0
    %896 = vmatpush.msra.mxu0 0.0
    %897 = vmatpush.msra.mxu0 0.0
    %898 = vmatpush.msra.mxu0 0.0
    %899 = vmatpush.msra.mxu0 0.0
    %900 = vmatpush.msra.mxu0 0.0
    %901 = vmatpush.msra.mxu0 0.0
    %902 = vmatpush.msra.mxu0 0.0
    %903 = vmatpush.msra.mxu0 0.0
    %904 = vmatpush.msra.mxu0 0.0
    %905 = vmatpush.msra.mxu0 0.0
    %906 = vmatpush.msra.mxu0 0.0
    %v907 = vand.u32 %v447, 4294901760
    %908 = vmatpush.msra.mxu0 %v907
    %v909 = vand.u32 %v446, 4294901760
    %910 = vmatpush.msra.mxu0 %v909
    %v911 = vand.u32 %v891, 4294901760
    %v912 = vsub.f32 %v891, %v911
    %v913 = vand.u32 %v912, 4294901760
    %v914 = vsub.f32 %v912, %v913
    %v915 = vand.u32 %v914, 4294901760
    %916 = vmatmul.f32.gmra.mxu0 %v915
    %v917 = vpop.f32.mrf.mxu0
    %v918 = vadd.f32 %v888, %v917
    %919 = vdwg.mxu0
    %920 = vmatpush.msra.mxu0 0.0
    %921 = vmatpush.msra.mxu0 0.0
    %922 = vmatpush.msra.mxu0 0.0
    %923 = vmatpush.msra.mxu0 0.0
    %924 = vmatpush.msra.mxu0 0.0
    %925 = vmatpush.msra.mxu0 0.0
    %926 = vmatpush.msra.mxu0 0.0
    %927 = vmatpush.msra.mxu0 0.0
    %928 = vmatpush.msra.mxu0 0.0
    %929 = vmatpush.msra.mxu0 0.0
    %930 = vmatpush.msra.mxu0 0.0
    %931 = vmatpush.msra.mxu0 0.0
    %932 = vmatpush.msra.mxu0 0.0
    %933 = vmatpush.msra.mxu0 0.0
    %v934 = vand.u32 %v447, 4294901760
    %v935 = vsub.f32 %v447, %v934
    %v936 = vand.u32 %v935, 4294901760
    %v937 = vsub.f32 %v935, %v936
    %v938 = vand.u32 %v937, 4294901760
    %939 = vmatpush.msra.mxu0 %v938
    %v940 = vand.u32 %v446, 4294901760
    %v941 = vsub.f32 %v446, %v940
    %v942 = vand.u32 %v941, 4294901760
    %v943 = vsub.f32 %v941, %v942
    %v944 = vand.u32 %v943, 4294901760
    %945 = vmatpush.msra.mxu0 %v944
    %v946 = vand.u32 %v891, 4294901760
    %947 = vmatmul.f32.gmra.mxu0 %v946
    %v948 = vpop.f32.mrf.mxu0
    %v949 = vadd.f32 %v918, %v948
    %950 = vdwg.mxu0
    %951 = vmatpush.msra.mxu0 0.0
    %952 = vmatpush.msra.mxu0 0.0
    %953 = vmatpush.msra.mxu0 0.0
    %954 = vmatpush.msra.mxu0 0.0
    %955 = vmatpush.msra.mxu0 0.0
    %956 = vmatpush.msra.mxu0 0.0
    %957 = vmatpush.msra.mxu0 0.0
    %958 = vmatpush.msra.mxu0 0.0
    %959 = vmatpush.msra.mxu0 0.0
    %960 = vmatpush.msra.mxu0 0.0
    %961 = vmatpush.msra.mxu0 0.0
    %962 = vmatpush.msra.mxu0 0.0
    %963 = vmatpush.msra.mxu0 0.0
    %964 = vmatpush.msra.mxu0 0.0
    %v965 = vand.u32 %v447, 4294901760
    %v966 = vsub.f32 %v447, %v965
    %967 = vmatpush.msra.mxu0 %v966
    %v968 = vand.u32 %v446, 4294901760
    %v969 = vsub.f32 %v446, %v968
    %970 = vmatpush.msra.mxu0 %v969
    %v971 = vand.u32 %v891, 4294901760
    %v972 = vsub.f32 %v891, %v971
    %973 = vmatmul.f32.gmra.mxu0 %v972
    %v974 = vpop.f32.mrf.mxu0
    %v975 = vadd.f32 %v949, %v974
    %976 = vdwg.mxu0
    %977 = vmatpush.msra.mxu0 0.0
    %978 = vmatpush.msra.mxu0 0.0
    %979 = vmatpush.msra.mxu0 0.0
    %980 = vmatpush.msra.mxu0 0.0
    %981 = vmatpush.msra.mxu0 0.0
    %982 = vmatpush.msra.mxu0 0.0
    %983 = vmatpush.msra.mxu0 0.0
    %984 = vmatpush.msra.mxu0 0.0
    %985 = vmatpush.msra.mxu0 0.0
    %986 = vmatpush.msra.mxu0 0.0
    %987 = vmatpush.msra.mxu0 0.0
    %988 = vmatpush.msra.mxu0 0.0
    %989 = vmatpush.msra.mxu0 0.0
    %990 = vmatpush.msra.mxu0 0.0
    %v991 = vand.u32 %v447, 4294901760
    %992 = vmatpush.msra.mxu0 %v991
    %v993 = vand.u32 %v446, 4294901760
    %994 = vmatpush.msra.mxu0 %v993
    %v995 = vand.u32 %v891, 4294901760
    %v996 = vsub.f32 %v891, %v995
    %v997 = vand.u32 %v996, 4294901760
    %998 = vmatmul.f32.gmra.mxu0 %v997
    %v999 = vpop.f32.mrf.mxu0
    %v1000 = vadd.f32 %v975, %v999
    %1001 = vdwg.mxu0
    %1002 = vmatpush.msra.mxu0 0.0
    %1003 = vmatpush.msra.mxu0 0.0
    %1004 = vmatpush.msra.mxu0 0.0
    %1005 = vmatpush.msra.mxu0 0.0
    %1006 = vmatpush.msra.mxu0 0.0
    %1007 = vmatpush.msra.mxu0 0.0
    %1008 = vmatpush.msra.mxu0 0.0
    %1009 = vmatpush.msra.mxu0 0.0
    %1010 = vmatpush.msra.mxu0 0.0
    %1011 = vmatpush.msra.mxu0 0.0
    %1012 = vmatpush.msra.mxu0 0.0
    %1013 = vmatpush.msra.mxu0 0.0
    %1014 = vmatpush.msra.mxu0 0.0
    %1015 = vmatpush.msra.mxu0 0.0
    %v1016 = vand.u32 %v447, 4294901760
    %v1017 = vsub.f32 %v447, %v1016
    %v1018 = vand.u32 %v1017, 4294901760
    %1019 = vmatpush.msra.mxu0 %v1018
    %v1020 = vand.u32 %v446, 4294901760
    %v1021 = vsub.f32 %v446, %v1020
    %v1022 = vand.u32 %v1021, 4294901760
    %1023 = vmatpush.msra.mxu0 %v1022
    %v1024 = vand.u32 %v891, 4294901760
    %1025 = vmatmul.f32.gmra.mxu0 %v1024
    %v1026 = vpop.f32.mrf.mxu0
    %v1027 = vadd.f32 %v1000, %v1026
    %1028 = vdwg.mxu0
    %1029 = vmatpush.msra.mxu0 0.0
    %1030 = vmatpush.msra.mxu0 0.0
    %1031 = vmatpush.msra.mxu0 0.0
    %1032 = vmatpush.msra.mxu0 0.0
    %1033 = vmatpush.msra.mxu0 0.0
    %1034 = vmatpush.msra.mxu0 0.0
    %1035 = vmatpush.msra.mxu0 0.0
    %1036 = vmatpush.msra.mxu0 0.0
    %1037 = vmatpush.msra.mxu0 0.0
    %1038 = vmatpush.msra.mxu0 0.0
    %1039 = vmatpush.msra.mxu0 0.0
    %1040 = vmatpush.msra.mxu0 0.0
    %1041 = vmatpush.msra.mxu0 0.0
    %1042 = vmatpush.msra.mxu0 0.0
    %v1043 = vand.u32 %v447, 4294901760
    %1044 = vmatpush.msra.mxu0 %v1043
    %v1045 = vand.u32 %v446, 4294901760
    %1046 = vmatpush.msra.mxu0 %v1045
    %v1047 = vand.u32 %v891, 4294901760
    %1048 = vmatmul.f32.gmra.mxu0 %v1047
    %v1049 = vpop.f32.mrf.mxu0
    %v1050 = vadd.f32 %v1027, %v1049
    %1051 = vdwg.mxu0
    %v1052 = vsel %vm166, %v1050, -inf
    %1053 = vmax.xlane.f32.xlu0 %v1052
    %v1054 = vpop.xlane.xlu0 %1053
    %v1055 = vsub.f32 %v1050, %v1054
    %v1056 = vmul.f32 %v1055, 1.442695
    %v1057 = vpow.pop %v1056
    %v1058 = vsel %vm166, %v1057, 0.0
    %1059 = vadd.xlane.f32.xlu0 %v1058
    %v1060 = vpop.xlane.xlu0 %1059
    %v1061 = vlog2.pop %v1060
    %v1062 = vmul.f32 %v1061, 0.6931472
    %v1063 = vsub.f32 %v1055, %v1062
    %1064 = vst [vmem:[#allocation13] sm:$0x1] %v1063
    %1065 = vst [vmem:[#allocation13 + $0x7] sm:$0x2] %v1063
    %v1067 = vrot.slane %v612, 2
    %1068 = vrot.lane.b32.xlu0 %v1067, 32
    %v1069 = vpop.permute.xlu0 %1068
    %v1070 = vsel %vm482, %v1069, 0
    %1072 = vmatpush.msra.mxu0 0.0
    %1073 = vmatpush.msra.mxu0 0.0
    %1074 = vmatpush.msra.mxu0 0.0
    %1075 = vmatpush.msra.mxu0 0.0
    %1076 = vmatpush.msra.mxu0 0.0
    %1077 = vmatpush.msra.mxu0 0.0
    %1078 = vmatpush.msra.mxu0 0.0
    %1079 = vmatpush.msra.mxu0 0.0
    %1080 = vmatpush.msra.mxu0 0.0
    %1081 = vmatpush.msra.mxu0 0.0
    %1082 = vmatpush.msra.mxu0 0.0
    %1083 = vmatpush.msra.mxu0 0.0
    %1084 = vmatpush.msra.mxu0 %v434
    %1085 = vmatpush.msra.mxu0 %v433
    %1086 = vmatpush.msra.mxu0 %v432
    %1087 = vmatpush.msra.mxu0 %v431
    %1088 = vmatmul.f32.gmra.mxu0 %v1070
    %v1089 = vpop.f32.mrf.mxu0
    %v1090 = vadd.f32 0.0, %v1089
    %1091 = vdwg.mxu0
    %v1093 = vrot.slane %v1090, 4
    %v1095 = vadd.f32 %v477, %v1093
    %v1096 = vxor.u32 %v1095, 2147483648
    %v1097 = vmul.f32 %v1096, 1.442695
    %v1098 = vpow.pop %v1097
    %v1099 = vadd.f32 %v1098, 1.0
    %v1100 = vrcp.pop %v1099
    %v1101 = vmul.f32 %v1099, %v1100
    %v1102 = vsub.f32 1.0, %v1101
    %v1103 = vmul.f32 %v1100, %v1102
    %v1104 = vadd.f32 %v1100, %v1103
    %vm1105 = vweird.f32 %v1099
    %vm1106 = vweird.f32 %v1100
    %vm1107 = vmor %vm1105, %vm1106
    %v1108 = vsel %vm1107, %v1100, %v1104
    %v1109 = vand.u32 2147483647, %v1099
    %vm1110 = vcmp.eq.f32.partialorder %v1109, 8.507059e+37
    %v1111 = vand.u32 %v1099, 2147483648
    %v1112 = vor.u32 1.1754944e-38, %v1111
    %v1113 = vsel %vm1110, %v1112, %v1108
    %v1114 = vmul.f32 1.0, %v1113
    %v1115 = vtanh.pop %v1095
    %v1117 = vrot.slane %v606, 6
    %v1119 = vmul.f32 %v1114, %v1117
    %1121 = vrot.lane.b32.xlu0 %v1115, 64
    %v1122 = vpop.permute.xlu0 %1121
    %v1124 = vmul.f32 %v1114, %v1122
    %1126 = vrot.lane.b32.xlu0 %v1124, 32
    %v1127 = vpop.permute.xlu0 %1126
    %v1129 = vadd.f32 %v1119, %v1127
    %v1130 = vtanh.pop %v1129
    %1132 = vrot.lane.b32.xlu0 %v1130, 64
    %v1133 = vpop.permute.xlu0 %1132
    %v1135 = vmul.f32 %v1114, %v1133
    %1136 = vmatpush.msra.mxu0 0.0
    %1137 = vmatpush.msra.mxu0 0.0
    %1138 = vmatpush.msra.mxu0 0.0
    %1139 = vmatpush.msra.mxu0 0.0
    %1140 = vmatpush.msra.mxu0 0.0
    %1141 = vmatpush.msra.mxu0 0.0
    %1142 = vmatpush.msra.mxu0 0.0
    %1143 = vmatpush.msra.mxu0 0.0
    %1144 = vmatpush.msra.mxu0 0.0
    %1145 = vmatpush.msra.mxu0 0.0
    %1146 = vmatpush.msra.mxu0 0.0
    %1147 = vmatpush.msra.mxu0 0.0
    %1148 = vmatpush.msra.mxu0 %v430
    %1149 = vmatpush.msra.mxu0 %v429
    %1150 = vmatpush.msra.mxu0 %v428
    %1151 = vmatpush.msra.mxu0 %v427
    %1152 = vmatmul.f32.gmra.mxu0 %v1070
    %v1153 = vpop.f32.mrf.mxu0
    %v1154 = vadd.f32 %v614, %v1153
    %1155 = vdwg.mxu0
    %1156 = vmatpush.msra.mxu0 0.0
    %1157 = vmatpush.msra.mxu0 0.0
    %1158 = vmatpush.msra.mxu0 0.0
    %1159 = vmatpush.msra.mxu0 0.0
    %1160 = vmatpush.msra.mxu0 0.0
    %1161 = vmatpush.msra.mxu0 0.0
    %1162 = vmatpush.msra.mxu0 0.0
    %1163 = vmatpush.msra.mxu0 0.0
    %1164 = vmatpush.msra.mxu0 0.0
    %1165 = vmatpush.msra.mxu0 0.0
    %1166 = vmatpush.msra.mxu0 0.0
    %1167 = vmatpush.msra.mxu0 0.0
    %1168 = vmatpush.msra.mxu0 %v438
    %1169 = vmatpush.msra.mxu0 %v437
    %1170 = vmatpush.msra.mxu0 %v436
    %1171 = vmatpush.msra.mxu0 %v435
    %1172 = vmatmul.f32.gmra.mxu0 %v700
    %v1173 = vpop.f32.mrf.mxu0
    %v1174 = vadd.f32 0.0, %v1173
    %1175 = vdwg.mxu0
    %v1176 = vadd.f32 %v1154, %v1174
    %v1177 = vxor.u32 %v1176, 2147483648
    %v1178 = vmul.f32 %v1177, 1.442695
    %v1179 = vpow.pop %v1178
    %v1180 = vadd.f32 %v1179, 1.0
    %v1181 = vrcp.pop %v1180
    %v1182 = vmul.f32 %v1180, %v1181
    %v1183 = vsub.f32 1.0, %v1182
    %v1184 = vmul.f32 %v1181, %v1183
    %v1185 = vadd.f32 %v1181, %v1184
    %vm1186 = vweird.f32 %v1180
    %vm1187 = vweird.f32 %v1181
    %vm1188 = vmor %vm1186, %vm1187
    %v1189 = vsel %vm1188, %v1181, %v1185
    %v1190 = vand.u32 2147483647, %v1180
    %vm1191 = vcmp.eq.f32.partialorder %v1190, 8.507059e+37
    %v1192 = vand.u32 %v1180, 2147483648
    %v1193 = vor.u32 1.1754944e-38, %v1192
    %v1194 = vsel %vm1191, %v1193, %v1189
    %v1195 = vmul.f32 1.0, %v1194
    %v1196 = vtanh.pop %v1176
    %v1197 = vmul.f32 %v1195, %v687
    %1199 = vrot.lane.b32.xlu0 %v1196, 64
    %v1200 = vpop.permute.xlu0 %1199
    %v1202 = vmul.f32 %v1195, %v1200
    %1204 = vrot.lane.b32.xlu0 %v1202, 32
    %v1205 = vpop.permute.xlu0 %1204
    %v1207 = vadd.f32 %v1197, %v1205
    %v1208 = vtanh.pop %v1207
    %1210 = vrot.lane.b32.xlu0 %v1208, 64
    %v1211 = vpop.permute.xlu0 %1210
    %v1213 = vmul.f32 %v1195, %v1211
    %1215 = vrot.lane.b32.xlu0 %v1213, 32
    %v1216 = vpop.permute.xlu0 %1215
    %v1217 = vsel %vm482, %v1216, 0
    %1219 = vmatpush.msra.mxu0 0.0
    %1220 = vmatpush.msra.mxu0 0.0
    %1221 = vmatpush.msra.mxu0 0.0
    %1222 = vmatpush.msra.mxu0 0.0
    %1223 = vmatpush.msra.mxu0 0.0
    %1224 = vmatpush.msra.mxu0 0.0
    %1225 = vmatpush.msra.mxu0 0.0
    %1226 = vmatpush.msra.mxu0 0.0
    %1227 = vmatpush.msra.mxu0 0.0
    %1228 = vmatpush.msra.mxu0 0.0
    %1229 = vmatpush.msra.mxu0 0.0
    %1230 = vmatpush.msra.mxu0 0.0
    %v1231 = vand.u32 %v444, 4294901760
    %1232 = vmatpush.msra.mxu0 %v1231
    %v1233 = vand.u32 %v443, 4294901760
    %1234 = vmatpush.msra.mxu0 %v1233
    %v1235 = vand.u32 %v442, 4294901760
    %1236 = vmatpush.msra.mxu0 %v1235
    %v1237 = vand.u32 %v441, 4294901760
    %1238 = vmatpush.msra.mxu0 %v1237
    %v1239 = vand.u32 %v1217, 4294901760
    %v1240 = vsub.f32 %v1217, %v1239
    %v1241 = vand.u32 %v1240, 4294901760
    %v1242 = vsub.f32 %v1240, %v1241
    %v1243 = vand.u32 %v1242, 4294901760
    %1244 = vmatmul.f32.gmra.mxu0 %v1243
    %v1245 = vpop.f32.mrf.mxu0
    %v1246 = vadd.f32 %v695, %v1245
    %1247 = vdwg.mxu0
    %1248 = vmatpush.msra.mxu0 0.0
    %1249 = vmatpush.msra.mxu0 0.0
    %1250 = vmatpush.msra.mxu0 0.0
    %1251 = vmatpush.msra.mxu0 0.0
    %1252 = vmatpush.msra.mxu0 0.0
    %1253 = vmatpush.msra.mxu0 0.0
    %1254 = vmatpush.msra.mxu0 0.0
    %1255 = vmatpush.msra.mxu0 0.0
    %1256 = vmatpush.msra.mxu0 0.0
    %1257 = vmatpush.msra.mxu0 0.0
    %1258 = vmatpush.msra.mxu0 0.0
    %1259 = vmatpush.msra.mxu0 0.0
    %v1260 = vand.u32 %v444, 4294901760
    %v1261 = vsub.f32 %v444, %v1260
    %v1262 = vand.u32 %v1261, 4294901760
    %v1263 = vsub.f32 %v1261, %v1262
    %v1264 = vand.u32 %v1263, 4294901760
    %1265 = vmatpush.msra.mxu0 %v1264
    %v1266 = vand.u32 %v443, 4294901760
    %v1267 = vsub.f32 %v443, %v1266
    %v1268 = vand.u32 %v1267, 4294901760
    %v1269 = vsub.f32 %v1267, %v1268
    %v1270 = vand.u32 %v1269, 4294901760
    %1271 = vmatpush.msra.mxu0 %v1270
    %v1272 = vand.u32 %v442, 4294901760
    %v1273 = vsub.f32 %v442, %v1272
    %v1274 = vand.u32 %v1273, 4294901760
    %v1275 = vsub.f32 %v1273, %v1274
    %v1276 = vand.u32 %v1275, 4294901760
    %1277 = vmatpush.msra.mxu0 %v1276
    %v1278 = vand.u32 %v441, 4294901760
    %v1279 = vsub.f32 %v441, %v1278
    %v1280 = vand.u32 %v1279, 4294901760
    %v1281 = vsub.f32 %v1279, %v1280
    %v1282 = vand.u32 %v1281, 4294901760
    %1283 = vmatpush.msra.mxu0 %v1282
    %v1284 = vand.u32 %v1217, 4294901760
    %1285 = vmatmul.f32.gmra.mxu0 %v1284
    %v1286 = vpop.f32.mrf.mxu0
    %v1287 = vadd.f32 %v1246, %v1286
    %1288 = vdwg.mxu0
    %1289 = vmatpush.msra.mxu0 0.0
    %1290 = vmatpush.msra.mxu0 0.0
    %1291 = vmatpush.msra.mxu0 0.0
    %1292 = vmatpush.msra.mxu0 0.0
    %1293 = vmatpush.msra.mxu0 0.0
    %1294 = vmatpush.msra.mxu0 0.0
    %1295 = vmatpush.msra.mxu0 0.0
    %1296 = vmatpush.msra.mxu0 0.0
    %1297 = vmatpush.msra.mxu0 0.0
    %1298 = vmatpush.msra.mxu0 0.0
    %1299 = vmatpush.msra.mxu0 0.0
    %1300 = vmatpush.msra.mxu0 0.0
    %v1301 = vand.u32 %v444, 4294901760
    %v1302 = vsub.f32 %v444, %v1301
    %1303 = vmatpush.msra.mxu0 %v1302
    %v1304 = vand.u32 %v443, 4294901760
    %v1305 = vsub.f32 %v443, %v1304
    %1306 = vmatpush.msra.mxu0 %v1305
    %v1307 = vand.u32 %v442, 4294901760
    %v1308 = vsub.f32 %v442, %v1307
    %1309 = vmatpush.msra.mxu0 %v1308
    %v1310 = vand.u32 %v441, 4294901760
    %v1311 = vsub.f32 %v441, %v1310
    %1312 = vmatpush.msra.mxu0 %v1311
    %v1313 = vand.u32 %v1217, 4294901760
    %v1314 = vsub.f32 %v1217, %v1313
    %1315 = vmatmul.f32.gmra.mxu0 %v1314
    %v1316 = vpop.f32.mrf.mxu0
    %v1317 = vadd.f32 %v1287, %v1316
    %1318 = vdwg.mxu0
    %1319 = vmatpush.msra.mxu0 0.0
    %1320 = vmatpush.msra.mxu0 0.0
    %1321 = vmatpush.msra.mxu0 0.0
    %1322 = vmatpush.msra.mxu0 0.0
    %1323 = vmatpush.msra.mxu0 0.0
    %1324 = vmatpush.msra.mxu0 0.0
    %1325 = vmatpush.msra.mxu0 0.0
    %1326 = vmatpush.msra.mxu0 0.0
    %1327 = vmatpush.msra.mxu0 0.0
    %1328 = vmatpush.msra.mxu0 0.0
    %1329 = vmatpush.msra.mxu0 0.0
    %1330 = vmatpush.msra.mxu0 0.0
    %v1331 = vand.u32 %v444, 4294901760
    %1332 = vmatpush.msra.mxu0 %v1331
    %v1333 = vand.u32 %v443, 4294901760
    %1334 = vmatpush.msra.mxu0 %v1333
    %v1335 = vand.u32 %v442, 4294901760
    %1336 = vmatpush.msra.mxu0 %v1335
    %v1337 = vand.u32 %v441, 4294901760
    %1338 = vmatpush.msra.mxu0 %v1337
    %v1339 = vand.u32 %v1217, 4294901760
    %v1340 = vsub.f32 %v1217, %v1339
    %v1341 = vand.u32 %v1340, 4294901760
    %1342 = vmatmul.f32.gmra.mxu0 %v1341
    %v1343 = vpop.f32.mrf.mxu0
    %v1344 = vadd.f32 %v1317, %v1343
    %1345 = vdwg.mxu0
    %1346 = vmatpush.msra.mxu0 0.0
    %1347 = vmatpush.msra.mxu0 0.0
    %1348 = vmatpush.msra.mxu0 0.0
    %1349 = vmatpush.msra.mxu0 0.0
    %1350 = vmatpush.msra.mxu0 0.0
    %1351 = vmatpush.msra.mxu0 0.0
    %1352 = vmatpush.msra.mxu0 0.0
    %1353 = vmatpush.msra.mxu0 0.0
    %1354 = vmatpush.msra.mxu0 0.0
    %1355 = vmatpush.msra.mxu0 0.0
    %1356 = vmatpush.msra.mxu0 0.0
    %1357 = vmatpush.msra.mxu0 0.0
    %v1358 = vand.u32 %v444, 4294901760
    %v1359 = vsub.f32 %v444, %v1358
    %v1360 = vand.u32 %v1359, 4294901760
    %1361 = vmatpush.msra.mxu0 %v1360
    %v1362 = vand.u32 %v443, 4294901760
    %v1363 = vsub.f32 %v443, %v1362
    %v1364 = vand.u32 %v1363, 4294901760
    %1365 = vmatpush.msra.mxu0 %v1364
    %v1366 = vand.u32 %v442, 4294901760
    %v1367 = vsub.f32 %v442, %v1366
    %v1368 = vand.u32 %v1367, 4294901760
    %1369 = vmatpush.msra.mxu0 %v1368
    %v1370 = vand.u32 %v441, 4294901760
    %v1371 = vsub.f32 %v441, %v1370
    %v1372 = vand.u32 %v1371, 4294901760
    %1373 = vmatpush.msra.mxu0 %v1372
    %v1374 = vand.u32 %v1217, 4294901760
    %1375 = vmatmul.f32.gmra.mxu0 %v1374
    %v1376 = vpop.f32.mrf.mxu0
    %v1377 = vadd.f32 %v1344, %v1376
    %1378 = vdwg.mxu0
    %1379 = vmatpush.msra.mxu0 0.0
    %1380 = vmatpush.msra.mxu0 0.0
    %1381 = vmatpush.msra.mxu0 0.0
    %1382 = vmatpush.msra.mxu0 0.0
    %1383 = vmatpush.msra.mxu0 0.0
    %1384 = vmatpush.msra.mxu0 0.0
    %1385 = vmatpush.msra.mxu0 0.0
    %1386 = vmatpush.msra.mxu0 0.0
    %1387 = vmatpush.msra.mxu0 0.0
    %1388 = vmatpush.msra.mxu0 0.0
    %1389 = vmatpush.msra.mxu0 0.0
    %1390 = vmatpush.msra.mxu0 0.0
    %v1391 = vand.u32 %v444, 4294901760
    %1392 = vmatpush.msra.mxu0 %v1391
    %v1393 = vand.u32 %v443, 4294901760
    %1394 = vmatpush.msra.mxu0 %v1393
    %v1395 = vand.u32 %v442, 4294901760
    %1396 = vmatpush.msra.mxu0 %v1395
    %v1397 = vand.u32 %v441, 4294901760
    %1398 = vmatpush.msra.mxu0 %v1397
    %v1399 = vand.u32 %v1217, 4294901760
    %1400 = vmatmul.f32.gmra.mxu0 %v1399
    %v1401 = vpop.f32.mrf.mxu0
    %v1402 = vadd.f32 %v1377, %v1401
    %1403 = vdwg.mxu0
    %v1405 = vsel %vm452, %v1402, 0
    %1407 = vmatpush.msra.mxu0 0.0
    %1408 = vmatpush.msra.mxu0 0.0
    %1409 = vmatpush.msra.mxu0 0.0
    %1410 = vmatpush.msra.mxu0 0.0
    %1411 = vmatpush.msra.mxu0 0.0
    %1412 = vmatpush.msra.mxu0 0.0
    %1413 = vmatpush.msra.mxu0 0.0
    %1414 = vmatpush.msra.mxu0 0.0
    %1415 = vmatpush.msra.mxu0 0.0
    %1416 = vmatpush.msra.mxu0 0.0
    %1417 = vmatpush.msra.mxu0 0.0
    %1418 = vmatpush.msra.mxu0 0.0
    %1419 = vmatpush.msra.mxu0 0.0
    %1420 = vmatpush.msra.mxu0 0.0
    %v1421 = vand.u32 %v447, 4294901760
    %1422 = vmatpush.msra.mxu0 %v1421
    %v1423 = vand.u32 %v446, 4294901760
    %1424 = vmatpush.msra.mxu0 %v1423
    %v1425 = vand.u32 %v1405, 4294901760
    %v1426 = vsub.f32 %v1405, %v1425
    %v1427 = vand.u32 %v1426, 4294901760
    %v1428 = vsub.f32 %v1426, %v1427
    %v1429 = vand.u32 %v1428, 4294901760
    %1430 = vmatmul.f32.gmra.mxu0 %v1429
    %v1431 = vpop.f32.mrf.mxu0
    %v1432 = vadd.f32 %v888, %v1431
    %1433 = vdwg.mxu0
    %1434 = vmatpush.msra.mxu0 0.0
    %1435 = vmatpush.msra.mxu0 0.0
    %1436 = vmatpush.msra.mxu0 0.0
    %1437 = vmatpush.msra.mxu0 0.0
    %1438 = vmatpush.msra.mxu0 0.0
    %1439 = vmatpush.msra.mxu0 0.0
    %1440 = vmatpush.msra.mxu0 0.0
    %1441 = vmatpush.msra.mxu0 0.0
    %1442 = vmatpush.msra.mxu0 0.0
    %1443 = vmatpush.msra.mxu0 0.0
    %1444 = vmatpush.msra.mxu0 0.0
    %1445 = vmatpush.msra.mxu0 0.0
    %1446 = vmatpush.msra.mxu0 0.0
    %1447 = vmatpush.msra.mxu0 0.0
    %v1448 = vand.u32 %v447, 4294901760
    %v1449 = vsub.f32 %v447, %v1448
    %v1450 = vand.u32 %v1449, 4294901760
    %v1451 = vsub.f32 %v1449, %v1450
    %v1452 = vand.u32 %v1451, 4294901760
    %1453 = vmatpush.msra.mxu0 %v1452
    %v1454 = vand.u32 %v446, 4294901760
    %v1455 = vsub.f32 %v446, %v1454
    %v1456 = vand.u32 %v1455, 4294901760
    %v1457 = vsub.f32 %v1455, %v1456
    %v1458 = vand.u32 %v1457, 4294901760
    %1459 = vmatpush.msra.mxu0 %v1458
    %v1460 = vand.u32 %v1405, 4294901760
    %1461 = vmatmul.f32.gmra.mxu0 %v1460
    %v1462 = vpop.f32.mrf.mxu0
    %v1463 = vadd.f32 %v1432, %v1462
    %1464 = vdwg.mxu0
    %1465 = vmatpush.msra.mxu0 0.0
    %1466 = vmatpush.msra.mxu0 0.0
    %1467 = vmatpush.msra.mxu0 0.0
    %1468 = vmatpush.msra.mxu0 0.0
    %1469 = vmatpush.msra.mxu0 0.0
    %1470 = vmatpush.msra.mxu0 0.0
    %1471 = vmatpush.msra.mxu0 0.0
    %1472 = vmatpush.msra.mxu0 0.0
    %1473 = vmatpush.msra.mxu0 0.0
    %1474 = vmatpush.msra.mxu0 0.0
    %1475 = vmatpush.msra.mxu0 0.0
    %1476 = vmatpush.msra.mxu0 0.0
    %1477 = vmatpush.msra.mxu0 0.0
    %1478 = vmatpush.msra.mxu0 0.0
    %v1479 = vand.u32 %v447, 4294901760
    %v1480 = vsub.f32 %v447, %v1479
    %1481 = vmatpush.msra.mxu0 %v1480
    %v1482 = vand.u32 %v446, 4294901760
    %v1483 = vsub.f32 %v446, %v1482
    %1484 = vmatpush.msra.mxu0 %v1483
    %v1485 = vand.u32 %v1405, 4294901760
    %v1486 = vsub.f32 %v1405, %v1485
    %1487 = vmatmul.f32.gmra.mxu0 %v1486
    %v1488 = vpop.f32.mrf.mxu0
    %v1489 = vadd.f32 %v1463, %v1488
    %1490 = vdwg.mxu0
    %1491 = vmatpush.msra.mxu0 0.0
    %1492 = vmatpush.msra.mxu0 0.0
    %1493 = vmatpush.msra.mxu0 0.0
    %1494 = vmatpush.msra.mxu0 0.0
    %1495 = vmatpush.msra.mxu0 0.0
    %1496 = vmatpush.msra.mxu0 0.0
    %1497 = vmatpush.msra.mxu0 0.0
    %1498 = vmatpush.msra.mxu0 0.0
    %1499 = vmatpush.msra.mxu0 0.0
    %1500 = vmatpush.msra.mxu0 0.0
    %1501 = vmatpush.msra.mxu0 0.0
    %1502 = vmatpush.msra.mxu0 0.0
    %1503 = vmatpush.msra.mxu0 0.0
    %1504 = vmatpush.msra.mxu0 0.0
    %v1505 = vand.u32 %v447, 4294901760
    %1506 = vmatpush.msra.mxu0 %v1505
    %v1507 = vand.u32 %v446, 4294901760
    %1508 = vmatpush.msra.mxu0 %v1507
    %v1509 = vand.u32 %v1405, 4294901760
    %v1510 = vsub.f32 %v1405, %v1509
    %v1511 = vand.u32 %v1510, 4294901760
    %1512 = vmatmul.f32.gmra.mxu0 %v1511
    %v1513 = vpop.f32.mrf.mxu0
    %v1514 = vadd.f32 %v1489, %v1513
    %1515 = vdwg.mxu0
    %1516 = vmatpush.msra.mxu0 0.0
    %1517 = vmatpush.msra.mxu0 0.0
    %1518 = vmatpush.msra.mxu0 0.0
    %1519 = vmatpush.msra.mxu0 0.0
    %1520 = vmatpush.msra.mxu0 0.0
    %1521 = vmatpush.msra.mxu0 0.0
    %1522 = vmatpush.msra.mxu0 0.0
    %1523 = vmatpush.msra.mxu0 0.0
    %1524 = vmatpush.msra.mxu0 0.0
    %1525 = vmatpush.msra.mxu0 0.0
    %1526 = vmatpush.msra.mxu0 0.0
    %1527 = vmatpush.msra.mxu0 0.0
    %1528 = vmatpush.msra.mxu0 0.0
    %1529 = vmatpush.msra.mxu0 0.0
    %v1530 = vand.u32 %v447, 4294901760
    %v1531 = vsub.f32 %v447, %v1530
    %v1532 = vand.u32 %v1531, 4294901760
    %1533 = vmatpush.msra.mxu0 %v1532
    %v1534 = vand.u32 %v446, 4294901760
    %v1535 = vsub.f32 %v446, %v1534
    %v1536 = vand.u32 %v1535, 4294901760
    %1537 = vmatpush.msra.mxu0 %v1536
    %v1538 = vand.u32 %v1405, 4294901760
    %1539 = vmatmul.f32.gmra.mxu0 %v1538
    %v1540 = vpop.f32.mrf.mxu0
    %v1541 = vadd.f32 %v1514, %v1540
    %1542 = vdwg.mxu0
    %1543 = vmatpush.msra.mxu0 0.0
    %1544 = vmatpush.msra.mxu0 0.0
    %1545 = vmatpush.msra.mxu0 0.0
    %1546 = vmatpush.msra.mxu0 0.0
    %1547 = vmatpush.msra.mxu0 0.0
    %1548 = vmatpush.msra.mxu0 0.0
    %1549 = vmatpush.msra.mxu0 0.0
    %1550 = vmatpush.msra.mxu0 0.0
    %1551 = vmatpush.msra.mxu0 0.0
    %1552 = vmatpush.msra.mxu0 0.0
    %1553 = vmatpush.msra.mxu0 0.0
    %1554 = vmatpush.msra.mxu0 0.0
    %1555 = vmatpush.msra.mxu0 0.0
    %1556 = vmatpush.msra.mxu0 0.0
    %v1557 = vand.u32 %v447, 4294901760
    %1558 = vmatpush.msra.mxu0 %v1557
    %v1559 = vand.u32 %v446, 4294901760
    %1560 = vmatpush.msra.mxu0 %v1559
    %v1561 = vand.u32 %v1405, 4294901760
    %1562 = vmatmul.f32.gmra.mxu0 %v1561
    %v1563 = vpop.f32.mrf.mxu0
    %v1564 = vadd.f32 %v1541, %v1563
    %1565 = vdwg.mxu0
    %v1566 = vsel %vm166, %v1564, -inf
    %1567 = vmax.xlane.f32.xlu0 %v1566
    %v1568 = vpop.xlane.xlu0 %1567
    %v1569 = vsub.f32 %v1564, %v1568
    %v1570 = vmul.f32 %v1569, 1.442695
    %v1571 = vpow.pop %v1570
    %v1572 = vsel %vm166, %v1571, 0.0
    %1573 = vadd.xlane.f32.xlu0 %v1572
    %v1574 = vpop.xlane.xlu0 %1573
    %v1575 = vlog2.pop %v1574
    %v1576 = vmul.f32 %v1575, 0.6931472
    %v1577 = vsub.f32 %v1569, %v1576
    %1578 = vst [vmem:[#allocation13 + $0x1] sm:$0x1] %v1577
    %1579 = vst [vmem:[#allocation13 + $0x8] sm:$0x2] %v1577
    %v1581 = vrot.slane %v1135, 4
    %1582 = vrot.lane.b32.xlu0 %v1581, 32
    %v1583 = vpop.permute.xlu0 %1582
    %v1584 = vsel %vm482, %v1583, 0
    %1586 = vmatpush.msra.mxu0 0.0
    %1587 = vmatpush.msra.mxu0 0.0
    %1588 = vmatpush.msra.mxu0 0.0
    %1589 = vmatpush.msra.mxu0 0.0
    %1590 = vmatpush.msra.mxu0 0.0
    %1591 = vmatpush.msra.mxu0 0.0
    %1592 = vmatpush.msra.mxu0 0.0
    %1593 = vmatpush.msra.mxu0 0.0
    %1594 = vmatpush.msra.mxu0 0.0
    %1595 = vmatpush.msra.mxu0 0.0
    %1596 = vmatpush.msra.mxu0 0.0
    %1597 = vmatpush.msra.mxu0 0.0
    %1598 = vmatpush.msra.mxu0 %v434
    %1599 = vmatpush.msra.mxu0 %v433
    %1600 = vmatpush.msra.mxu0 %v432
    %1601 = vmatpush.msra.mxu0 %v431
    %1602 = vmatmul.f32.gmra.mxu0 %v1584
    %v1603 = vpop.f32.mrf.mxu0
    %v1604 = vadd.f32 0.0, %v1603
    %1605 = vdwg.mxu0
    %v1607 = vrot.slane %v1604, 2
    %v1609 = vadd.f32 %v477, %v1607
    %v1610 = vxor.u32 %v1609, 2147483648
    %v1611 = vmul.f32 %v1610, 1.442695
    %v1612 = vpow.pop %v1611
    %v1613 = vadd.f32 %v1612, 1.0
    %v1614 = vrcp.pop %v1613
    %v1615 = vmul.f32 %v1613, %v1614
    %v1616 = vsub.f32 1.0, %v1615
    %v1617 = vmul.f32 %v1614, %v1616
    %v1618 = vadd.f32 %v1614, %v1617
    %vm1619 = vweird.f32 %v1613
    %vm1620 = vweird.f32 %v1614
    %vm1621 = vmor %vm1619, %vm1620
    %v1622 = vsel %vm1621, %v1614, %v1618
    %v1623 = vand.u32 2147483647, %v1613
    %vm1624 = vcmp.eq.f32.partialorder %v1623, 8.507059e+37
    %v1625 = vand.u32 %v1613, 2147483648
    %v1626 = vor.u32 1.1754944e-38, %v1625
    %v1627 = vsel %vm1624, %v1626, %v1622
    %v1628 = vmul.f32 1.0, %v1627
    %v1629 = vtanh.pop %v1609
    %v1631 = vrot.slane %v1129, 6
    %v1633 = vmul.f32 %v1628, %v1631
    %1635 = vrot.lane.b32.xlu0 %v1629, 64
    %v1636 = vpop.permute.xlu0 %1635
    %v1638 = vmul.f32 %v1628, %v1636
    %1640 = vrot.lane.b32.xlu0 %v1638, 32
    %v1641 = vpop.permute.xlu0 %1640
    %v1643 = vadd.f32 %v1633, %v1641
    %v1644 = vtanh.pop %v1643
    %1646 = vrot.lane.b32.xlu0 %v1644, 64
    %v1647 = vpop.permute.xlu0 %1646
    %v1649 = vmul.f32 %v1628, %v1647
    %1650 = vmatpush.msra.mxu0 0.0
    %1651 = vmatpush.msra.mxu0 0.0
    %1652 = vmatpush.msra.mxu0 0.0
    %1653 = vmatpush.msra.mxu0 0.0
    %1654 = vmatpush.msra.mxu0 0.0
    %1655 = vmatpush.msra.mxu0 0.0
    %1656 = vmatpush.msra.mxu0 0.0
    %1657 = vmatpush.msra.mxu0 0.0
    %1658 = vmatpush.msra.mxu0 0.0
    %1659 = vmatpush.msra.mxu0 0.0
    %1660 = vmatpush.msra.mxu0 0.0
    %1661 = vmatpush.msra.mxu0 0.0
    %1662 = vmatpush.msra.mxu0 %v430
    %1663 = vmatpush.msra.mxu0 %v429
    %1664 = vmatpush.msra.mxu0 %v428
    %1665 = vmatpush.msra.mxu0 %v427
    %1666 = vmatmul.f32.gmra.mxu0 %v1584
    %v1667 = vpop.f32.mrf.mxu0
    %v1668 = vadd.f32 %v614, %v1667
    %1669 = vdwg.mxu0
    %1670 = vmatpush.msra.mxu0 0.0
    %1671 = vmatpush.msra.mxu0 0.0
    %1672 = vmatpush.msra.mxu0 0.0
    %1673 = vmatpush.msra.mxu0 0.0
    %1674 = vmatpush.msra.mxu0 0.0
    %1675 = vmatpush.msra.mxu0 0.0
    %1676 = vmatpush.msra.mxu0 0.0
    %1677 = vmatpush.msra.mxu0 0.0
    %1678 = vmatpush.msra.mxu0 0.0
    %1679 = vmatpush.msra.mxu0 0.0
    %1680 = vmatpush.msra.mxu0 0.0
    %1681 = vmatpush.msra.mxu0 0.0
    %1682 = vmatpush.msra.mxu0 %v438
    %1683 = vmatpush.msra.mxu0 %v437
    %1684 = vmatpush.msra.mxu0 %v436
    %1685 = vmatpush.msra.mxu0 %v435
    %1686 = vmatmul.f32.gmra.mxu0 %v1217
    %v1687 = vpop.f32.mrf.mxu0
    %v1688 = vadd.f32 0.0, %v1687
    %1689 = vdwg.mxu0
    %v1690 = vadd.f32 %v1668, %v1688
    %v1691 = vxor.u32 %v1690, 2147483648
    %v1692 = vmul.f32 %v1691, 1.442695
    %v1693 = vpow.pop %v1692
    %v1694 = vadd.f32 %v1693, 1.0
    %v1695 = vrcp.pop %v1694
    %v1696 = vmul.f32 %v1694, %v1695
    %v1697 = vsub.f32 1.0, %v1696
    %v1698 = vmul.f32 %v1695, %v1697
    %v1699 = vadd.f32 %v1695, %v1698
    %vm1700 = vweird.f32 %v1694
    %vm1701 = vweird.f32 %v1695
    %vm1702 = vmor %vm1700, %vm1701
    %v1703 = vsel %vm1702, %v1695, %v1699
    %v1704 = vand.u32 2147483647, %v1694
    %vm1705 = vcmp.eq.f32.partialorder %v1704, 8.507059e+37
    %v1706 = vand.u32 %v1694, 2147483648
    %v1707 = vor.u32 1.1754944e-38, %v1706
    %v1708 = vsel %vm1705, %v1707, %v1703
    %v1709 = vmul.f32 1.0, %v1708
    %v1710 = vtanh.pop %v1690
    %v1711 = vmul.f32 %v1709, %v1207
    %1713 = vrot.lane.b32.xlu0 %v1710, 64
    %v1714 = vpop.permute.xlu0 %1713
    %v1716 = vmul.f32 %v1709, %v1714
    %1718 = vrot.lane.b32.xlu0 %v1716, 32
    %v1719 = vpop.permute.xlu0 %1718
    %v1721 = vadd.f32 %v1711, %v1719
    %v1722 = vtanh.pop %v1721
    %1724 = vrot.lane.b32.xlu0 %v1722, 64
    %v1725 = vpop.permute.xlu0 %1724
    %v1727 = vmul.f32 %v1709, %v1725
    %1729 = vrot.lane.b32.xlu0 %v1727, 32
    %v1730 = vpop.permute.xlu0 %1729
    %v1731 = vsel %vm482, %v1730, 0
    %1733 = vmatpush.msra.mxu0 0.0
    %1734 = vmatpush.msra.mxu0 0.0
    %1735 = vmatpush.msra.mxu0 0.0
    %1736 = vmatpush.msra.mxu0 0.0
    %1737 = vmatpush.msra.mxu0 0.0
    %1738 = vmatpush.msra.mxu0 0.0
    %1739 = vmatpush.msra.mxu0 0.0
    %1740 = vmatpush.msra.mxu0 0.0
    %1741 = vmatpush.msra.mxu0 0.0
    %1742 = vmatpush.msra.mxu0 0.0
    %1743 = vmatpush.msra.mxu0 0.0
    %1744 = vmatpush.msra.mxu0 0.0
    %v1745 = vand.u32 %v444, 4294901760
    %1746 = vmatpush.msra.mxu0 %v1745
    %v1747 = vand.u32 %v443, 4294901760
    %1748 = vmatpush.msra.mxu0 %v1747
    %v1749 = vand.u32 %v442, 4294901760
    %1750 = vmatpush.msra.mxu0 %v1749
    %v1751 = vand.u32 %v441, 4294901760
    %1752 = vmatpush.msra.mxu0 %v1751
    %v1753 = vand.u32 %v1731, 4294901760
    %v1754 = vsub.f32 %v1731, %v1753
    %v1755 = vand.u32 %v1754, 4294901760
    %v1756 = vsub.f32 %v1754, %v1755
    %v1757 = vand.u32 %v1756, 4294901760
    %1758 = vmatmul.f32.gmra.mxu0 %v1757
    %v1759 = vpop.f32.mrf.mxu0
    %v1760 = vadd.f32 %v695, %v1759
    %1761 = vdwg.mxu0
    %1762 = vmatpush.msra.mxu0 0.0
    %1763 = vmatpush.msra.mxu0 0.0
    %1764 = vmatpush.msra.mxu0 0.0
    %1765 = vmatpush.msra.mxu0 0.0
    %1766 = vmatpush.msra.mxu0 0.0
    %1767 = vmatpush.msra.mxu0 0.0
    %1768 = vmatpush.msra.mxu0 0.0
    %1769 = vmatpush.msra.mxu0 0.0
    %1770 = vmatpush.msra.mxu0 0.0
    %1771 = vmatpush.msra.mxu0 0.0
    %1772 = vmatpush.msra.mxu0 0.0
    %1773 = vmatpush.msra.mxu0 0.0
    %v1774 = vand.u32 %v444, 4294901760
    %v1775 = vsub.f32 %v444, %v1774
    %v1776 = vand.u32 %v1775, 4294901760
    %v1777 = vsub.f32 %v1775, %v1776
    %v1778 = vand.u32 %v1777, 4294901760
    %1779 = vmatpush.msra.mxu0 %v1778
    %v1780 = vand.u32 %v443, 4294901760
    %v1781 = vsub.f32 %v443, %v1780
    %v1782 = vand.u32 %v1781, 4294901760
    %v1783 = vsub.f32 %v1781, %v1782
    %v1784 = vand.u32 %v1783, 4294901760
    %1785 = vmatpush.msra.mxu0 %v1784
    %v1786 = vand.u32 %v442, 4294901760
    %v1787 = vsub.f32 %v442, %v1786
    %v1788 = vand.u32 %v1787, 4294901760
    %v1789 = vsub.f32 %v1787, %v1788
    %v1790 = vand.u32 %v1789, 4294901760
    %1791 = vmatpush.msra.mxu0 %v1790
    %v1792 = vand.u32 %v441, 4294901760
    %v1793 = vsub.f32 %v441, %v1792
    %v1794 = vand.u32 %v1793, 4294901760
    %v1795 = vsub.f32 %v1793, %v1794
    %v1796 = vand.u32 %v1795, 4294901760
    %1797 = vmatpush.msra.mxu0 %v1796
    %v1798 = vand.u32 %v1731, 4294901760
    %1799 = vmatmul.f32.gmra.mxu0 %v1798
    %v1800 = vpop.f32.mrf.mxu0
    %v1801 = vadd.f32 %v1760, %v1800
    %1802 = vdwg.mxu0
    %1803 = vmatpush.msra.mxu0 0.0
    %1804 = vmatpush.msra.mxu0 0.0
    %1805 = vmatpush.msra.mxu0 0.0
    %1806 = vmatpush.msra.mxu0 0.0
    %1807 = vmatpush.msra.mxu0 0.0
    %1808 = vmatpush.msra.mxu0 0.0
    %1809 = vmatpush.msra.mxu0 0.0
    %1810 = vmatpush.msra.mxu0 0.0
    %1811 = vmatpush.msra.mxu0 0.0
    %1812 = vmatpush.msra.mxu0 0.0
    %1813 = vmatpush.msra.mxu0 0.0
    %1814 = vmatpush.msra.mxu0 0.0
    %v1815 = vand.u32 %v444, 4294901760
    %v1816 = vsub.f32 %v444, %v1815
    %1817 = vmatpush.msra.mxu0 %v1816
    %v1818 = vand.u32 %v443, 4294901760
    %v1819 = vsub.f32 %v443, %v1818
    %1820 = vmatpush.msra.mxu0 %v1819
    %v1821 = vand.u32 %v442, 4294901760
    %v1822 = vsub.f32 %v442, %v1821
    %1823 = vmatpush.msra.mxu0 %v1822
    %v1824 = vand.u32 %v441, 4294901760
    %v1825 = vsub.f32 %v441, %v1824
    %1826 = vmatpush.msra.mxu0 %v1825
    %v1827 = vand.u32 %v1731, 4294901760
    %v1828 = vsub.f32 %v1731, %v1827
    %1829 = vmatmul.f32.gmra.mxu0 %v1828
    %v1830 = vpop.f32.mrf.mxu0
    %v1831 = vadd.f32 %v1801, %v1830
    %1832 = vdwg.mxu0
    %1833 = vmatpush.msra.mxu0 0.0
    %1834 = vmatpush.msra.mxu0 0.0
    %1835 = vmatpush.msra.mxu0 0.0
    %1836 = vmatpush.msra.mxu0 0.0
    %1837 = vmatpush.msra.mxu0 0.0
    %1838 = vmatpush.msra.mxu0 0.0
    %1839 = vmatpush.msra.mxu0 0.0
    %1840 = vmatpush.msra.mxu0 0.0
    %1841 = vmatpush.msra.mxu0 0.0
    %1842 = vmatpush.msra.mxu0 0.0
    %1843 = vmatpush.msra.mxu0 0.0
    %1844 = vmatpush.msra.mxu0 0.0
    %v1845 = vand.u32 %v444, 4294901760
    %1846 = vmatpush.msra.mxu0 %v1845
    %v1847 = vand.u32 %v443, 4294901760
    %1848 = vmatpush.msra.mxu0 %v1847
    %v1849 = vand.u32 %v442, 4294901760
    %1850 = vmatpush.msra.mxu0 %v1849
    %v1851 = vand.u32 %v441, 4294901760
    %1852 = vmatpush.msra.mxu0 %v1851
    %v1853 = vand.u32 %v1731, 4294901760
    %v1854 = vsub.f32 %v1731, %v1853
    %v1855 = vand.u32 %v1854, 4294901760
    %1856 = vmatmul.f32.gmra.mxu0 %v1855
    %v1857 = vpop.f32.mrf.mxu0
    %v1858 = vadd.f32 %v1831, %v1857
    %1859 = vdwg.mxu0
    %1860 = vmatpush.msra.mxu0 0.0
    %1861 = vmatpush.msra.mxu0 0.0
    %1862 = vmatpush.msra.mxu0 0.0
    %1863 = vmatpush.msra.mxu0 0.0
    %1864 = vmatpush.msra.mxu0 0.0
    %1865 = vmatpush.msra.mxu0 0.0
    %1866 = vmatpush.msra.mxu0 0.0
    %1867 = vmatpush.msra.mxu0 0.0
    %1868 = vmatpush.msra.mxu0 0.0
    %1869 = vmatpush.msra.mxu0 0.0
    %1870 = vmatpush.msra.mxu0 0.0
    %1871 = vmatpush.msra.mxu0 0.0
    %v1872 = vand.u32 %v444, 4294901760
    %v1873 = vsub.f32 %v444, %v1872
    %v1874 = vand.u32 %v1873, 4294901760
    %1875 = vmatpush.msra.mxu0 %v1874
    %v1876 = vand.u32 %v443, 4294901760
    %v1877 = vsub.f32 %v443, %v1876
    %v1878 = vand.u32 %v1877, 4294901760
    %1879 = vmatpush.msra.mxu0 %v1878
    %v1880 = vand.u32 %v442, 4294901760
    %v1881 = vsub.f32 %v442, %v1880
    %v1882 = vand.u32 %v1881, 4294901760
    %1883 = vmatpush.msra.mxu0 %v1882
    %v1884 = vand.u32 %v441, 4294901760
    %v1885 = vsub.f32 %v441, %v1884
    %v1886 = vand.u32 %v1885, 4294901760
    %1887 = vmatpush.msra.mxu0 %v1886
    %v1888 = vand.u32 %v1731, 4294901760
    %1889 = vmatmul.f32.gmra.mxu0 %v1888
    %v1890 = vpop.f32.mrf.mxu0
    %v1891 = vadd.f32 %v1858, %v1890
    %1892 = vdwg.mxu0
    %1893 = vmatpush.msra.mxu0 0.0
    %1894 = vmatpush.msra.mxu0 0.0
    %1895 = vmatpush.msra.mxu0 0.0
    %1896 = vmatpush.msra.mxu0 0.0
    %1897 = vmatpush.msra.mxu0 0.0
    %1898 = vmatpush.msra.mxu0 0.0
    %1899 = vmatpush.msra.mxu0 0.0
    %1900 = vmatpush.msra.mxu0 0.0
    %1901 = vmatpush.msra.mxu0 0.0
    %1902 = vmatpush.msra.mxu0 0.0
    %1903 = vmatpush.msra.mxu0 0.0
    %1904 = vmatpush.msra.mxu0 0.0
    %v1905 = vand.u32 %v444, 4294901760
    %1906 = vmatpush.msra.mxu0 %v1905
    %v1907 = vand.u32 %v443, 4294901760
    %1908 = vmatpush.msra.mxu0 %v1907
    %v1909 = vand.u32 %v442, 4294901760
    %1910 = vmatpush.msra.mxu0 %v1909
    %v1911 = vand.u32 %v441, 4294901760
    %1912 = vmatpush.msra.mxu0 %v1911
    %v1913 = vand.u32 %v1731, 4294901760
    %1914 = vmatmul.f32.gmra.mxu0 %v1913
    %v1915 = vpop.f32.mrf.mxu0
    %v1916 = vadd.f32 %v1891, %v1915
    %1917 = vdwg.mxu0
    %v1919 = vsel %vm452, %v1916, 0
    %1921 = vmatpush.msra.mxu0 0.0
    %1922 = vmatpush.msra.mxu0 0.0
    %1923 = vmatpush.msra.mxu0 0.0
    %1924 = vmatpush.msra.mxu0 0.0
    %1925 = vmatpush.msra.mxu0 0.0
    %1926 = vmatpush.msra.mxu0 0.0
    %1927 = vmatpush.msra.mxu0 0.0
    %1928 = vmatpush.msra.mxu0 0.0
    %1929 = vmatpush.msra.mxu0 0.0
    %1930 = vmatpush.msra.mxu0 0.0
    %1931 = vmatpush.msra.mxu0 0.0
    %1932 = vmatpush.msra.mxu0 0.0
    %1933 = vmatpush.msra.mxu0 0.0
    %1934 = vmatpush.msra.mxu0 0.0
    %v1935 = vand.u32 %v447, 4294901760
    %1936 = vmatpush.msra.mxu0 %v1935
    %v1937 = vand.u32 %v446, 4294901760
    %1938 = vmatpush.msra.mxu0 %v1937
    %v1939 = vand.u32 %v1919, 4294901760
    %v1940 = vsub.f32 %v1919, %v1939
    %v1941 = vand.u32 %v1940, 4294901760
    %v1942 = vsub.f32 %v1940, %v1941
    %v1943 = vand.u32 %v1942, 4294901760
    %1944 = vmatmul.f32.gmra.mxu0 %v1943
    %v1945 = vpop.f32.mrf.mxu0
    %v1946 = vadd.f32 %v888, %v1945
    %1947 = vdwg.mxu0
    %1948 = vmatpush.msra.mxu0 0.0
    %1949 = vmatpush.msra.mxu0 0.0
    %1950 = vmatpush.msra.mxu0 0.0
    %1951 = vmatpush.msra.mxu0 0.0
    %1952 = vmatpush.msra.mxu0 0.0
    %1953 = vmatpush.msra.mxu0 0.0
    %1954 = vmatpush.msra.mxu0 0.0
    %1955 = vmatpush.msra.mxu0 0.0
    %1956 = vmatpush.msra.mxu0 0.0
    %1957 = vmatpush.msra.mxu0 0.0
    %1958 = vmatpush.msra.mxu0 0.0
    %1959 = vmatpush.msra.mxu0 0.0
    %1960 = vmatpush.msra.mxu0 0.0
    %1961 = vmatpush.msra.mxu0 0.0
    %v1962 = vand.u32 %v447, 4294901760
    %v1963 = vsub.f32 %v447, %v1962
    %v1964 = vand.u32 %v1963, 4294901760
    %v1965 = vsub.f32 %v1963, %v1964
    %v1966 = vand.u32 %v1965, 4294901760
    %1967 = vmatpush.msra.mxu0 %v1966
    %v1968 = vand.u32 %v446, 4294901760
    %v1969 = vsub.f32 %v446, %v1968
    %v1970 = vand.u32 %v1969, 4294901760
    %v1971 = vsub.f32 %v1969, %v1970
    %v1972 = vand.u32 %v1971, 4294901760
    %1973 = vmatpush.msra.mxu0 %v1972
    %v1974 = vand.u32 %v1919, 4294901760
    %1975 = vmatmul.f32.gmra.mxu0 %v1974
    %v1976 = vpop.f32.mrf.mxu0
    %v1977 = vadd.f32 %v1946, %v1976
    %1978 = vdwg.mxu0
    %1979 = vmatpush.msra.mxu0 0.0
    %1980 = vmatpush.msra.mxu0 0.0
    %1981 = vmatpush.msra.mxu0 0.0
    %1982 = vmatpush.msra.mxu0 0.0
    %1983 = vmatpush.msra.mxu0 0.0
    %1984 = vmatpush.msra.mxu0 0.0
    %1985 = vmatpush.msra.mxu0 0.0
    %1986 = vmatpush.msra.mxu0 0.0
    %1987 = vmatpush.msra.mxu0 0.0
    %1988 = vmatpush.msra.mxu0 0.0
    %1989 = vmatpush.msra.mxu0 0.0
    %1990 = vmatpush.msra.mxu0 0.0
    %1991 = vmatpush.msra.mxu0 0.0
    %1992 = vmatpush.msra.mxu0 0.0
    %v1993 = vand.u32 %v447, 4294901760
    %v1994 = vsub.f32 %v447, %v1993
    %1995 = vmatpush.msra.mxu0 %v1994
    %v1996 = vand.u32 %v446, 4294901760
    %v1997 = vsub.f32 %v446, %v1996
    %1998 = vmatpush.msra.mxu0 %v1997
    %v1999 = vand.u32 %v1919, 4294901760
    %v2000 = vsub.f32 %v1919, %v1999
    %2001 = vmatmul.f32.gmra.mxu0 %v2000
    %v2002 = vpop.f32.mrf.mxu0
    %v2003 = vadd.f32 %v1977, %v2002
    %2004 = vdwg.mxu0
    %2005 = vmatpush.msra.mxu0 0.0
    %2006 = vmatpush.msra.mxu0 0.0
    %2007 = vmatpush.msra.mxu0 0.0
    %2008 = vmatpush.msra.mxu0 0.0
    %2009 = vmatpush.msra.mxu0 0.0
    %2010 = vmatpush.msra.mxu0 0.0
    %2011 = vmatpush.msra.mxu0 0.0
    %2012 = vmatpush.msra.mxu0 0.0
    %2013 = vmatpush.msra.mxu0 0.0
    %2014 = vmatpush.msra.mxu0 0.0
    %2015 = vmatpush.msra.mxu0 0.0
    %2016 = vmatpush.msra.mxu0 0.0
    %2017 = vmatpush.msra.mxu0 0.0
    %2018 = vmatpush.msra.mxu0 0.0
    %v2019 = vand.u32 %v447, 4294901760
    %2020 = vmatpush.msra.mxu0 %v2019
    %v2021 = vand.u32 %v446, 4294901760
    %2022 = vmatpush.msra.mxu0 %v2021
    %v2023 = vand.u32 %v1919, 4294901760
    %v2024 = vsub.f32 %v1919, %v2023
    %v2025 = vand.u32 %v2024, 4294901760
    %2026 = vmatmul.f32.gmra.mxu0 %v2025
    %v2027 = vpop.f32.mrf.mxu0
    %v2028 = vadd.f32 %v2003, %v2027
    %2029 = vdwg.mxu0
    %2030 = vmatpush.msra.mxu0 0.0
    %2031 = vmatpush.msra.mxu0 0.0
    %2032 = vmatpush.msra.mxu0 0.0
    %2033 = vmatpush.msra.mxu0 0.0
    %2034 = vmatpush.msra.mxu0 0.0
    %2035 = vmatpush.msra.mxu0 0.0
    %2036 = vmatpush.msra.mxu0 0.0
    %2037 = vmatpush.msra.mxu0 0.0
    %2038 = vmatpush.msra.mxu0 0.0
    %2039 = vmatpush.msra.mxu0 0.0
    %2040 = vmatpush.msra.mxu0 0.0
    %2041 = vmatpush.msra.mxu0 0.0
    %2042 = vmatpush.msra.mxu0 0.0
    %2043 = vmatpush.msra.mxu0 0.0
    %v2044 = vand.u32 %v447, 4294901760
    %v2045 = vsub.f32 %v447, %v2044
    %v2046 = vand.u32 %v2045, 4294901760
    %2047 = vmatpush.msra.mxu0 %v2046
    %v2048 = vand.u32 %v446, 4294901760
    %v2049 = vsub.f32 %v446, %v2048
    %v2050 = vand.u32 %v2049, 4294901760
    %2051 = vmatpush.msra.mxu0 %v2050
    %v2052 = vand.u32 %v1919, 4294901760
    %2053 = vmatmul.f32.gmra.mxu0 %v2052
    %v2054 = vpop.f32.mrf.mxu0
    %v2055 = vadd.f32 %v2028, %v2054
    %2056 = vdwg.mxu0
    %2057 = vmatpush.msra.mxu0 0.0
    %2058 = vmatpush.msra.mxu0 0.0
    %2059 = vmatpush.msra.mxu0 0.0
    %2060 = vmatpush.msra.mxu0 0.0
    %2061 = vmatpush.msra.mxu0 0.0
    %2062 = vmatpush.msra.mxu0 0.0
    %2063 = vmatpush.msra.mxu0 0.0
    %2064 = vmatpush.msra.mxu0 0.0
    %2065 = vmatpush.msra.mxu0 0.0
    %2066 = vmatpush.msra.mxu0 0.0
    %2067 = vmatpush.msra.mxu0 0.0
    %2068 = vmatpush.msra.mxu0 0.0
    %2069 = vmatpush.msra.mxu0 0.0
    %2070 = vmatpush.msra.mxu0 0.0
    %v2071 = vand.u32 %v447, 4294901760
    %2072 = vmatpush.msra.mxu0 %v2071
    %v2073 = vand.u32 %v446, 4294901760
    %2074 = vmatpush.msra.mxu0 %v2073
    %v2075 = vand.u32 %v1919, 4294901760
    %2076 = vmatmul.f32.gmra.mxu0 %v2075
    %v2077 = vpop.f32.mrf.mxu0
    %v2078 = vadd.f32 %v2055, %v2077
    %2079 = vdwg.mxu0
    %v2080 = vsel %vm166, %v2078, -inf
    %2081 = vmax.xlane.f32.xlu0 %v2080
    %v2082 = vpop.xlane.xlu0 %2081
    %v2083 = vsub.f32 %v2078, %v2082
    %v2084 = vmul.f32 %v2083, 1.442695
    %v2085 = vpow.pop %v2084
    %v2086 = vsel %vm166, %v2085, 0.0
    %2087 = vadd.xlane.f32.xlu0 %v2086
    %v2088 = vpop.xlane.xlu0 %2087
    %v2089 = vlog2.pop %v2088
    %v2090 = vmul.f32 %v2089, 0.6931472
    %v2091 = vsub.f32 %v2083, %v2090
    %2092 = vst [vmem:[#allocation13 + $0x2] sm:$0x1] %v2091
    %2093 = vst [vmem:[#allocation13 + $0x9] sm:$0x2] %v2091
    %v2095 = vrot.slane %v1649, 6
    %2096 = vrot.lane.b32.xlu0 %v2095, 32
    %v2097 = vpop.permute.xlu0 %2096
    %v2098 = vsel %vm482, %v2097, 0
    %2100 = vmatpush.msra.mxu0 0.0
    %2101 = vmatpush.msra.mxu0 0.0
    %2102 = vmatpush.msra.mxu0 0.0
    %2103 = vmatpush.msra.mxu0 0.0
    %2104 = vmatpush.msra.mxu0 0.0
    %2105 = vmatpush.msra.mxu0 0.0
    %2106 = vmatpush.msra.mxu0 0.0
    %2107 = vmatpush.msra.mxu0 0.0
    %2108 = vmatpush.msra.mxu0 0.0
    %2109 = vmatpush.msra.mxu0 0.0
    %2110 = vmatpush.msra.mxu0 0.0
    %2111 = vmatpush.msra.mxu0 0.0
    %2112 = vmatpush.msra.mxu0 %v434
    %2113 = vmatpush.msra.mxu0 %v433
    %2114 = vmatpush.msra.mxu0 %v432
    %2115 = vmatpush.msra.mxu0 %v431
    %2116 = vmatmul.f32.gmra.mxu0 %v2098
    %v2117 = vpop.f32.mrf.mxu0
    %v2118 = vadd.f32 0.0, %v2117
    %2119 = vdwg.mxu0
    %v2120 = vadd.f32 %v480, %v2118
    %v2121 = vxor.u32 %v2120, 2147483648
    %v2122 = vmul.f32 %v2121, 1.442695
    %v2123 = vpow.pop %v2122
    %v2124 = vadd.f32 %v2123, 1.0
    %v2125 = vrcp.pop %v2124
    %v2126 = vmul.f32 %v2124, %v2125
    %v2127 = vsub.f32 1.0, %v2126
    %v2128 = vmul.f32 %v2125, %v2127
    %v2129 = vadd.f32 %v2125, %v2128
    %vm2130 = vweird.f32 %v2124
    %vm2131 = vweird.f32 %v2125
    %vm2132 = vmor %vm2130, %vm2131
    %v2133 = vsel %vm2132, %v2125, %v2129
    %v2134 = vand.u32 2147483647, %v2124
    %vm2135 = vcmp.eq.f32.partialorder %v2134, 8.507059e+37
    %v2136 = vand.u32 %v2124, 2147483648
    %v2137 = vor.u32 1.1754944e-38, %v2136
    %v2138 = vsel %vm2135, %v2137, %v2133
    %v2139 = vmul.f32 1.0, %v2138
    %v2140 = vtanh.pop %v2120
    %v2142 = vrot.slane %v1643, 6
    %v2144 = vmul.f32 %v2139, %v2142
    %2146 = vrot.lane.b32.xlu0 %v2140, 64
    %v2147 = vpop.permute.xlu0 %2146
    %v2149 = vmul.f32 %v2139, %v2147
    %2151 = vrot.lane.b32.xlu0 %v2149, 32
    %v2152 = vpop.permute.xlu0 %2151
    %v2154 = vadd.f32 %v2144, %v2152
    %v2155 = vtanh.pop %v2154
    %2157 = vrot.lane.b32.xlu0 %v2155, 64
    %v2158 = vpop.permute.xlu0 %2157
    %v2160 = vmul.f32 %v2139, %v2158
    %2161 = vmatpush.msra.mxu0 0.0
    %2162 = vmatpush.msra.mxu0 0.0
    %2163 = vmatpush.msra.mxu0 0.0
    %2164 = vmatpush.msra.mxu0 0.0
    %2165 = vmatpush.msra.mxu0 0.0
    %2166 = vmatpush.msra.mxu0 0.0
    %2167 = vmatpush.msra.mxu0 0.0
    %2168 = vmatpush.msra.mxu0 0.0
    %2169 = vmatpush.msra.mxu0 0.0
    %2170 = vmatpush.msra.mxu0 0.0
    %2171 = vmatpush.msra.mxu0 0.0
    %2172 = vmatpush.msra.mxu0 0.0
    %2173 = vmatpush.msra.mxu0 %v430
    %2174 = vmatpush.msra.mxu0 %v429
    %2175 = vmatpush.msra.mxu0 %v428
    %2176 = vmatpush.msra.mxu0 %v427
    %2177 = vmatmul.f32.gmra.mxu0 %v2098
    %v2178 = vpop.f32.mrf.mxu0
    %v2179 = vadd.f32 %v614, %v2178
    %2180 = vdwg.mxu0
    %2181 = vmatpush.msra.mxu0 0.0
    %2182 = vmatpush.msra.mxu0 0.0
    %2183 = vmatpush.msra.mxu0 0.0
    %2184 = vmatpush.msra.mxu0 0.0
    %2185 = vmatpush.msra.mxu0 0.0
    %2186 = vmatpush.msra.mxu0 0.0
    %2187 = vmatpush.msra.mxu0 0.0
    %2188 = vmatpush.msra.mxu0 0.0
    %2189 = vmatpush.msra.mxu0 0.0
    %2190 = vmatpush.msra.mxu0 0.0
    %2191 = vmatpush.msra.mxu0 0.0
    %2192 = vmatpush.msra.mxu0 0.0
    %2193 = vmatpush.msra.mxu0 %v438
    %2194 = vmatpush.msra.mxu0 %v437
    %2195 = vmatpush.msra.mxu0 %v436
    %2196 = vmatpush.msra.mxu0 %v435
    %2197 = vmatmul.f32.gmra.mxu0 %v1731
    %v2198 = vpop.f32.mrf.mxu0
    %v2199 = vadd.f32 0.0, %v2198
    %2200 = vdwg.mxu0
    %v2201 = vadd.f32 %v2179, %v2199
    %v2202 = vxor.u32 %v2201, 2147483648
    %v2203 = vmul.f32 %v2202, 1.442695
    %v2204 = vpow.pop %v2203
    %v2205 = vadd.f32 %v2204, 1.0
    %v2206 = vrcp.pop %v2205
    %v2207 = vmul.f32 %v2205, %v2206
    %v2208 = vsub.f32 1.0, %v2207
    %v2209 = vmul.f32 %v2206, %v2208
    %v2210 = vadd.f32 %v2206, %v2209
    %vm2211 = vweird.f32 %v2205
    %vm2212 = vweird.f32 %v2206
    %vm2213 = vmor %vm2211, %vm2212
    %v2214 = vsel %vm2213, %v2206, %v2210
    %v2215 = vand.u32 2147483647, %v2205
    %vm2216 = vcmp.eq.f32.partialorder %v2215, 8.507059e+37
    %v2217 = vand.u32 %v2205, 2147483648
    %v2218 = vor.u32 1.1754944e-38, %v2217
    %v2219 = vsel %vm2216, %v2218, %v2214
    %v2220 = vmul.f32 1.0, %v2219
    %v2221 = vtanh.pop %v2201
    %v2222 = vmul.f32 %v2220, %v1721
    %2224 = vrot.lane.b32.xlu0 %v2221, 64
    %v2225 = vpop.permute.xlu0 %2224
    %v2227 = vmul.f32 %v2220, %v2225
    %2229 = vrot.lane.b32.xlu0 %v2227, 32
    %v2230 = vpop.permute.xlu0 %2229
    %v2232 = vadd.f32 %v2222, %v2230
    %v2233 = vtanh.pop %v2232
    %2235 = vrot.lane.b32.xlu0 %v2233, 64
    %v2236 = vpop.permute.xlu0 %2235
    %v2238 = vmul.f32 %v2220, %v2236
    %2240 = vrot.lane.b32.xlu0 %v2238, 32
    %v2241 = vpop.permute.xlu0 %2240
    %v2242 = vsel %vm482, %v2241, 0
    %2244 = vmatpush.msra.mxu0 0.0
    %2245 = vmatpush.msra.mxu0 0.0
    %2246 = vmatpush.msra.mxu0 0.0
    %2247 = vmatpush.msra.mxu0 0.0
    %2248 = vmatpush.msra.mxu0 0.0
    %2249 = vmatpush.msra.mxu0 0.0
    %2250 = vmatpush.msra.mxu0 0.0
    %2251 = vmatpush.msra.mxu0 0.0
    %2252 = vmatpush.msra.mxu0 0.0
    %2253 = vmatpush.msra.mxu0 0.0
    %2254 = vmatpush.msra.mxu0 0.0
    %2255 = vmatpush.msra.mxu0 0.0
    %v2256 = vand.u32 %v444, 4294901760
    %2257 = vmatpush.msra.mxu0 %v2256
    %v2258 = vand.u32 %v443, 4294901760
    %2259 = vmatpush.msra.mxu0 %v2258
    %v2260 = vand.u32 %v442, 4294901760
    %2261 = vmatpush.msra.mxu0 %v2260
    %v2262 = vand.u32 %v441, 4294901760
    %2263 = vmatpush.msra.mxu0 %v2262
    %v2264 = vand.u32 %v2242, 4294901760
    %v2265 = vsub.f32 %v2242, %v2264
    %v2266 = vand.u32 %v2265, 4294901760
    %v2267 = vsub.f32 %v2265, %v2266
    %v2268 = vand.u32 %v2267, 4294901760
    %2269 = vmatmul.f32.gmra.mxu0 %v2268
    %v2270 = vpop.f32.mrf.mxu0
    %v2271 = vadd.f32 %v695, %v2270
    %2272 = vdwg.mxu0
    %2273 = vmatpush.msra.mxu0 0.0
    %2274 = vmatpush.msra.mxu0 0.0
    %2275 = vmatpush.msra.mxu0 0.0
    %2276 = vmatpush.msra.mxu0 0.0
    %2277 = vmatpush.msra.mxu0 0.0
    %2278 = vmatpush.msra.mxu0 0.0
    %2279 = vmatpush.msra.mxu0 0.0
    %2280 = vmatpush.msra.mxu0 0.0
    %2281 = vmatpush.msra.mxu0 0.0
    %2282 = vmatpush.msra.mxu0 0.0
    %2283 = vmatpush.msra.mxu0 0.0
    %2284 = vmatpush.msra.mxu0 0.0
    %v2285 = vand.u32 %v444, 4294901760
    %v2286 = vsub.f32 %v444, %v2285
    %v2287 = vand.u32 %v2286, 4294901760
    %v2288 = vsub.f32 %v2286, %v2287
    %v2289 = vand.u32 %v2288, 4294901760
    %2290 = vmatpush.msra.mxu0 %v2289
    %v2291 = vand.u32 %v443, 4294901760
    %v2292 = vsub.f32 %v443, %v2291
    %v2293 = vand.u32 %v2292, 4294901760
    %v2294 = vsub.f32 %v2292, %v2293
    %v2295 = vand.u32 %v2294, 4294901760
    %2296 = vmatpush.msra.mxu0 %v2295
    %v2297 = vand.u32 %v442, 4294901760
    %v2298 = vsub.f32 %v442, %v2297
    %v2299 = vand.u32 %v2298, 4294901760
    %v2300 = vsub.f32 %v2298, %v2299
    %v2301 = vand.u32 %v2300, 4294901760
    %2302 = vmatpush.msra.mxu0 %v2301
    %v2303 = vand.u32 %v441, 4294901760
    %v2304 = vsub.f32 %v441, %v2303
    %v2305 = vand.u32 %v2304, 4294901760
    %v2306 = vsub.f32 %v2304, %v2305
    %v2307 = vand.u32 %v2306, 4294901760
    %2308 = vmatpush.msra.mxu0 %v2307
    %v2309 = vand.u32 %v2242, 4294901760
    %2310 = vmatmul.f32.gmra.mxu0 %v2309
    %v2311 = vpop.f32.mrf.mxu0
    %v2312 = vadd.f32 %v2271, %v2311
    %2313 = vdwg.mxu0
    %2314 = vmatpush.msra.mxu0 0.0
    %2315 = vmatpush.msra.mxu0 0.0
    %2316 = vmatpush.msra.mxu0 0.0
    %2317 = vmatpush.msra.mxu0 0.0
    %2318 = vmatpush.msra.mxu0 0.0
    %2319 = vmatpush.msra.mxu0 0.0
    %2320 = vmatpush.msra.mxu0 0.0
    %2321 = vmatpush.msra.mxu0 0.0
    %2322 = vmatpush.msra.mxu0 0.0
    %2323 = vmatpush.msra.mxu0 0.0
    %2324 = vmatpush.msra.mxu0 0.0
    %2325 = vmatpush.msra.mxu0 0.0
    %v2326 = vand.u32 %v444, 4294901760
    %v2327 = vsub.f32 %v444, %v2326
    %2328 = vmatpush.msra.mxu0 %v2327
    %v2329 = vand.u32 %v443, 4294901760
    %v2330 = vsub.f32 %v443, %v2329
    %2331 = vmatpush.msra.mxu0 %v2330
    %v2332 = vand.u32 %v442, 4294901760
    %v2333 = vsub.f32 %v442, %v2332
    %2334 = vmatpush.msra.mxu0 %v2333
    %v2335 = vand.u32 %v441, 4294901760
    %v2336 = vsub.f32 %v441, %v2335
    %2337 = vmatpush.msra.mxu0 %v2336
    %v2338 = vand.u32 %v2242, 4294901760
    %v2339 = vsub.f32 %v2242, %v2338
    %2340 = vmatmul.f32.gmra.mxu0 %v2339
    %v2341 = vpop.f32.mrf.mxu0
    %v2342 = vadd.f32 %v2312, %v2341
    %2343 = vdwg.mxu0
    %2344 = vmatpush.msra.mxu0 0.0
    %2345 = vmatpush.msra.mxu0 0.0
    %2346 = vmatpush.msra.mxu0 0.0
    %2347 = vmatpush.msra.mxu0 0.0
    %2348 = vmatpush.msra.mxu0 0.0
    %2349 = vmatpush.msra.mxu0 0.0
    %2350 = vmatpush.msra.mxu0 0.0
    %2351 = vmatpush.msra.mxu0 0.0
    %2352 = vmatpush.msra.mxu0 0.0
    %2353 = vmatpush.msra.mxu0 0.0
    %2354 = vmatpush.msra.mxu0 0.0
    %2355 = vmatpush.msra.mxu0 0.0
    %v2356 = vand.u32 %v444, 4294901760
    %2357 = vmatpush.msra.mxu0 %v2356
    %v2358 = vand.u32 %v443, 4294901760
    %2359 = vmatpush.msra.mxu0 %v2358
    %v2360 = vand.u32 %v442, 4294901760
    %2361 = vmatpush.msra.mxu0 %v2360
    %v2362 = vand.u32 %v441, 4294901760
    %2363 = vmatpush.msra.mxu0 %v2362
    %v2364 = vand.u32 %v2242, 4294901760
    %v2365 = vsub.f32 %v2242, %v2364
    %v2366 = vand.u32 %v2365, 4294901760
    %2367 = vmatmul.f32.gmra.mxu0 %v2366
    %v2368 = vpop.f32.mrf.mxu0
    %v2369 = vadd.f32 %v2342, %v2368
    %2370 = vdwg.mxu0
    %2371 = vmatpush.msra.mxu0 0.0
    %2372 = vmatpush.msra.mxu0 0.0
    %2373 = vmatpush.msra.mxu0 0.0
    %2374 = vmatpush.msra.mxu0 0.0
    %2375 = vmatpush.msra.mxu0 0.0
    %2376 = vmatpush.msra.mxu0 0.0
    %2377 = vmatpush.msra.mxu0 0.0
    %2378 = vmatpush.msra.mxu0 0.0
    %2379 = vmatpush.msra.mxu0 0.0
    %2380 = vmatpush.msra.mxu0 0.0
    %2381 = vmatpush.msra.mxu0 0.0
    %2382 = vmatpush.msra.mxu0 0.0
    %v2383 = vand.u32 %v444, 4294901760
    %v2384 = vsub.f32 %v444, %v2383
    %v2385 = vand.u32 %v2384, 4294901760
    %2386 = vmatpush.msra.mxu0 %v2385
    %v2387 = vand.u32 %v443, 4294901760
    %v2388 = vsub.f32 %v443, %v2387
    %v2389 = vand.u32 %v2388, 4294901760
    %2390 = vmatpush.msra.mxu0 %v2389
    %v2391 = vand.u32 %v442, 4294901760
    %v2392 = vsub.f32 %v442, %v2391
    %v2393 = vand.u32 %v2392, 4294901760
    %2394 = vmatpush.msra.mxu0 %v2393
    %v2395 = vand.u32 %v441, 4294901760
    %v2396 = vsub.f32 %v441, %v2395
    %v2397 = vand.u32 %v2396, 4294901760
    %2398 = vmatpush.msra.mxu0 %v2397
    %v2399 = vand.u32 %v2242, 4294901760
    %2400 = vmatmul.f32.gmra.mxu0 %v2399
    %v2401 = vpop.f32.mrf.mxu0
    %v2402 = vadd.f32 %v2369, %v2401
    %2403 = vdwg.mxu0
    %2404 = vmatpush.msra.mxu0 0.0
    %2405 = vmatpush.msra.mxu0 0.0
    %2406 = vmatpush.msra.mxu0 0.0
    %2407 = vmatpush.msra.mxu0 0.0
    %2408 = vmatpush.msra.mxu0 0.0
    %2409 = vmatpush.msra.mxu0 0.0
    %2410 = vmatpush.msra.mxu0 0.0
    %2411 = vmatpush.msra.mxu0 0.0
    %2412 = vmatpush.msra.mxu0 0.0
    %2413 = vmatpush.msra.mxu0 0.0
    %2414 = vmatpush.msra.mxu0 0.0
    %2415 = vmatpush.msra.mxu0 0.0
    %v2416 = vand.u32 %v444, 4294901760
    %2417 = vmatpush.msra.mxu0 %v2416
    %v2418 = vand.u32 %v443, 4294901760
    %2419 = vmatpush.msra.mxu0 %v2418
    %v2420 = vand.u32 %v442, 4294901760
    %2421 = vmatpush.msra.mxu0 %v2420
    %v2422 = vand.u32 %v441, 4294901760
    %2423 = vmatpush.msra.mxu0 %v2422
    %v2424 = vand.u32 %v2242, 4294901760
    %2425 = vmatmul.f32.gmra.mxu0 %v2424
    %v2426 = vpop.f32.mrf.mxu0
    %v2427 = vadd.f32 %v2402, %v2426
    %2428 = vdwg.mxu0
    %v2430 = vsel %vm452, %v2427, 0
    %2432 = vmatpush.msra.mxu0 0.0
    %2433 = vmatpush.msra.mxu0 0.0
    %2434 = vmatpush.msra.mxu0 0.0
    %2435 = vmatpush.msra.mxu0 0.0
    %2436 = vmatpush.msra.mxu0 0.0
    %2437 = vmatpush.msra.mxu0 0.0
    %2438 = vmatpush.msra.mxu0 0.0
    %2439 = vmatpush.msra.mxu0 0.0
    %2440 = vmatpush.msra.mxu0 0.0
    %2441 = vmatpush.msra.mxu0 0.0
    %2442 = vmatpush.msra.mxu0 0.0
    %2443 = vmatpush.msra.mxu0 0.0
    %2444 = vmatpush.msra.mxu0 0.0
    %2445 = vmatpush.msra.mxu0 0.0
    %v2446 = vand.u32 %v447, 4294901760
    %2447 = vmatpush.msra.mxu0 %v2446
    %v2448 = vand.u32 %v446, 4294901760
    %2449 = vmatpush.msra.mxu0 %v2448
    %v2450 = vand.u32 %v2430, 4294901760
    %v2451 = vsub.f32 %v2430, %v2450
    %v2452 = vand.u32 %v2451, 4294901760
    %v2453 = vsub.f32 %v2451, %v2452
    %v2454 = vand.u32 %v2453, 4294901760
    %2455 = vmatmul.f32.gmra.mxu0 %v2454
    %v2456 = vpop.f32.mrf.mxu0
    %v2457 = vadd.f32 %v888, %v2456
    %2458 = vdwg.mxu0
    %2459 = vmatpush.msra.mxu0 0.0
    %2460 = vmatpush.msra.mxu0 0.0
    %2461 = vmatpush.msra.mxu0 0.0
    %2462 = vmatpush.msra.mxu0 0.0
    %2463 = vmatpush.msra.mxu0 0.0
    %2464 = vmatpush.msra.mxu0 0.0
    %2465 = vmatpush.msra.mxu0 0.0
    %2466 = vmatpush.msra.mxu0 0.0
    %2467 = vmatpush.msra.mxu0 0.0
    %2468 = vmatpush.msra.mxu0 0.0
    %2469 = vmatpush.msra.mxu0 0.0
    %2470 = vmatpush.msra.mxu0 0.0
    %2471 = vmatpush.msra.mxu0 0.0
    %2472 = vmatpush.msra.mxu0 0.0
    %v2473 = vand.u32 %v447, 4294901760
    %v2474 = vsub.f32 %v447, %v2473
    %v2475 = vand.u32 %v2474, 4294901760
    %v2476 = vsub.f32 %v2474, %v2475
    %v2477 = vand.u32 %v2476, 4294901760
    %2478 = vmatpush.msra.mxu0 %v2477
    %v2479 = vand.u32 %v446, 4294901760
    %v2480 = vsub.f32 %v446, %v2479
    %v2481 = vand.u32 %v2480, 4294901760
    %v2482 = vsub.f32 %v2480, %v2481
    %v2483 = vand.u32 %v2482, 4294901760
    %2484 = vmatpush.msra.mxu0 %v2483
    %v2485 = vand.u32 %v2430, 4294901760
    %2486 = vmatmul.f32.gmra.mxu0 %v2485
    %v2487 = vpop.f32.mrf.mxu0
    %v2488 = vadd.f32 %v2457, %v2487
    %2489 = vdwg.mxu0
    %2490 = vmatpush.msra.mxu0 0.0
    %2491 = vmatpush.msra.mxu0 0.0
    %2492 = vmatpush.msra.mxu0 0.0
    %2493 = vmatpush.msra.mxu0 0.0
    %2494 = vmatpush.msra.mxu0 0.0
    %2495 = vmatpush.msra.mxu0 0.0
    %2496 = vmatpush.msra.mxu0 0.0
    %2497 = vmatpush.msra.mxu0 0.0
    %2498 = vmatpush.msra.mxu0 0.0
    %2499 = vmatpush.msra.mxu0 0.0
    %2500 = vmatpush.msra.mxu0 0.0
    %2501 = vmatpush.msra.mxu0 0.0
    %2502 = vmatpush.msra.mxu0 0.0
    %2503 = vmatpush.msra.mxu0 0.0
    %v2504 = vand.u32 %v447, 4294901760
    %v2505 = vsub.f32 %v447, %v2504
    %2506 = vmatpush.msra.mxu0 %v2505
    %v2507 = vand.u32 %v446, 4294901760
    %v2508 = vsub.f32 %v446, %v2507
    %2509 = vmatpush.msra.mxu0 %v2508
    %v2510 = vand.u32 %v2430, 4294901760
    %v2511 = vsub.f32 %v2430, %v2510
    %2512 = vmatmul.f32.gmra.mxu0 %v2511
    %v2513 = vpop.f32.mrf.mxu0
    %v2514 = vadd.f32 %v2488, %v2513
    %2515 = vdwg.mxu0
    %2516 = vmatpush.msra.mxu0 0.0
    %2517 = vmatpush.msra.mxu0 0.0
    %2518 = vmatpush.msra.mxu0 0.0
    %2519 = vmatpush.msra.mxu0 0.0
    %2520 = vmatpush.msra.mxu0 0.0
    %2521 = vmatpush.msra.mxu0 0.0
    %2522 = vmatpush.msra.mxu0 0.0
    %2523 = vmatpush.msra.mxu0 0.0
    %2524 = vmatpush.msra.mxu0 0.0
    %2525 = vmatpush.msra.mxu0 0.0
    %2526 = vmatpush.msra.mxu0 0.0
    %2527 = vmatpush.msra.mxu0 0.0
    %2528 = vmatpush.msra.mxu0 0.0
    %2529 = vmatpush.msra.mxu0 0.0
    %v2530 = vand.u32 %v447, 4294901760
    %2531 = vmatpush.msra.mxu0 %v2530
    %v2532 = vand.u32 %v446, 4294901760
    %2533 = vmatpush.msra.mxu0 %v2532
    %v2534 = vand.u32 %v2430, 4294901760
    %v2535 = vsub.f32 %v2430, %v2534
    %v2536 = vand.u32 %v2535, 4294901760
    %2537 = vmatmul.f32.gmra.mxu0 %v2536
    %v2538 = vpop.f32.mrf.mxu0
    %v2539 = vadd.f32 %v2514, %v2538
    %2540 = vdwg.mxu0
    %2541 = vmatpush.msra.mxu0 0.0
    %2542 = vmatpush.msra.mxu0 0.0
    %2543 = vmatpush.msra.mxu0 0.0
    %2544 = vmatpush.msra.mxu0 0.0
    %2545 = vmatpush.msra.mxu0 0.0
    %2546 = vmatpush.msra.mxu0 0.0
    %2547 = vmatpush.msra.mxu0 0.0
    %2548 = vmatpush.msra.mxu0 0.0
    %2549 = vmatpush.msra.mxu0 0.0
    %2550 = vmatpush.msra.mxu0 0.0
    %2551 = vmatpush.msra.mxu0 0.0
    %2552 = vmatpush.msra.mxu0 0.0
    %2553 = vmatpush.msra.mxu0 0.0
    %2554 = vmatpush.msra.mxu0 0.0
    %v2555 = vand.u32 %v447, 4294901760
    %v2556 = vsub.f32 %v447, %v2555
    %v2557 = vand.u32 %v2556, 4294901760
    %2558 = vmatpush.msra.mxu0 %v2557
    %v2559 = vand.u32 %v446, 4294901760
    %v2560 = vsub.f32 %v446, %v2559
    %v2561 = vand.u32 %v2560, 4294901760
    %2562 = vmatpush.msra.mxu0 %v2561
    %v2563 = vand.u32 %v2430, 4294901760
    %2564 = vmatmul.f32.gmra.mxu0 %v2563
    %v2565 = vpop.f32.mrf.mxu0
    %v2566 = vadd.f32 %v2539, %v2565
    %2567 = vdwg.mxu0
    %2568 = vmatpush.msra.mxu0 0.0
    %2569 = vmatpush.msra.mxu0 0.0
    %2570 = vmatpush.msra.mxu0 0.0
    %2571 = vmatpush.msra.mxu0 0.0
    %2572 = vmatpush.msra.mxu0 0.0
    %2573 = vmatpush.msra.mxu0 0.0
    %2574 = vmatpush.msra.mxu0 0.0
    %2575 = vmatpush.msra.mxu0 0.0
    %2576 = vmatpush.msra.mxu0 0.0
    %2577 = vmatpush.msra.mxu0 0.0
    %2578 = vmatpush.msra.mxu0 0.0
    %2579 = vmatpush.msra.mxu0 0.0
    %2580 = vmatpush.msra.mxu0 0.0
    %2581 = vmatpush.msra.mxu0 0.0
    %v2582 = vand.u32 %v447, 4294901760
    %2583 = vmatpush.msra.mxu0 %v2582
    %v2584 = vand.u32 %v446, 4294901760
    %2585 = vmatpush.msra.mxu0 %v2584
    %v2586 = vand.u32 %v2430, 4294901760
    %2587 = vmatmul.f32.gmra.mxu0 %v2586
    %v2588 = vpop.f32.mrf.mxu0
    %v2589 = vadd.f32 %v2566, %v2588
    %2590 = vdwg.mxu0
    %v2591 = vsel %vm166, %v2589, -inf
    %2592 = vmax.xlane.f32.xlu0 %v2591
    %v2593 = vpop.xlane.xlu0 %2592
    %v2594 = vsub.f32 %v2589, %v2593
    %v2595 = vmul.f32 %v2594, 1.442695
    %v2596 = vpow.pop %v2595
    %v2597 = vsel %vm166, %v2596, 0.0
    %2598 = vadd.xlane.f32.xlu0 %v2597
    %v2599 = vpop.xlane.xlu0 %2598
    %v2600 = vlog2.pop %v2599
    %v2601 = vmul.f32 %v2600, 0.6931472
    %v2602 = vsub.f32 %v2594, %v2601
    %2603 = vst [vmem:[#allocation13 + $0x3] sm:$0x1] %v2602
    %2604 = vst [vmem:[#allocation13 + $0xa] sm:$0x2] %v2602
    %2606 = vrot.lane.b32.xlu0 %v2160, 32
    %v2607 = vpop.permute.xlu0 %2606
    %v2608 = vsel %vm482, %v2607, 0
    %2610 = vmatpush.msra.mxu0 0.0
    %2611 = vmatpush.msra.mxu0 0.0
    %2612 = vmatpush.msra.mxu0 0.0
    %2613 = vmatpush.msra.mxu0 0.0
    %2614 = vmatpush.msra.mxu0 0.0
    %2615 = vmatpush.msra.mxu0 0.0
    %2616 = vmatpush.msra.mxu0 0.0
    %2617 = vmatpush.msra.mxu0 0.0
    %2618 = vmatpush.msra.mxu0 0.0
    %2619 = vmatpush.msra.mxu0 0.0
    %2620 = vmatpush.msra.mxu0 0.0
    %2621 = vmatpush.msra.mxu0 0.0
    %2622 = vmatpush.msra.mxu0 %v434
    %2623 = vmatpush.msra.mxu0 %v433
    %2624 = vmatpush.msra.mxu0 %v432
    %2625 = vmatpush.msra.mxu0 %v431
    %2626 = vmatmul.f32.gmra.mxu0 %v2608
    %v2627 = vpop.f32.mrf.mxu0
    %v2628 = vadd.f32 0.0, %v2627
    %2629 = vdwg.mxu0
    %v2631 = vrot.slane %v2628, 6
    %v2633 = vadd.f32 %v480, %v2631
    %v2634 = vxor.u32 %v2633, 2147483648
    %v2635 = vmul.f32 %v2634, 1.442695
    %v2636 = vpow.pop %v2635
    %v2637 = vadd.f32 %v2636, 1.0
    %v2638 = vrcp.pop %v2637
    %v2639 = vmul.f32 %v2637, %v2638
    %v2640 = vsub.f32 1.0, %v2639
    %v2641 = vmul.f32 %v2638, %v2640
    %v2642 = vadd.f32 %v2638, %v2641
    %vm2643 = vweird.f32 %v2637
    %vm2644 = vweird.f32 %v2638
    %vm2645 = vmor %vm2643, %vm2644
    %v2646 = vsel %vm2645, %v2638, %v2642
    %v2647 = vand.u32 2147483647, %v2637
    %vm2648 = vcmp.eq.f32.partialorder %v2647, 8.507059e+37
    %v2649 = vand.u32 %v2637, 2147483648
    %v2650 = vor.u32 1.1754944e-38, %v2649
    %v2651 = vsel %vm2648, %v2650, %v2646
    %v2652 = vmul.f32 1.0, %v2651
    %v2653 = vtanh.pop %v2633
    %v2655 = vrot.slane %v2154, 6
    %v2657 = vmul.f32 %v2652, %v2655
    %2659 = vrot.lane.b32.xlu0 %v2653, 64
    %v2660 = vpop.permute.xlu0 %2659
    %v2662 = vmul.f32 %v2652, %v2660
    %2664 = vrot.lane.b32.xlu0 %v2662, 32
    %v2665 = vpop.permute.xlu0 %2664
    %v2667 = vadd.f32 %v2657, %v2665
    %v2668 = vtanh.pop %v2667
    %2670 = vrot.lane.b32.xlu0 %v2668, 64
    %v2671 = vpop.permute.xlu0 %2670
    %v2673 = vmul.f32 %v2652, %v2671
    %2674 = vmatpush.msra.mxu0 0.0
    %2675 = vmatpush.msra.mxu0 0.0
    %2676 = vmatpush.msra.mxu0 0.0
    %2677 = vmatpush.msra.mxu0 0.0
    %2678 = vmatpush.msra.mxu0 0.0
    %2679 = vmatpush.msra.mxu0 0.0
    %2680 = vmatpush.msra.mxu0 0.0
    %2681 = vmatpush.msra.mxu0 0.0
    %2682 = vmatpush.msra.mxu0 0.0
    %2683 = vmatpush.msra.mxu0 0.0
    %2684 = vmatpush.msra.mxu0 0.0
    %2685 = vmatpush.msra.mxu0 0.0
    %2686 = vmatpush.msra.mxu0 %v430
    %2687 = vmatpush.msra.mxu0 %v429
    %2688 = vmatpush.msra.mxu0 %v428
    %2689 = vmatpush.msra.mxu0 %v427
    %2690 = vmatmul.f32.gmra.mxu0 %v2608
    %v2691 = vpop.f32.mrf.mxu0
    %v2692 = vadd.f32 %v614, %v2691
    %2693 = vdwg.mxu0
    %2694 = vmatpush.msra.mxu0 0.0
    %2695 = vmatpush.msra.mxu0 0.0
    %2696 = vmatpush.msra.mxu0 0.0
    %2697 = vmatpush.msra.mxu0 0.0
    %2698 = vmatpush.msra.mxu0 0.0
    %2699 = vmatpush.msra.mxu0 0.0
    %2700 = vmatpush.msra.mxu0 0.0
    %2701 = vmatpush.msra.mxu0 0.0
    %2702 = vmatpush.msra.mxu0 0.0
    %2703 = vmatpush.msra.mxu0 0.0
    %2704 = vmatpush.msra.mxu0 0.0
    %2705 = vmatpush.msra.mxu0 0.0
    %2706 = vmatpush.msra.mxu0 %v438
    %2707 = vmatpush.msra.mxu0 %v437
    %2708 = vmatpush.msra.mxu0 %v436
    %2709 = vmatpush.msra.mxu0 %v435
    %2710 = vmatmul.f32.gmra.mxu0 %v2242
    %v2711 = vpop.f32.mrf.mxu0
    %v2712 = vadd.f32 0.0, %v2711
    %2713 = vdwg.mxu0
    %v2714 = vadd.f32 %v2692, %v2712
    %v2715 = vxor.u32 %v2714, 2147483648
    %v2716 = vmul.f32 %v2715, 1.442695
    %v2717 = vpow.pop %v2716
    %v2718 = vadd.f32 %v2717, 1.0
    %v2719 = vrcp.pop %v2718
    %v2720 = vmul.f32 %v2718, %v2719
    %v2721 = vsub.f32 1.0, %v2720
    %v2722 = vmul.f32 %v2719, %v2721
    %v2723 = vadd.f32 %v2719, %v2722
    %vm2724 = vweird.f32 %v2718
    %vm2725 = vweird.f32 %v2719
    %vm2726 = vmor %vm2724, %vm2725
    %v2727 = vsel %vm2726, %v2719, %v2723
    %v2728 = vand.u32 2147483647, %v2718
    %vm2729 = vcmp.eq.f32.partialorder %v2728, 8.507059e+37
    %v2730 = vand.u32 %v2718, 2147483648
    %v2731 = vor.u32 1.1754944e-38, %v2730
    %v2732 = vsel %vm2729, %v2731, %v2727
    %v2733 = vmul.f32 1.0, %v2732
    %v2734 = vtanh.pop %v2714
    %v2735 = vmul.f32 %v2733, %v2232
    %2737 = vrot.lane.b32.xlu0 %v2734, 64
    %v2738 = vpop.permute.xlu0 %2737
    %v2740 = vmul.f32 %v2733, %v2738
    %2742 = vrot.lane.b32.xlu0 %v2740, 32
    %v2743 = vpop.permute.xlu0 %2742
    %v2745 = vadd.f32 %v2735, %v2743
    %v2746 = vtanh.pop %v2745
    %2748 = vrot.lane.b32.xlu0 %v2746, 64
    %v2749 = vpop.permute.xlu0 %2748
    %v2751 = vmul.f32 %v2733, %v2749
    %2753 = vrot.lane.b32.xlu0 %v2751, 32
    %v2754 = vpop.permute.xlu0 %2753
    %v2755 = vsel %vm482, %v2754, 0
    %2757 = vmatpush.msra.mxu0 0.0
    %2758 = vmatpush.msra.mxu0 0.0
    %2759 = vmatpush.msra.mxu0 0.0
    %2760 = vmatpush.msra.mxu0 0.0
    %2761 = vmatpush.msra.mxu0 0.0
    %2762 = vmatpush.msra.mxu0 0.0
    %2763 = vmatpush.msra.mxu0 0.0
    %2764 = vmatpush.msra.mxu0 0.0
    %2765 = vmatpush.msra.mxu0 0.0
    %2766 = vmatpush.msra.mxu0 0.0
    %2767 = vmatpush.msra.mxu0 0.0
    %2768 = vmatpush.msra.mxu0 0.0
    %v2769 = vand.u32 %v444, 4294901760
    %2770 = vmatpush.msra.mxu0 %v2769
    %v2771 = vand.u32 %v443, 4294901760
    %2772 = vmatpush.msra.mxu0 %v2771
    %v2773 = vand.u32 %v442, 4294901760
    %2774 = vmatpush.msra.mxu0 %v2773
    %v2775 = vand.u32 %v441, 4294901760
    %2776 = vmatpush.msra.mxu0 %v2775
    %v2777 = vand.u32 %v2755, 4294901760
    %v2778 = vsub.f32 %v2755, %v2777
    %v2779 = vand.u32 %v2778, 4294901760
    %v2780 = vsub.f32 %v2778, %v2779
    %v2781 = vand.u32 %v2780, 4294901760
    %2782 = vmatmul.f32.gmra.mxu0 %v2781
    %v2783 = vpop.f32.mrf.mxu0
    %v2784 = vadd.f32 %v695, %v2783
    %2785 = vdwg.mxu0
    %2786 = vmatpush.msra.mxu0 0.0
    %2787 = vmatpush.msra.mxu0 0.0
    %2788 = vmatpush.msra.mxu0 0.0
    %2789 = vmatpush.msra.mxu0 0.0
    %2790 = vmatpush.msra.mxu0 0.0
    %2791 = vmatpush.msra.mxu0 0.0
    %2792 = vmatpush.msra.mxu0 0.0
    %2793 = vmatpush.msra.mxu0 0.0
    %2794 = vmatpush.msra.mxu0 0.0
    %2795 = vmatpush.msra.mxu0 0.0
    %2796 = vmatpush.msra.mxu0 0.0
    %2797 = vmatpush.msra.mxu0 0.0
    %v2798 = vand.u32 %v444, 4294901760
    %v2799 = vsub.f32 %v444, %v2798
    %v2800 = vand.u32 %v2799, 4294901760
    %v2801 = vsub.f32 %v2799, %v2800
    %v2802 = vand.u32 %v2801, 4294901760
    %2803 = vmatpush.msra.mxu0 %v2802
    %v2804 = vand.u32 %v443, 4294901760
    %v2805 = vsub.f32 %v443, %v2804
    %v2806 = vand.u32 %v2805, 4294901760
    %v2807 = vsub.f32 %v2805, %v2806
    %v2808 = vand.u32 %v2807, 4294901760
    %2809 = vmatpush.msra.mxu0 %v2808
    %v2810 = vand.u32 %v442, 4294901760
    %v2811 = vsub.f32 %v442, %v2810
    %v2812 = vand.u32 %v2811, 4294901760
    %v2813 = vsub.f32 %v2811, %v2812
    %v2814 = vand.u32 %v2813, 4294901760
    %2815 = vmatpush.msra.mxu0 %v2814
    %v2816 = vand.u32 %v441, 4294901760
    %v2817 = vsub.f32 %v441, %v2816
    %v2818 = vand.u32 %v2817, 4294901760
    %v2819 = vsub.f32 %v2817, %v2818
    %v2820 = vand.u32 %v2819, 4294901760
    %2821 = vmatpush.msra.mxu0 %v2820
    %v2822 = vand.u32 %v2755, 4294901760
    %2823 = vmatmul.f32.gmra.mxu0 %v2822
    %v2824 = vpop.f32.mrf.mxu0
    %v2825 = vadd.f32 %v2784, %v2824
    %2826 = vdwg.mxu0
    %2827 = vmatpush.msra.mxu0 0.0
    %2828 = vmatpush.msra.mxu0 0.0
    %2829 = vmatpush.msra.mxu0 0.0
    %2830 = vmatpush.msra.mxu0 0.0
    %2831 = vmatpush.msra.mxu0 0.0
    %2832 = vmatpush.msra.mxu0 0.0
    %2833 = vmatpush.msra.mxu0 0.0
    %2834 = vmatpush.msra.mxu0 0.0
    %2835 = vmatpush.msra.mxu0 0.0
    %2836 = vmatpush.msra.mxu0 0.0
    %2837 = vmatpush.msra.mxu0 0.0
    %2838 = vmatpush.msra.mxu0 0.0
    %v2839 = vand.u32 %v444, 4294901760
    %v2840 = vsub.f32 %v444, %v2839
    %2841 = vmatpush.msra.mxu0 %v2840
    %v2842 = vand.u32 %v443, 4294901760
    %v2843 = vsub.f32 %v443, %v2842
    %2844 = vmatpush.msra.mxu0 %v2843
    %v2845 = vand.u32 %v442, 4294901760
    %v2846 = vsub.f32 %v442, %v2845
    %2847 = vmatpush.msra.mxu0 %v2846
    %v2848 = vand.u32 %v441, 4294901760
    %v2849 = vsub.f32 %v441, %v2848
    %2850 = vmatpush.msra.mxu0 %v2849
    %v2851 = vand.u32 %v2755, 4294901760
    %v2852 = vsub.f32 %v2755, %v2851
    %2853 = vmatmul.f32.gmra.mxu0 %v2852
    %v2854 = vpop.f32.mrf.mxu0
    %v2855 = vadd.f32 %v2825, %v2854
    %2856 = vdwg.mxu0
    %2857 = vmatpush.msra.mxu0 0.0
    %2858 = vmatpush.msra.mxu0 0.0
    %2859 = vmatpush.msra.mxu0 0.0
    %2860 = vmatpush.msra.mxu0 0.0
    %2861 = vmatpush.msra.mxu0 0.0
    %2862 = vmatpush.msra.mxu0 0.0
    %2863 = vmatpush.msra.mxu0 0.0
    %2864 = vmatpush.msra.mxu0 0.0
    %2865 = vmatpush.msra.mxu0 0.0
    %2866 = vmatpush.msra.mxu0 0.0
    %2867 = vmatpush.msra.mxu0 0.0
    %2868 = vmatpush.msra.mxu0 0.0
    %v2869 = vand.u32 %v444, 4294901760
    %2870 = vmatpush.msra.mxu0 %v2869
    %v2871 = vand.u32 %v443, 4294901760
    %2872 = vmatpush.msra.mxu0 %v2871
    %v2873 = vand.u32 %v442, 4294901760
    %2874 = vmatpush.msra.mxu0 %v2873
    %v2875 = vand.u32 %v441, 4294901760
    %2876 = vmatpush.msra.mxu0 %v2875
    %v2877 = vand.u32 %v2755, 4294901760
    %v2878 = vsub.f32 %v2755, %v2877
    %v2879 = vand.u32 %v2878, 4294901760
    %2880 = vmatmul.f32.gmra.mxu0 %v2879
    %v2881 = vpop.f32.mrf.mxu0
    %v2882 = vadd.f32 %v2855, %v2881
    %2883 = vdwg.mxu0
    %2884 = vmatpush.msra.mxu0 0.0
    %2885 = vmatpush.msra.mxu0 0.0
    %2886 = vmatpush.msra.mxu0 0.0
    %2887 = vmatpush.msra.mxu0 0.0
    %2888 = vmatpush.msra.mxu0 0.0
    %2889 = vmatpush.msra.mxu0 0.0
    %2890 = vmatpush.msra.mxu0 0.0
    %2891 = vmatpush.msra.mxu0 0.0
    %2892 = vmatpush.msra.mxu0 0.0
    %2893 = vmatpush.msra.mxu0 0.0
    %2894 = vmatpush.msra.mxu0 0.0
    %2895 = vmatpush.msra.mxu0 0.0
    %v2896 = vand.u32 %v444, 4294901760
    %v2897 = vsub.f32 %v444, %v2896
    %v2898 = vand.u32 %v2897, 4294901760
    %2899 = vmatpush.msra.mxu0 %v2898
    %v2900 = vand.u32 %v443, 4294901760
    %v2901 = vsub.f32 %v443, %v2900
    %v2902 = vand.u32 %v2901, 4294901760
    %2903 = vmatpush.msra.mxu0 %v2902
    %v2904 = vand.u32 %v442, 4294901760
    %v2905 = vsub.f32 %v442, %v2904
    %v2906 = vand.u32 %v2905, 4294901760
    %2907 = vmatpush.msra.mxu0 %v2906
    %v2908 = vand.u32 %v441, 4294901760
    %v2909 = vsub.f32 %v441, %v2908
    %v2910 = vand.u32 %v2909, 4294901760
    %2911 = vmatpush.msra.mxu0 %v2910
    %v2912 = vand.u32 %v2755, 4294901760
    %2913 = vmatmul.f32.gmra.mxu0 %v2912
    %v2914 = vpop.f32.mrf.mxu0
    %v2915 = vadd.f32 %v2882, %v2914
    %2916 = vdwg.mxu0
    %2917 = vmatpush.msra.mxu0 0.0
    %2918 = vmatpush.msra.mxu0 0.0
    %2919 = vmatpush.msra.mxu0 0.0
    %2920 = vmatpush.msra.mxu0 0.0
    %2921 = vmatpush.msra.mxu0 0.0
    %2922 = vmatpush.msra.mxu0 0.0
    %2923 = vmatpush.msra.mxu0 0.0
    %2924 = vmatpush.msra.mxu0 0.0
    %2925 = vmatpush.msra.mxu0 0.0
    %2926 = vmatpush.msra.mxu0 0.0
    %2927 = vmatpush.msra.mxu0 0.0
    %2928 = vmatpush.msra.mxu0 0.0
    %v2929 = vand.u32 %v444, 4294901760
    %2930 = vmatpush.msra.mxu0 %v2929
    %v2931 = vand.u32 %v443, 4294901760
    %2932 = vmatpush.msra.mxu0 %v2931
    %v2933 = vand.u32 %v442, 4294901760
    %2934 = vmatpush.msra.mxu0 %v2933
    %v2935 = vand.u32 %v441, 4294901760
    %2936 = vmatpush.msra.mxu0 %v2935
    %v2937 = vand.u32 %v2755, 4294901760
    %2938 = vmatmul.f32.gmra.mxu0 %v2937
    %v2939 = vpop.f32.mrf.mxu0
    %v2940 = vadd.f32 %v2915, %v2939
    %2941 = vdwg.mxu0
    %v2943 = vsel %vm452, %v2940, 0
    %2945 = vmatpush.msra.mxu0 0.0
    %2946 = vmatpush.msra.mxu0 0.0
    %2947 = vmatpush.msra.mxu0 0.0
    %2948 = vmatpush.msra.mxu0 0.0
    %2949 = vmatpush.msra.mxu0 0.0
    %2950 = vmatpush.msra.mxu0 0.0
    %2951 = vmatpush.msra.mxu0 0.0
    %2952 = vmatpush.msra.mxu0 0.0
    %2953 = vmatpush.msra.mxu0 0.0
    %2954 = vmatpush.msra.mxu0 0.0
    %2955 = vmatpush.msra.mxu0 0.0
    %2956 = vmatpush.msra.mxu0 0.0
    %2957 = vmatpush.msra.mxu0 0.0
    %2958 = vmatpush.msra.mxu0 0.0
    %v2959 = vand.u32 %v447, 4294901760
    %2960 = vmatpush.msra.mxu0 %v2959
    %v2961 = vand.u32 %v446, 4294901760
    %2962 = vmatpush.msra.mxu0 %v2961
    %v2963 = vand.u32 %v2943, 4294901760
    %v2964 = vsub.f32 %v2943, %v2963
    %v2965 = vand.u32 %v2964, 4294901760
    %v2966 = vsub.f32 %v2964, %v2965
    %v2967 = vand.u32 %v2966, 4294901760
    %2968 = vmatmul.f32.gmra.mxu0 %v2967
    %v2969 = vpop.f32.mrf.mxu0
    %v2970 = vadd.f32 %v888, %v2969
    %2971 = vdwg.mxu0
    %2972 = vmatpush.msra.mxu0 0.0
    %2973 = vmatpush.msra.mxu0 0.0
    %2974 = vmatpush.msra.mxu0 0.0
    %2975 = vmatpush.msra.mxu0 0.0
    %2976 = vmatpush.msra.mxu0 0.0
    %2977 = vmatpush.msra.mxu0 0.0
    %2978 = vmatpush.msra.mxu0 0.0
    %2979 = vmatpush.msra.mxu0 0.0
    %2980 = vmatpush.msra.mxu0 0.0
    %2981 = vmatpush.msra.mxu0 0.0
    %2982 = vmatpush.msra.mxu0 0.0
    %2983 = vmatpush.msra.mxu0 0.0
    %2984 = vmatpush.msra.mxu0 0.0
    %2985 = vmatpush.msra.mxu0 0.0
    %v2986 = vand.u32 %v447, 4294901760
    %v2987 = vsub.f32 %v447, %v2986
    %v2988 = vand.u32 %v2987, 4294901760
    %v2989 = vsub.f32 %v2987, %v2988
    %v2990 = vand.u32 %v2989, 4294901760
    %2991 = vmatpush.msra.mxu0 %v2990
    %v2992 = vand.u32 %v446, 4294901760
    %v2993 = vsub.f32 %v446, %v2992
    %v2994 = vand.u32 %v2993, 4294901760
    %v2995 = vsub.f32 %v2993, %v2994
    %v2996 = vand.u32 %v2995, 4294901760
    %2997 = vmatpush.msra.mxu0 %v2996
    %v2998 = vand.u32 %v2943, 4294901760
    %2999 = vmatmul.f32.gmra.mxu0 %v2998
    %v3000 = vpop.f32.mrf.mxu0
    %v3001 = vadd.f32 %v2970, %v3000
    %3002 = vdwg.mxu0
    %3003 = vmatpush.msra.mxu0 0.0
    %3004 = vmatpush.msra.mxu0 0.0
    %3005 = vmatpush.msra.mxu0 0.0
    %3006 = vmatpush.msra.mxu0 0.0
    %3007 = vmatpush.msra.mxu0 0.0
    %3008 = vmatpush.msra.mxu0 0.0
    %3009 = vmatpush.msra.mxu0 0.0
    %3010 = vmatpush.msra.mxu0 0.0
    %3011 = vmatpush.msra.mxu0 0.0
    %3012 = vmatpush.msra.mxu0 0.0
    %3013 = vmatpush.msra.mxu0 0.0
    %3014 = vmatpush.msra.mxu0 0.0
    %3015 = vmatpush.msra.mxu0 0.0
    %3016 = vmatpush.msra.mxu0 0.0
    %v3017 = vand.u32 %v447, 4294901760
    %v3018 = vsub.f32 %v447, %v3017
    %3019 = vmatpush.msra.mxu0 %v3018
    %v3020 = vand.u32 %v446, 4294901760
    %v3021 = vsub.f32 %v446, %v3020
    %3022 = vmatpush.msra.mxu0 %v3021
    %v3023 = vand.u32 %v2943, 4294901760
    %v3024 = vsub.f32 %v2943, %v3023
    %3025 = vmatmul.f32.gmra.mxu0 %v3024
    %v3026 = vpop.f32.mrf.mxu0
    %v3027 = vadd.f32 %v3001, %v3026
    %3028 = vdwg.mxu0
    %3029 = vmatpush.msra.mxu0 0.0
    %3030 = vmatpush.msra.mxu0 0.0
    %3031 = vmatpush.msra.mxu0 0.0
    %3032 = vmatpush.msra.mxu0 0.0
    %3033 = vmatpush.msra.mxu0 0.0
    %3034 = vmatpush.msra.mxu0 0.0
    %3035 = vmatpush.msra.mxu0 0.0
    %3036 = vmatpush.msra.mxu0 0.0
    %3037 = vmatpush.msra.mxu0 0.0
    %3038 = vmatpush.msra.mxu0 0.0
    %3039 = vmatpush.msra.mxu0 0.0
    %3040 = vmatpush.msra.mxu0 0.0
    %3041 = vmatpush.msra.mxu0 0.0
    %3042 = vmatpush.msra.mxu0 0.0
    %v3043 = vand.u32 %v447, 4294901760
    %3044 = vmatpush.msra.mxu0 %v3043
    %v3045 = vand.u32 %v446, 4294901760
    %3046 = vmatpush.msra.mxu0 %v3045
    %v3047 = vand.u32 %v2943, 4294901760
    %v3048 = vsub.f32 %v2943, %v3047
    %v3049 = vand.u32 %v3048, 4294901760
    %3050 = vmatmul.f32.gmra.mxu0 %v3049
    %v3051 = vpop.f32.mrf.mxu0
    %v3052 = vadd.f32 %v3027, %v3051
    %3053 = vdwg.mxu0
    %3054 = vmatpush.msra.mxu0 0.0
    %3055 = vmatpush.msra.mxu0 0.0
    %3056 = vmatpush.msra.mxu0 0.0
    %3057 = vmatpush.msra.mxu0 0.0
    %3058 = vmatpush.msra.mxu0 0.0
    %3059 = vmatpush.msra.mxu0 0.0
    %3060 = vmatpush.msra.mxu0 0.0
    %3061 = vmatpush.msra.mxu0 0.0
    %3062 = vmatpush.msra.mxu0 0.0
    %3063 = vmatpush.msra.mxu0 0.0
    %3064 = vmatpush.msra.mxu0 0.0
    %3065 = vmatpush.msra.mxu0 0.0
    %3066 = vmatpush.msra.mxu0 0.0
    %3067 = vmatpush.msra.mxu0 0.0
    %v3068 = vand.u32 %v447, 4294901760
    %v3069 = vsub.f32 %v447, %v3068
    %v3070 = vand.u32 %v3069, 4294901760
    %3071 = vmatpush.msra.mxu0 %v3070
    %v3072 = vand.u32 %v446, 4294901760
    %v3073 = vsub.f32 %v446, %v3072
    %v3074 = vand.u32 %v3073, 4294901760
    %3075 = vmatpush.msra.mxu0 %v3074
    %v3076 = vand.u32 %v2943, 4294901760
    %3077 = vmatmul.f32.gmra.mxu0 %v3076
    %v3078 = vpop.f32.mrf.mxu0
    %v3079 = vadd.f32 %v3052, %v3078
    %3080 = vdwg.mxu0
    %3081 = vmatpush.msra.mxu0 0.0
    %3082 = vmatpush.msra.mxu0 0.0
    %3083 = vmatpush.msra.mxu0 0.0
    %3084 = vmatpush.msra.mxu0 0.0
    %3085 = vmatpush.msra.mxu0 0.0
    %3086 = vmatpush.msra.mxu0 0.0
    %3087 = vmatpush.msra.mxu0 0.0
    %3088 = vmatpush.msra.mxu0 0.0
    %3089 = vmatpush.msra.mxu0 0.0
    %3090 = vmatpush.msra.mxu0 0.0
    %3091 = vmatpush.msra.mxu0 0.0
    %3092 = vmatpush.msra.mxu0 0.0
    %3093 = vmatpush.msra.mxu0 0.0
    %3094 = vmatpush.msra.mxu0 0.0
    %v3095 = vand.u32 %v447, 4294901760
    %3096 = vmatpush.msra.mxu0 %v3095
    %v3097 = vand.u32 %v446, 4294901760
    %3098 = vmatpush.msra.mxu0 %v3097
    %v3099 = vand.u32 %v2943, 4294901760
    %3100 = vmatmul.f32.gmra.mxu0 %v3099
    %v3101 = vpop.f32.mrf.mxu0
    %v3102 = vadd.f32 %v3079, %v3101
    %3103 = vdwg.mxu0
    %v3104 = vsel %vm166, %v3102, -inf
    %3105 = vmax.xlane.f32.xlu0 %v3104
    %v3106 = vpop.xlane.xlu0 %3105
    %v3107 = vsub.f32 %v3102, %v3106
    %v3108 = vmul.f32 %v3107, 1.442695
    %v3109 = vpow.pop %v3108
    %v3110 = vsel %vm166, %v3109, 0.0
    %3111 = vadd.xlane.f32.xlu0 %v3110
    %v3112 = vpop.xlane.xlu0 %3111
    %v3113 = vlog2.pop %v3112
    %v3114 = vmul.f32 %v3113, 0.6931472
    %v3115 = vsub.f32 %v3107, %v3114
    %3116 = vst [vmem:[#allocation13 + $0x4] sm:$0x1] %v3115
    %3117 = vst [vmem:[#allocation13 + $0xb] sm:$0x2] %v3115
    %v3119 = vrot.slane %v2673, 2
    %3120 = vrot.lane.b32.xlu0 %v3119, 32
    %v3121 = vpop.permute.xlu0 %3120
    %v3122 = vsel %vm482, %v3121, 0
    %3124 = vmatpush.msra.mxu0 0.0
    %3125 = vmatpush.msra.mxu0 0.0
    %3126 = vmatpush.msra.mxu0 0.0
    %3127 = vmatpush.msra.mxu0 0.0
    %3128 = vmatpush.msra.mxu0 0.0
    %3129 = vmatpush.msra.mxu0 0.0
    %3130 = vmatpush.msra.mxu0 0.0
    %3131 = vmatpush.msra.mxu0 0.0
    %3132 = vmatpush.msra.mxu0 0.0
    %3133 = vmatpush.msra.mxu0 0.0
    %3134 = vmatpush.msra.mxu0 0.0
    %3135 = vmatpush.msra.mxu0 0.0
    %3136 = vmatpush.msra.mxu0 %v434
    %3137 = vmatpush.msra.mxu0 %v433
    %3138 = vmatpush.msra.mxu0 %v432
    %3139 = vmatpush.msra.mxu0 %v431
    %3140 = vmatmul.f32.gmra.mxu0 %v3122
    %v3141 = vpop.f32.mrf.mxu0
    %v3142 = vadd.f32 0.0, %v3141
    %3143 = vdwg.mxu0
    %v3145 = vrot.slane %v3142, 4
    %v3147 = vadd.f32 %v480, %v3145
    %v3148 = vxor.u32 %v3147, 2147483648
    %v3149 = vmul.f32 %v3148, 1.442695
    %v3150 = vpow.pop %v3149
    %v3151 = vadd.f32 %v3150, 1.0
    %v3152 = vrcp.pop %v3151
    %v3153 = vmul.f32 %v3151, %v3152
    %v3154 = vsub.f32 1.0, %v3153
    %v3155 = vmul.f32 %v3152, %v3154
    %v3156 = vadd.f32 %v3152, %v3155
    %vm3157 = vweird.f32 %v3151
    %vm3158 = vweird.f32 %v3152
    %vm3159 = vmor %vm3157, %vm3158
    %v3160 = vsel %vm3159, %v3152, %v3156
    %v3161 = vand.u32 2147483647, %v3151
    %vm3162 = vcmp.eq.f32.partialorder %v3161, 8.507059e+37
    %v3163 = vand.u32 %v3151, 2147483648
    %v3164 = vor.u32 1.1754944e-38, %v3163
    %v3165 = vsel %vm3162, %v3164, %v3160
    %v3166 = vmul.f32 1.0, %v3165
    %v3167 = vtanh.pop %v3147
    %v3169 = vrot.slane %v2667, 6
    %v3171 = vmul.f32 %v3166, %v3169
    %3173 = vrot.lane.b32.xlu0 %v3167, 64
    %v3174 = vpop.permute.xlu0 %3173
    %v3176 = vmul.f32 %v3166, %v3174
    %3178 = vrot.lane.b32.xlu0 %v3176, 32
    %v3179 = vpop.permute.xlu0 %3178
    %v3181 = vadd.f32 %v3171, %v3179
    %v3182 = vtanh.pop %v3181
    %3184 = vrot.lane.b32.xlu0 %v3182, 64
    %v3185 = vpop.permute.xlu0 %3184
    %v3187 = vmul.f32 %v3166, %v3185
    %3188 = vmatpush.msra.mxu0 0.0
    %3189 = vmatpush.msra.mxu0 0.0
    %3190 = vmatpush.msra.mxu0 0.0
    %3191 = vmatpush.msra.mxu0 0.0
    %3192 = vmatpush.msra.mxu0 0.0
    %3193 = vmatpush.msra.mxu0 0.0
    %3194 = vmatpush.msra.mxu0 0.0
    %3195 = vmatpush.msra.mxu0 0.0
    %3196 = vmatpush.msra.mxu0 0.0
    %3197 = vmatpush.msra.mxu0 0.0
    %3198 = vmatpush.msra.mxu0 0.0
    %3199 = vmatpush.msra.mxu0 0.0
    %3200 = vmatpush.msra.mxu0 %v430
    %3201 = vmatpush.msra.mxu0 %v429
    %3202 = vmatpush.msra.mxu0 %v428
    %3203 = vmatpush.msra.mxu0 %v427
    %3204 = vmatmul.f32.gmra.mxu0 %v3122
    %v3205 = vpop.f32.mrf.mxu0
    %v3206 = vadd.f32 %v614, %v3205
    %3207 = vdwg.mxu0
    %3208 = vmatpush.msra.mxu0 0.0
    %3209 = vmatpush.msra.mxu0 0.0
    %3210 = vmatpush.msra.mxu0 0.0
    %3211 = vmatpush.msra.mxu0 0.0
    %3212 = vmatpush.msra.mxu0 0.0
    %3213 = vmatpush.msra.mxu0 0.0
    %3214 = vmatpush.msra.mxu0 0.0
    %3215 = vmatpush.msra.mxu0 0.0
    %3216 = vmatpush.msra.mxu0 0.0
    %3217 = vmatpush.msra.mxu0 0.0
    %3218 = vmatpush.msra.mxu0 0.0
    %3219 = vmatpush.msra.mxu0 0.0
    %3220 = vmatpush.msra.mxu0 %v438
    %3221 = vmatpush.msra.mxu0 %v437
    %3222 = vmatpush.msra.mxu0 %v436
    %3223 = vmatpush.msra.mxu0 %v435
    %3224 = vmatmul.f32.gmra.mxu0 %v2755
    %v3225 = vpop.f32.mrf.mxu0
    %v3226 = vadd.f32 0.0, %v3225
    %3227 = vdwg.mxu0
    %v3228 = vadd.f32 %v3206, %v3226
    %v3229 = vxor.u32 %v3228, 2147483648
    %v3230 = vmul.f32 %v3229, 1.442695
    %v3231 = vpow.pop %v3230
    %v3232 = vadd.f32 %v3231, 1.0
    %v3233 = vrcp.pop %v3232
    %v3234 = vmul.f32 %v3232, %v3233
    %v3235 = vsub.f32 1.0, %v3234
    %v3236 = vmul.f32 %v3233, %v3235
    %v3237 = vadd.f32 %v3233, %v3236
    %vm3238 = vweird.f32 %v3232
    %vm3239 = vweird.f32 %v3233
    %vm3240 = vmor %vm3238, %vm3239
    %v3241 = vsel %vm3240, %v3233, %v3237
    %v3242 = vand.u32 2147483647, %v3232
    %vm3243 = vcmp.eq.f32.partialorder %v3242, 8.507059e+37
    %v3244 = vand.u32 %v3232, 2147483648
    %v3245 = vor.u32 1.1754944e-38, %v3244
    %v3246 = vsel %vm3243, %v3245, %v3241
    %v3247 = vmul.f32 1.0, %v3246
    %v3248 = vtanh.pop %v3228
    %v3249 = vmul.f32 %v3247, %v2745
    %3251 = vrot.lane.b32.xlu0 %v3248, 64
    %v3252 = vpop.permute.xlu0 %3251
    %v3254 = vmul.f32 %v3247, %v3252
    %3256 = vrot.lane.b32.xlu0 %v3254, 32
    %v3257 = vpop.permute.xlu0 %3256
    %v3259 = vadd.f32 %v3249, %v3257
    %v3260 = vtanh.pop %v3259
    %3262 = vrot.lane.b32.xlu0 %v3260, 64
    %v3263 = vpop.permute.xlu0 %3262
    %v3265 = vmul.f32 %v3247, %v3263
    %3267 = vrot.lane.b32.xlu0 %v3265, 32
    %v3268 = vpop.permute.xlu0 %3267
    %v3269 = vsel %vm482, %v3268, 0
    %3271 = vmatpush.msra.mxu0 0.0
    %3272 = vmatpush.msra.mxu0 0.0
    %3273 = vmatpush.msra.mxu0 0.0
    %3274 = vmatpush.msra.mxu0 0.0
    %3275 = vmatpush.msra.mxu0 0.0
    %3276 = vmatpush.msra.mxu0 0.0
    %3277 = vmatpush.msra.mxu0 0.0
    %3278 = vmatpush.msra.mxu0 0.0
    %3279 = vmatpush.msra.mxu0 0.0
    %3280 = vmatpush.msra.mxu0 0.0
    %3281 = vmatpush.msra.mxu0 0.0
    %3282 = vmatpush.msra.mxu0 0.0
    %v3283 = vand.u32 %v444, 4294901760
    %3284 = vmatpush.msra.mxu0 %v3283
    %v3285 = vand.u32 %v443, 4294901760
    %3286 = vmatpush.msra.mxu0 %v3285
    %v3287 = vand.u32 %v442, 4294901760
    %3288 = vmatpush.msra.mxu0 %v3287
    %v3289 = vand.u32 %v441, 4294901760
    %3290 = vmatpush.msra.mxu0 %v3289
    %v3291 = vand.u32 %v3269, 4294901760
    %v3292 = vsub.f32 %v3269, %v3291
    %v3293 = vand.u32 %v3292, 4294901760
    %v3294 = vsub.f32 %v3292, %v3293
    %v3295 = vand.u32 %v3294, 4294901760
    %3296 = vmatmul.f32.gmra.mxu0 %v3295
    %v3297 = vpop.f32.mrf.mxu0
    %v3298 = vadd.f32 %v695, %v3297
    %3299 = vdwg.mxu0
    %3300 = vmatpush.msra.mxu0 0.0
    %3301 = vmatpush.msra.mxu0 0.0
    %3302 = vmatpush.msra.mxu0 0.0
    %3303 = vmatpush.msra.mxu0 0.0
    %3304 = vmatpush.msra.mxu0 0.0
    %3305 = vmatpush.msra.mxu0 0.0
    %3306 = vmatpush.msra.mxu0 0.0
    %3307 = vmatpush.msra.mxu0 0.0
    %3308 = vmatpush.msra.mxu0 0.0
    %3309 = vmatpush.msra.mxu0 0.0
    %3310 = vmatpush.msra.mxu0 0.0
    %3311 = vmatpush.msra.mxu0 0.0
    %v3312 = vand.u32 %v444, 4294901760
    %v3313 = vsub.f32 %v444, %v3312
    %v3314 = vand.u32 %v3313, 4294901760
    %v3315 = vsub.f32 %v3313, %v3314
    %v3316 = vand.u32 %v3315, 4294901760
    %3317 = vmatpush.msra.mxu0 %v3316
    %v3318 = vand.u32 %v443, 4294901760
    %v3319 = vsub.f32 %v443, %v3318
    %v3320 = vand.u32 %v3319, 4294901760
    %v3321 = vsub.f32 %v3319, %v3320
    %v3322 = vand.u32 %v3321, 4294901760
    %3323 = vmatpush.msra.mxu0 %v3322
    %v3324 = vand.u32 %v442, 4294901760
    %v3325 = vsub.f32 %v442, %v3324
    %v3326 = vand.u32 %v3325, 4294901760
    %v3327 = vsub.f32 %v3325, %v3326
    %v3328 = vand.u32 %v3327, 4294901760
    %3329 = vmatpush.msra.mxu0 %v3328
    %v3330 = vand.u32 %v441, 4294901760
    %v3331 = vsub.f32 %v441, %v3330
    %v3332 = vand.u32 %v3331, 4294901760
    %v3333 = vsub.f32 %v3331, %v3332
    %v3334 = vand.u32 %v3333, 4294901760
    %3335 = vmatpush.msra.mxu0 %v3334
    %v3336 = vand.u32 %v3269, 4294901760
    %3337 = vmatmul.f32.gmra.mxu0 %v3336
    %v3338 = vpop.f32.mrf.mxu0
    %v3339 = vadd.f32 %v3298, %v3338
    %3340 = vdwg.mxu0
    %3341 = vmatpush.msra.mxu0 0.0
    %3342 = vmatpush.msra.mxu0 0.0
    %3343 = vmatpush.msra.mxu0 0.0
    %3344 = vmatpush.msra.mxu0 0.0
    %3345 = vmatpush.msra.mxu0 0.0
    %3346 = vmatpush.msra.mxu0 0.0
    %3347 = vmatpush.msra.mxu0 0.0
    %3348 = vmatpush.msra.mxu0 0.0
    %3349 = vmatpush.msra.mxu0 0.0
    %3350 = vmatpush.msra.mxu0 0.0
    %3351 = vmatpush.msra.mxu0 0.0
    %3352 = vmatpush.msra.mxu0 0.0
    %v3353 = vand.u32 %v444, 4294901760
    %v3354 = vsub.f32 %v444, %v3353
    %3355 = vmatpush.msra.mxu0 %v3354
    %v3356 = vand.u32 %v443, 4294901760
    %v3357 = vsub.f32 %v443, %v3356
    %3358 = vmatpush.msra.mxu0 %v3357
    %v3359 = vand.u32 %v442, 4294901760
    %v3360 = vsub.f32 %v442, %v3359
    %3361 = vmatpush.msra.mxu0 %v3360
    %v3362 = vand.u32 %v441, 4294901760
    %v3363 = vsub.f32 %v441, %v3362
    %3364 = vmatpush.msra.mxu0 %v3363
    %v3365 = vand.u32 %v3269, 4294901760
    %v3366 = vsub.f32 %v3269, %v3365
    %3367 = vmatmul.f32.gmra.mxu0 %v3366
    %v3368 = vpop.f32.mrf.mxu0
    %v3369 = vadd.f32 %v3339, %v3368
    %3370 = vdwg.mxu0
    %3371 = vmatpush.msra.mxu0 0.0
    %3372 = vmatpush.msra.mxu0 0.0
    %3373 = vmatpush.msra.mxu0 0.0
    %3374 = vmatpush.msra.mxu0 0.0
    %3375 = vmatpush.msra.mxu0 0.0
    %3376 = vmatpush.msra.mxu0 0.0
    %3377 = vmatpush.msra.mxu0 0.0
    %3378 = vmatpush.msra.mxu0 0.0
    %3379 = vmatpush.msra.mxu0 0.0
    %3380 = vmatpush.msra.mxu0 0.0
    %3381 = vmatpush.msra.mxu0 0.0
    %3382 = vmatpush.msra.mxu0 0.0
    %v3383 = vand.u32 %v444, 4294901760
    %3384 = vmatpush.msra.mxu0 %v3383
    %v3385 = vand.u32 %v443, 4294901760
    %3386 = vmatpush.msra.mxu0 %v3385
    %v3387 = vand.u32 %v442, 4294901760
    %3388 = vmatpush.msra.mxu0 %v3387
    %v3389 = vand.u32 %v441, 4294901760
    %3390 = vmatpush.msra.mxu0 %v3389
    %v3391 = vand.u32 %v3269, 4294901760
    %v3392 = vsub.f32 %v3269, %v3391
    %v3393 = vand.u32 %v3392, 4294901760
    %3394 = vmatmul.f32.gmra.mxu0 %v3393
    %v3395 = vpop.f32.mrf.mxu0
    %v3396 = vadd.f32 %v3369, %v3395
    %3397 = vdwg.mxu0
    %3398 = vmatpush.msra.mxu0 0.0
    %3399 = vmatpush.msra.mxu0 0.0
    %3400 = vmatpush.msra.mxu0 0.0
    %3401 = vmatpush.msra.mxu0 0.0
    %3402 = vmatpush.msra.mxu0 0.0
    %3403 = vmatpush.msra.mxu0 0.0
    %3404 = vmatpush.msra.mxu0 0.0
    %3405 = vmatpush.msra.mxu0 0.0
    %3406 = vmatpush.msra.mxu0 0.0
    %3407 = vmatpush.msra.mxu0 0.0
    %3408 = vmatpush.msra.mxu0 0.0
    %3409 = vmatpush.msra.mxu0 0.0
    %v3410 = vand.u32 %v444, 4294901760
    %v3411 = vsub.f32 %v444, %v3410
    %v3412 = vand.u32 %v3411, 4294901760
    %3413 = vmatpush.msra.mxu0 %v3412
    %v3414 = vand.u32 %v443, 4294901760
    %v3415 = vsub.f32 %v443, %v3414
    %v3416 = vand.u32 %v3415, 4294901760
    %3417 = vmatpush.msra.mxu0 %v3416
    %v3418 = vand.u32 %v442, 4294901760
    %v3419 = vsub.f32 %v442, %v3418
    %v3420 = vand.u32 %v3419, 4294901760
    %3421 = vmatpush.msra.mxu0 %v3420
    %v3422 = vand.u32 %v441, 4294901760
    %v3423 = vsub.f32 %v441, %v3422
    %v3424 = vand.u32 %v3423, 4294901760
    %3425 = vmatpush.msra.mxu0 %v3424
    %v3426 = vand.u32 %v3269, 4294901760
    %3427 = vmatmul.f32.gmra.mxu0 %v3426
    %v3428 = vpop.f32.mrf.mxu0
    %v3429 = vadd.f32 %v3396, %v3428
    %3430 = vdwg.mxu0
    %3431 = vmatpush.msra.mxu0 0.0
    %3432 = vmatpush.msra.mxu0 0.0
    %3433 = vmatpush.msra.mxu0 0.0
    %3434 = vmatpush.msra.mxu0 0.0
    %3435 = vmatpush.msra.mxu0 0.0
    %3436 = vmatpush.msra.mxu0 0.0
    %3437 = vmatpush.msra.mxu0 0.0
    %3438 = vmatpush.msra.mxu0 0.0
    %3439 = vmatpush.msra.mxu0 0.0
    %3440 = vmatpush.msra.mxu0 0.0
    %3441 = vmatpush.msra.mxu0 0.0
    %3442 = vmatpush.msra.mxu0 0.0
    %v3443 = vand.u32 %v444, 4294901760
    %3444 = vmatpush.msra.mxu0 %v3443
    %v3445 = vand.u32 %v443, 4294901760
    %3446 = vmatpush.msra.mxu0 %v3445
    %v3447 = vand.u32 %v442, 4294901760
    %3448 = vmatpush.msra.mxu0 %v3447
    %v3449 = vand.u32 %v441, 4294901760
    %3450 = vmatpush.msra.mxu0 %v3449
    %v3451 = vand.u32 %v3269, 4294901760
    %3452 = vmatmul.f32.gmra.mxu0 %v3451
    %v3453 = vpop.f32.mrf.mxu0
    %v3454 = vadd.f32 %v3429, %v3453
    %3455 = vdwg.mxu0
    %v3457 = vsel %vm452, %v3454, 0
    %3459 = vmatpush.msra.mxu0 0.0
    %3460 = vmatpush.msra.mxu0 0.0
    %3461 = vmatpush.msra.mxu0 0.0
    %3462 = vmatpush.msra.mxu0 0.0
    %3463 = vmatpush.msra.mxu0 0.0
    %3464 = vmatpush.msra.mxu0 0.0
    %3465 = vmatpush.msra.mxu0 0.0
    %3466 = vmatpush.msra.mxu0 0.0
    %3467 = vmatpush.msra.mxu0 0.0
    %3468 = vmatpush.msra.mxu0 0.0
    %3469 = vmatpush.msra.mxu0 0.0
    %3470 = vmatpush.msra.mxu0 0.0
    %3471 = vmatpush.msra.mxu0 0.0
    %3472 = vmatpush.msra.mxu0 0.0
    %v3473 = vand.u32 %v447, 4294901760
    %3474 = vmatpush.msra.mxu0 %v3473
    %v3475 = vand.u32 %v446, 4294901760
    %3476 = vmatpush.msra.mxu0 %v3475
    %v3477 = vand.u32 %v3457, 4294901760
    %v3478 = vsub.f32 %v3457, %v3477
    %v3479 = vand.u32 %v3478, 4294901760
    %v3480 = vsub.f32 %v3478, %v3479
    %v3481 = vand.u32 %v3480, 4294901760
    %3482 = vmatmul.f32.gmra.mxu0 %v3481
    %v3483 = vpop.f32.mrf.mxu0
    %v3484 = vadd.f32 %v888, %v3483
    %3485 = vdwg.mxu0
    %3486 = vmatpush.msra.mxu0 0.0
    %3487 = vmatpush.msra.mxu0 0.0
    %3488 = vmatpush.msra.mxu0 0.0
    %3489 = vmatpush.msra.mxu0 0.0
    %3490 = vmatpush.msra.mxu0 0.0
    %3491 = vmatpush.msra.mxu0 0.0
    %3492 = vmatpush.msra.mxu0 0.0
    %3493 = vmatpush.msra.mxu0 0.0
    %3494 = vmatpush.msra.mxu0 0.0
    %3495 = vmatpush.msra.mxu0 0.0
    %3496 = vmatpush.msra.mxu0 0.0
    %3497 = vmatpush.msra.mxu0 0.0
    %3498 = vmatpush.msra.mxu0 0.0
    %3499 = vmatpush.msra.mxu0 0.0
    %v3500 = vand.u32 %v447, 4294901760
    %v3501 = vsub.f32 %v447, %v3500
    %v3502 = vand.u32 %v3501, 4294901760
    %v3503 = vsub.f32 %v3501, %v3502
    %v3504 = vand.u32 %v3503, 4294901760
    %3505 = vmatpush.msra.mxu0 %v3504
    %v3506 = vand.u32 %v446, 4294901760
    %v3507 = vsub.f32 %v446, %v3506
    %v3508 = vand.u32 %v3507, 4294901760
    %v3509 = vsub.f32 %v3507, %v3508
    %v3510 = vand.u32 %v3509, 4294901760
    %3511 = vmatpush.msra.mxu0 %v3510
    %v3512 = vand.u32 %v3457, 4294901760
    %3513 = vmatmul.f32.gmra.mxu0 %v3512
    %v3514 = vpop.f32.mrf.mxu0
    %v3515 = vadd.f32 %v3484, %v3514
    %3516 = vdwg.mxu0
    %3517 = vmatpush.msra.mxu0 0.0
    %3518 = vmatpush.msra.mxu0 0.0
    %3519 = vmatpush.msra.mxu0 0.0
    %3520 = vmatpush.msra.mxu0 0.0
    %3521 = vmatpush.msra.mxu0 0.0
    %3522 = vmatpush.msra.mxu0 0.0
    %3523 = vmatpush.msra.mxu0 0.0
    %3524 = vmatpush.msra.mxu0 0.0
    %3525 = vmatpush.msra.mxu0 0.0
    %3526 = vmatpush.msra.mxu0 0.0
    %3527 = vmatpush.msra.mxu0 0.0
    %3528 = vmatpush.msra.mxu0 0.0
    %3529 = vmatpush.msra.mxu0 0.0
    %3530 = vmatpush.msra.mxu0 0.0
    %v3531 = vand.u32 %v447, 4294901760
    %v3532 = vsub.f32 %v447, %v3531
    %3533 = vmatpush.msra.mxu0 %v3532
    %v3534 = vand.u32 %v446, 4294901760
    %v3535 = vsub.f32 %v446, %v3534
    %3536 = vmatpush.msra.mxu0 %v3535
    %v3537 = vand.u32 %v3457, 4294901760
    %v3538 = vsub.f32 %v3457, %v3537
    %3539 = vmatmul.f32.gmra.mxu0 %v3538
    %v3540 = vpop.f32.mrf.mxu0
    %v3541 = vadd.f32 %v3515, %v3540
    %3542 = vdwg.mxu0
    %3543 = vmatpush.msra.mxu0 0.0
    %3544 = vmatpush.msra.mxu0 0.0
    %3545 = vmatpush.msra.mxu0 0.0
    %3546 = vmatpush.msra.mxu0 0.0
    %3547 = vmatpush.msra.mxu0 0.0
    %3548 = vmatpush.msra.mxu0 0.0
    %3549 = vmatpush.msra.mxu0 0.0
    %3550 = vmatpush.msra.mxu0 0.0
    %3551 = vmatpush.msra.mxu0 0.0
    %3552 = vmatpush.msra.mxu0 0.0
    %3553 = vmatpush.msra.mxu0 0.0
    %3554 = vmatpush.msra.mxu0 0.0
    %3555 = vmatpush.msra.mxu0 0.0
    %3556 = vmatpush.msra.mxu0 0.0
    %v3557 = vand.u32 %v447, 4294901760
    %3558 = vmatpush.msra.mxu0 %v3557
    %v3559 = vand.u32 %v446, 4294901760
    %3560 = vmatpush.msra.mxu0 %v3559
    %v3561 = vand.u32 %v3457, 4294901760
    %v3562 = vsub.f32 %v3457, %v3561
    %v3563 = vand.u32 %v3562, 4294901760
    %3564 = vmatmul.f32.gmra.mxu0 %v3563
    %v3565 = vpop.f32.mrf.mxu0
    %v3566 = vadd.f32 %v3541, %v3565
    %3567 = vdwg.mxu0
    %3568 = vmatpush.msra.mxu0 0.0
    %3569 = vmatpush.msra.mxu0 0.0
    %3570 = vmatpush.msra.mxu0 0.0
    %3571 = vmatpush.msra.mxu0 0.0
    %3572 = vmatpush.msra.mxu0 0.0
    %3573 = vmatpush.msra.mxu0 0.0
    %3574 = vmatpush.msra.mxu0 0.0
    %3575 = vmatpush.msra.mxu0 0.0
    %3576 = vmatpush.msra.mxu0 0.0
    %3577 = vmatpush.msra.mxu0 0.0
    %3578 = vmatpush.msra.mxu0 0.0
    %3579 = vmatpush.msra.mxu0 0.0
    %3580 = vmatpush.msra.mxu0 0.0
    %3581 = vmatpush.msra.mxu0 0.0
    %v3582 = vand.u32 %v447, 4294901760
    %v3583 = vsub.f32 %v447, %v3582
    %v3584 = vand.u32 %v3583, 4294901760
    %3585 = vmatpush.msra.mxu0 %v3584
    %v3586 = vand.u32 %v446, 4294901760
    %v3587 = vsub.f32 %v446, %v3586
    %v3588 = vand.u32 %v3587, 4294901760
    %3589 = vmatpush.msra.mxu0 %v3588
    %v3590 = vand.u32 %v3457, 4294901760
    %3591 = vmatmul.f32.gmra.mxu0 %v3590
    %v3592 = vpop.f32.mrf.mxu0
    %v3593 = vadd.f32 %v3566, %v3592
    %3594 = vdwg.mxu0
    %3595 = vmatpush.msra.mxu0 0.0
    %3596 = vmatpush.msra.mxu0 0.0
    %3597 = vmatpush.msra.mxu0 0.0
    %3598 = vmatpush.msra.mxu0 0.0
    %3599 = vmatpush.msra.mxu0 0.0
    %3600 = vmatpush.msra.mxu0 0.0
    %3601 = vmatpush.msra.mxu0 0.0
    %3602 = vmatpush.msra.mxu0 0.0
    %3603 = vmatpush.msra.mxu0 0.0
    %3604 = vmatpush.msra.mxu0 0.0
    %3605 = vmatpush.msra.mxu0 0.0
    %3606 = vmatpush.msra.mxu0 0.0
    %3607 = vmatpush.msra.mxu0 0.0
    %3608 = vmatpush.msra.mxu0 0.0
    %v3609 = vand.u32 %v447, 4294901760
    %3610 = vmatpush.msra.mxu0 %v3609
    %v3611 = vand.u32 %v446, 4294901760
    %3612 = vmatpush.msra.mxu0 %v3611
    %v3613 = vand.u32 %v3457, 4294901760
    %3614 = vmatmul.f32.gmra.mxu0 %v3613
    %v3615 = vpop.f32.mrf.mxu0
    %v3616 = vadd.f32 %v3593, %v3615
    %3617 = vdwg.mxu0
    %v3618 = vsel %vm166, %v3616, -inf
    %3619 = vmax.xlane.f32.xlu0 %v3618
    %v3620 = vpop.xlane.xlu0 %3619
    %v3621 = vsub.f32 %v3616, %v3620
    %v3622 = vmul.f32 %v3621, 1.442695
    %v3623 = vpow.pop %v3622
    %v3624 = vsel %vm166, %v3623, 0.0
    %3625 = vadd.xlane.f32.xlu0 %v3624
    %v3626 = vpop.xlane.xlu0 %3625
    %v3627 = vlog2.pop %v3626
    %v3628 = vmul.f32 %v3627, 0.6931472
    %v3629 = vsub.f32 %v3621, %v3628
    %3630 = vst [vmem:[#allocation13 + $0x5] sm:$0x1] %v3629
    %3631 = vst [vmem:[#allocation13 + $0xc] sm:$0x2] %v3629
    %v3633 = vrot.slane %v3187, 4
    %3634 = vrot.lane.b32.xlu0 %v3633, 32
    %v3635 = vpop.permute.xlu0 %3634
    %v3636 = vsel %vm482, %v3635, 0
    %3638 = vmatpush.msra.mxu0 0.0
    %3639 = vmatpush.msra.mxu0 0.0
    %3640 = vmatpush.msra.mxu0 0.0
    %3641 = vmatpush.msra.mxu0 0.0
    %3642 = vmatpush.msra.mxu0 0.0
    %3643 = vmatpush.msra.mxu0 0.0
    %3644 = vmatpush.msra.mxu0 0.0
    %3645 = vmatpush.msra.mxu0 0.0
    %3646 = vmatpush.msra.mxu0 0.0
    %3647 = vmatpush.msra.mxu0 0.0
    %3648 = vmatpush.msra.mxu0 0.0
    %3649 = vmatpush.msra.mxu0 0.0
    %3650 = vmatpush.msra.mxu0 %v434
    %3651 = vmatpush.msra.mxu0 %v433
    %3652 = vmatpush.msra.mxu0 %v432
    %3653 = vmatpush.msra.mxu0 %v431
    %3654 = vmatmul.f32.gmra.mxu0 %v3636
    %v3655 = vpop.f32.mrf.mxu0
    %v3656 = vadd.f32 0.0, %v3655
    %3657 = vdwg.mxu0
    %v3659 = vrot.slane %v3656, 2
    %v3661 = vadd.f32 %v480, %v3659
    %v3662 = vxor.u32 %v3661, 2147483648
    %v3663 = vmul.f32 %v3662, 1.442695
    %v3664 = vpow.pop %v3663
    %v3665 = vadd.f32 %v3664, 1.0
    %v3666 = vrcp.pop %v3665
    %v3667 = vmul.f32 %v3665, %v3666
    %v3668 = vsub.f32 1.0, %v3667
    %v3669 = vmul.f32 %v3666, %v3668
    %v3670 = vadd.f32 %v3666, %v3669
    %vm3671 = vweird.f32 %v3665
    %vm3672 = vweird.f32 %v3666
    %vm3673 = vmor %vm3671, %vm3672
    %v3674 = vsel %vm3673, %v3666, %v3670
    %v3675 = vand.u32 2147483647, %v3665
    %vm3676 = vcmp.eq.f32.partialorder %v3675, 8.507059e+37
    %v3677 = vand.u32 %v3665, 2147483648
    %v3678 = vor.u32 1.1754944e-38, %v3677
    %v3679 = vsel %vm3676, %v3678, %v3674
    %v3680 = vmul.f32 1.0, %v3679
    %v3681 = vtanh.pop %v3661
    %v3683 = vrot.slane %v3181, 6
    %v3685 = vmul.f32 %v3680, %v3683
    %3687 = vrot.lane.b32.xlu0 %v3681, 64
    %v3688 = vpop.permute.xlu0 %3687
    %v3690 = vmul.f32 %v3680, %v3688
    %3692 = vrot.lane.b32.xlu0 %v3690, 32
    %v3693 = vpop.permute.xlu0 %3692
    %v3695 = vadd.f32 %v3685, %v3693
    %v3696 = vtanh.pop %v3695
    %3698 = vrot.lane.b32.xlu0 %v3696, 64
    %v3699 = vpop.permute.xlu0 %3698
    %v3701 = vmul.f32 %v3680, %v3699
    %3702 = vmatpush.msra.mxu0 0.0
    %3703 = vmatpush.msra.mxu0 0.0
    %3704 = vmatpush.msra.mxu0 0.0
    %3705 = vmatpush.msra.mxu0 0.0
    %3706 = vmatpush.msra.mxu0 0.0
    %3707 = vmatpush.msra.mxu0 0.0
    %3708 = vmatpush.msra.mxu0 0.0
    %3709 = vmatpush.msra.mxu0 0.0
    %3710 = vmatpush.msra.mxu0 0.0
    %3711 = vmatpush.msra.mxu0 0.0
    %3712 = vmatpush.msra.mxu0 0.0
    %3713 = vmatpush.msra.mxu0 0.0
    %3714 = vmatpush.msra.mxu0 %v430
    %3715 = vmatpush.msra.mxu0 %v429
    %3716 = vmatpush.msra.mxu0 %v428
    %3717 = vmatpush.msra.mxu0 %v427
    %3718 = vmatmul.f32.gmra.mxu0 %v3636
    %v3719 = vpop.f32.mrf.mxu0
    %v3720 = vadd.f32 %v614, %v3719
    %3721 = vdwg.mxu0
    %3722 = vmatpush.msra.mxu0 0.0
    %3723 = vmatpush.msra.mxu0 0.0
    %3724 = vmatpush.msra.mxu0 0.0
    %3725 = vmatpush.msra.mxu0 0.0
    %3726 = vmatpush.msra.mxu0 0.0
    %3727 = vmatpush.msra.mxu0 0.0
    %3728 = vmatpush.msra.mxu0 0.0
    %3729 = vmatpush.msra.mxu0 0.0
    %3730 = vmatpush.msra.mxu0 0.0
    %3731 = vmatpush.msra.mxu0 0.0
    %3732 = vmatpush.msra.mxu0 0.0
    %3733 = vmatpush.msra.mxu0 0.0
    %3734 = vmatpush.msra.mxu0 %v438
    %3735 = vmatpush.msra.mxu0 %v437
    %3736 = vmatpush.msra.mxu0 %v436
    %3737 = vmatpush.msra.mxu0 %v435
    %3738 = vmatmul.f32.gmra.mxu0 %v3269
    %v3739 = vpop.f32.mrf.mxu0
    %v3740 = vadd.f32 0.0, %v3739
    %3741 = vdwg.mxu0
    %v3742 = vadd.f32 %v3720, %v3740
    %v3743 = vxor.u32 %v3742, 2147483648
    %v3744 = vmul.f32 %v3743, 1.442695
    %v3745 = vpow.pop %v3744
    %v3746 = vadd.f32 %v3745, 1.0
    %v3747 = vrcp.pop %v3746
    %v3748 = vmul.f32 %v3746, %v3747
    %v3749 = vsub.f32 1.0, %v3748
    %v3750 = vmul.f32 %v3747, %v3749
    %v3751 = vadd.f32 %v3747, %v3750
    %vm3752 = vweird.f32 %v3746
    %vm3753 = vweird.f32 %v3747
    %vm3754 = vmor %vm3752, %vm3753
    %v3755 = vsel %vm3754, %v3747, %v3751
    %v3756 = vand.u32 2147483647, %v3746
    %vm3757 = vcmp.eq.f32.partialorder %v3756, 8.507059e+37
    %v3758 = vand.u32 %v3746, 2147483648
    %v3759 = vor.u32 1.1754944e-38, %v3758
    %v3760 = vsel %vm3757, %v3759, %v3755
    %v3761 = vmul.f32 1.0, %v3760
    %v3762 = vtanh.pop %v3742
    %v3763 = vmul.f32 %v3761, %v3259
    %3765 = vrot.lane.b32.xlu0 %v3762, 64
    %v3766 = vpop.permute.xlu0 %3765
    %v3768 = vmul.f32 %v3761, %v3766
    %3770 = vrot.lane.b32.xlu0 %v3768, 32
    %v3771 = vpop.permute.xlu0 %3770
    %v3773 = vadd.f32 %v3763, %v3771
    %v3774 = vtanh.pop %v3773
    %3776 = vrot.lane.b32.xlu0 %v3774, 64
    %v3777 = vpop.permute.xlu0 %3776
    %v3779 = vmul.f32 %v3761, %v3777
    %3781 = vrot.lane.b32.xlu0 %v3779, 32
    %v3782 = vpop.permute.xlu0 %3781
    %v3783 = vsel %vm482, %v3782, 0
    %3785 = vmatpush.msra.mxu0 0.0
    %3786 = vmatpush.msra.mxu0 0.0
    %3787 = vmatpush.msra.mxu0 0.0
    %3788 = vmatpush.msra.mxu0 0.0
    %3789 = vmatpush.msra.mxu0 0.0
    %3790 = vmatpush.msra.mxu0 0.0
    %3791 = vmatpush.msra.mxu0 0.0
    %3792 = vmatpush.msra.mxu0 0.0
    %3793 = vmatpush.msra.mxu0 0.0
    %3794 = vmatpush.msra.mxu0 0.0
    %3795 = vmatpush.msra.mxu0 0.0
    %3796 = vmatpush.msra.mxu0 0.0
    %v3797 = vand.u32 %v444, 4294901760
    %3798 = vmatpush.msra.mxu0 %v3797
    %v3799 = vand.u32 %v443, 4294901760
    %3800 = vmatpush.msra.mxu0 %v3799
    %v3801 = vand.u32 %v442, 4294901760
    %3802 = vmatpush.msra.mxu0 %v3801
    %v3803 = vand.u32 %v441, 4294901760
    %3804 = vmatpush.msra.mxu0 %v3803
    %v3805 = vand.u32 %v3783, 4294901760
    %v3806 = vsub.f32 %v3783, %v3805
    %v3807 = vand.u32 %v3806, 4294901760
    %v3808 = vsub.f32 %v3806, %v3807
    %v3809 = vand.u32 %v3808, 4294901760
    %3810 = vmatmul.f32.gmra.mxu0 %v3809
    %v3811 = vpop.f32.mrf.mxu0
    %v3812 = vadd.f32 %v695, %v3811
    %3813 = vdwg.mxu0
    %3814 = vmatpush.msra.mxu0 0.0
    %3815 = vmatpush.msra.mxu0 0.0
    %3816 = vmatpush.msra.mxu0 0.0
    %3817 = vmatpush.msra.mxu0 0.0
    %3818 = vmatpush.msra.mxu0 0.0
    %3819 = vmatpush.msra.mxu0 0.0
    %3820 = vmatpush.msra.mxu0 0.0
    %3821 = vmatpush.msra.mxu0 0.0
    %3822 = vmatpush.msra.mxu0 0.0
    %3823 = vmatpush.msra.mxu0 0.0
    %3824 = vmatpush.msra.mxu0 0.0
    %3825 = vmatpush.msra.mxu0 0.0
    %v3826 = vand.u32 %v444, 4294901760
    %v3827 = vsub.f32 %v444, %v3826
    %v3828 = vand.u32 %v3827, 4294901760
    %v3829 = vsub.f32 %v3827, %v3828
    %v3830 = vand.u32 %v3829, 4294901760
    %3831 = vmatpush.msra.mxu0 %v3830
    %v3832 = vand.u32 %v443, 4294901760
    %v3833 = vsub.f32 %v443, %v3832
    %v3834 = vand.u32 %v3833, 4294901760
    %v3835 = vsub.f32 %v3833, %v3834
    %v3836 = vand.u32 %v3835, 4294901760
    %3837 = vmatpush.msra.mxu0 %v3836
    %v3838 = vand.u32 %v442, 4294901760
    %v3839 = vsub.f32 %v442, %v3838
    %v3840 = vand.u32 %v3839, 4294901760
    %v3841 = vsub.f32 %v3839, %v3840
    %v3842 = vand.u32 %v3841, 4294901760
    %3843 = vmatpush.msra.mxu0 %v3842
    %v3844 = vand.u32 %v441, 4294901760
    %v3845 = vsub.f32 %v441, %v3844
    %v3846 = vand.u32 %v3845, 4294901760
    %v3847 = vsub.f32 %v3845, %v3846
    %v3848 = vand.u32 %v3847, 4294901760
    %3849 = vmatpush.msra.mxu0 %v3848
    %v3850 = vand.u32 %v3783, 4294901760
    %3851 = vmatmul.f32.gmra.mxu0 %v3850
    %v3852 = vpop.f32.mrf.mxu0
    %v3853 = vadd.f32 %v3812, %v3852
    %3854 = vdwg.mxu0
    %3855 = vmatpush.msra.mxu0 0.0
    %3856 = vmatpush.msra.mxu0 0.0
    %3857 = vmatpush.msra.mxu0 0.0
    %3858 = vmatpush.msra.mxu0 0.0
    %3859 = vmatpush.msra.mxu0 0.0
    %3860 = vmatpush.msra.mxu0 0.0
    %3861 = vmatpush.msra.mxu0 0.0
    %3862 = vmatpush.msra.mxu0 0.0
    %3863 = vmatpush.msra.mxu0 0.0
    %3864 = vmatpush.msra.mxu0 0.0
    %3865 = vmatpush.msra.mxu0 0.0
    %3866 = vmatpush.msra.mxu0 0.0
    %v3867 = vand.u32 %v444, 4294901760
    %v3868 = vsub.f32 %v444, %v3867
    %3869 = vmatpush.msra.mxu0 %v3868
    %v3870 = vand.u32 %v443, 4294901760
    %v3871 = vsub.f32 %v443, %v3870
    %3872 = vmatpush.msra.mxu0 %v3871
    %v3873 = vand.u32 %v442, 4294901760
    %v3874 = vsub.f32 %v442, %v3873
    %3875 = vmatpush.msra.mxu0 %v3874
    %v3876 = vand.u32 %v441, 4294901760
    %v3877 = vsub.f32 %v441, %v3876
    %3878 = vmatpush.msra.mxu0 %v3877
    %v3879 = vand.u32 %v3783, 4294901760
    %v3880 = vsub.f32 %v3783, %v3879
    %3881 = vmatmul.f32.gmra.mxu0 %v3880
    %v3882 = vpop.f32.mrf.mxu0
    %v3883 = vadd.f32 %v3853, %v3882
    %3884 = vdwg.mxu0
    %3885 = vmatpush.msra.mxu0 0.0
    %3886 = vmatpush.msra.mxu0 0.0
    %3887 = vmatpush.msra.mxu0 0.0
    %3888 = vmatpush.msra.mxu0 0.0
    %3889 = vmatpush.msra.mxu0 0.0
    %3890 = vmatpush.msra.mxu0 0.0
    %3891 = vmatpush.msra.mxu0 0.0
    %3892 = vmatpush.msra.mxu0 0.0
    %3893 = vmatpush.msra.mxu0 0.0
    %3894 = vmatpush.msra.mxu0 0.0
    %3895 = vmatpush.msra.mxu0 0.0
    %3896 = vmatpush.msra.mxu0 0.0
    %v3897 = vand.u32 %v444, 4294901760
    %3898 = vmatpush.msra.mxu0 %v3897
    %v3899 = vand.u32 %v443, 4294901760
    %3900 = vmatpush.msra.mxu0 %v3899
    %v3901 = vand.u32 %v442, 4294901760
    %3902 = vmatpush.msra.mxu0 %v3901
    %v3903 = vand.u32 %v441, 4294901760
    %3904 = vmatpush.msra.mxu0 %v3903
    %v3905 = vand.u32 %v3783, 4294901760
    %v3906 = vsub.f32 %v3783, %v3905
    %v3907 = vand.u32 %v3906, 4294901760
    %3908 = vmatmul.f32.gmra.mxu0 %v3907
    %v3909 = vpop.f32.mrf.mxu0
    %v3910 = vadd.f32 %v3883, %v3909
    %3911 = vdwg.mxu0
    %3912 = vmatpush.msra.mxu0 0.0
    %3913 = vmatpush.msra.mxu0 0.0
    %3914 = vmatpush.msra.mxu0 0.0
    %3915 = vmatpush.msra.mxu0 0.0
    %3916 = vmatpush.msra.mxu0 0.0
    %3917 = vmatpush.msra.mxu0 0.0
    %3918 = vmatpush.msra.mxu0 0.0
    %3919 = vmatpush.msra.mxu0 0.0
    %3920 = vmatpush.msra.mxu0 0.0
    %3921 = vmatpush.msra.mxu0 0.0
    %3922 = vmatpush.msra.mxu0 0.0
    %3923 = vmatpush.msra.mxu0 0.0
    %v3924 = vand.u32 %v444, 4294901760
    %v3925 = vsub.f32 %v444, %v3924
    %v3926 = vand.u32 %v3925, 4294901760
    %3927 = vmatpush.msra.mxu0 %v3926
    %v3928 = vand.u32 %v443, 4294901760
    %v3929 = vsub.f32 %v443, %v3928
    %v3930 = vand.u32 %v3929, 4294901760
    %3931 = vmatpush.msra.mxu0 %v3930
    %v3932 = vand.u32 %v442, 4294901760
    %v3933 = vsub.f32 %v442, %v3932
    %v3934 = vand.u32 %v3933, 4294901760
    %3935 = vmatpush.msra.mxu0 %v3934
    %v3936 = vand.u32 %v441, 4294901760
    %v3937 = vsub.f32 %v441, %v3936
    %v3938 = vand.u32 %v3937, 4294901760
    %3939 = vmatpush.msra.mxu0 %v3938
    %v3940 = vand.u32 %v3783, 4294901760
    %3941 = vmatmul.f32.gmra.mxu0 %v3940
    %v3942 = vpop.f32.mrf.mxu0
    %v3943 = vadd.f32 %v3910, %v3942
    %3944 = vdwg.mxu0
    %3945 = vmatpush.msra.mxu0 0.0
    %3946 = vmatpush.msra.mxu0 0.0
    %3947 = vmatpush.msra.mxu0 0.0
    %3948 = vmatpush.msra.mxu0 0.0
    %3949 = vmatpush.msra.mxu0 0.0
    %3950 = vmatpush.msra.mxu0 0.0
    %3951 = vmatpush.msra.mxu0 0.0
    %3952 = vmatpush.msra.mxu0 0.0
    %3953 = vmatpush.msra.mxu0 0.0
    %3954 = vmatpush.msra.mxu0 0.0
    %3955 = vmatpush.msra.mxu0 0.0
    %3956 = vmatpush.msra.mxu0 0.0
    %v3957 = vand.u32 %v444, 4294901760
    %3958 = vmatpush.msra.mxu0 %v3957
    %v3959 = vand.u32 %v443, 4294901760
    %3960 = vmatpush.msra.mxu0 %v3959
    %v3961 = vand.u32 %v442, 4294901760
    %3962 = vmatpush.msra.mxu0 %v3961
    %v3963 = vand.u32 %v441, 4294901760
    %3964 = vmatpush.msra.mxu0 %v3963
    %v3965 = vand.u32 %v3783, 4294901760
    %3966 = vmatmul.f32.gmra.mxu0 %v3965
    %v3967 = vpop.f32.mrf.mxu0
    %v3968 = vadd.f32 %v3943, %v3967
    %3969 = vdwg.mxu0
    %v3971 = vsel %vm452, %v3968, 0
    %3973 = vmatpush.msra.mxu0 0.0
    %3974 = vmatpush.msra.mxu0 0.0
    %3975 = vmatpush.msra.mxu0 0.0
    %3976 = vmatpush.msra.mxu0 0.0
    %3977 = vmatpush.msra.mxu0 0.0
    %3978 = vmatpush.msra.mxu0 0.0
    %3979 = vmatpush.msra.mxu0 0.0
    %3980 = vmatpush.msra.mxu0 0.0
    %3981 = vmatpush.msra.mxu0 0.0
    %3982 = vmatpush.msra.mxu0 0.0
    %3983 = vmatpush.msra.mxu0 0.0
    %3984 = vmatpush.msra.mxu0 0.0
    %3985 = vmatpush.msra.mxu0 0.0
    %3986 = vmatpush.msra.mxu0 0.0
    %v3987 = vand.u32 %v447, 4294901760
    %3988 = vmatpush.msra.mxu0 %v3987
    %v3989 = vand.u32 %v446, 4294901760
    %3990 = vmatpush.msra.mxu0 %v3989
    %v3991 = vand.u32 %v3971, 4294901760
    %v3992 = vsub.f32 %v3971, %v3991
    %v3993 = vand.u32 %v3992, 4294901760
    %v3994 = vsub.f32 %v3992, %v3993
    %v3995 = vand.u32 %v3994, 4294901760
    %3996 = vmatmul.f32.gmra.mxu0 %v3995
    %v3997 = vpop.f32.mrf.mxu0
    %v3998 = vadd.f32 %v888, %v3997
    %3999 = vdwg.mxu0
    %4000 = vmatpush.msra.mxu0 0.0
    %4001 = vmatpush.msra.mxu0 0.0
    %4002 = vmatpush.msra.mxu0 0.0
    %4003 = vmatpush.msra.mxu0 0.0
    %4004 = vmatpush.msra.mxu0 0.0
    %4005 = vmatpush.msra.mxu0 0.0
    %4006 = vmatpush.msra.mxu0 0.0
    %4007 = vmatpush.msra.mxu0 0.0
    %4008 = vmatpush.msra.mxu0 0.0
    %4009 = vmatpush.msra.mxu0 0.0
    %4010 = vmatpush.msra.mxu0 0.0
    %4011 = vmatpush.msra.mxu0 0.0
    %4012 = vmatpush.msra.mxu0 0.0
    %4013 = vmatpush.msra.mxu0 0.0
    %v4014 = vand.u32 %v447, 4294901760
    %v4015 = vsub.f32 %v447, %v4014
    %v4016 = vand.u32 %v4015, 4294901760
    %v4017 = vsub.f32 %v4015, %v4016
    %v4018 = vand.u32 %v4017, 4294901760
    %4019 = vmatpush.msra.mxu0 %v4018
    %v4020 = vand.u32 %v446, 4294901760
    %v4021 = vsub.f32 %v446, %v4020
    %v4022 = vand.u32 %v4021, 4294901760
    %v4023 = vsub.f32 %v4021, %v4022
    %v4024 = vand.u32 %v4023, 4294901760
    %4025 = vmatpush.msra.mxu0 %v4024
    %v4026 = vand.u32 %v3971, 4294901760
    %4027 = vmatmul.f32.gmra.mxu0 %v4026
    %v4028 = vpop.f32.mrf.mxu0
    %v4029 = vadd.f32 %v3998, %v4028
    %4030 = vdwg.mxu0
    %4031 = vmatpush.msra.mxu0 0.0
    %4032 = vmatpush.msra.mxu0 0.0
    %4033 = vmatpush.msra.mxu0 0.0
    %4034 = vmatpush.msra.mxu0 0.0
    %4035 = vmatpush.msra.mxu0 0.0
    %4036 = vmatpush.msra.mxu0 0.0
    %4037 = vmatpush.msra.mxu0 0.0
    %4038 = vmatpush.msra.mxu0 0.0
    %4039 = vmatpush.msra.mxu0 0.0
    %4040 = vmatpush.msra.mxu0 0.0
    %4041 = vmatpush.msra.mxu0 0.0
    %4042 = vmatpush.msra.mxu0 0.0
    %4043 = vmatpush.msra.mxu0 0.0
    %4044 = vmatpush.msra.mxu0 0.0
    %v4045 = vand.u32 %v447, 4294901760
    %v4046 = vsub.f32 %v447, %v4045
    %4047 = vmatpush.msra.mxu0 %v4046
    %v4048 = vand.u32 %v446, 4294901760
    %v4049 = vsub.f32 %v446, %v4048
    %4050 = vmatpush.msra.mxu0 %v4049
    %v4051 = vand.u32 %v3971, 4294901760
    %v4052 = vsub.f32 %v3971, %v4051
    %4053 = vmatmul.f32.gmra.mxu0 %v4052
    %v4054 = vpop.f32.mrf.mxu0
    %v4055 = vadd.f32 %v4029, %v4054
    %4056 = vdwg.mxu0
    %4057 = vmatpush.msra.mxu0 0.0
    %4058 = vmatpush.msra.mxu0 0.0
    %4059 = vmatpush.msra.mxu0 0.0
    %4060 = vmatpush.msra.mxu0 0.0
    %4061 = vmatpush.msra.mxu0 0.0
    %4062 = vmatpush.msra.mxu0 0.0
    %4063 = vmatpush.msra.mxu0 0.0
    %4064 = vmatpush.msra.mxu0 0.0
    %4065 = vmatpush.msra.mxu0 0.0
    %4066 = vmatpush.msra.mxu0 0.0
    %4067 = vmatpush.msra.mxu0 0.0
    %4068 = vmatpush.msra.mxu0 0.0
    %4069 = vmatpush.msra.mxu0 0.0
    %4070 = vmatpush.msra.mxu0 0.0
    %v4071 = vand.u32 %v447, 4294901760
    %4072 = vmatpush.msra.mxu0 %v4071
    %v4073 = vand.u32 %v446, 4294901760
    %4074 = vmatpush.msra.mxu0 %v4073
    %v4075 = vand.u32 %v3971, 4294901760
    %v4076 = vsub.f32 %v3971, %v4075
    %v4077 = vand.u32 %v4076, 4294901760
    %4078 = vmatmul.f32.gmra.mxu0 %v4077
    %v4079 = vpop.f32.mrf.mxu0
    %v4080 = vadd.f32 %v4055, %v4079
    %4081 = vdwg.mxu0
    %4082 = vmatpush.msra.mxu0 0.0
    %4083 = vmatpush.msra.mxu0 0.0
    %4084 = vmatpush.msra.mxu0 0.0
    %4085 = vmatpush.msra.mxu0 0.0
    %4086 = vmatpush.msra.mxu0 0.0
    %4087 = vmatpush.msra.mxu0 0.0
    %4088 = vmatpush.msra.mxu0 0.0
    %4089 = vmatpush.msra.mxu0 0.0
    %4090 = vmatpush.msra.mxu0 0.0
    %4091 = vmatpush.msra.mxu0 0.0
    %4092 = vmatpush.msra.mxu0 0.0
    %4093 = vmatpush.msra.mxu0 0.0
    %4094 = vmatpush.msra.mxu0 0.0
    %4095 = vmatpush.msra.mxu0 0.0
    %v4096 = vand.u32 %v447, 4294901760
    %v4097 = vsub.f32 %v447, %v4096
    %v4098 = vand.u32 %v4097, 4294901760
    %4099 = vmatpush.msra.mxu0 %v4098
    %v4100 = vand.u32 %v446, 4294901760
    %v4101 = vsub.f32 %v446, %v4100
    %v4102 = vand.u32 %v4101, 4294901760
    %4103 = vmatpush.msra.mxu0 %v4102
    %v4104 = vand.u32 %v3971, 4294901760
    %4105 = vmatmul.f32.gmra.mxu0 %v4104
    %v4106 = vpop.f32.mrf.mxu0
    %v4107 = vadd.f32 %v4080, %v4106
    %4108 = vdwg.mxu0
    %4109 = vmatpush.msra.mxu0 0.0
    %4110 = vmatpush.msra.mxu0 0.0
    %4111 = vmatpush.msra.mxu0 0.0
    %4112 = vmatpush.msra.mxu0 0.0
    %4113 = vmatpush.msra.mxu0 0.0
    %4114 = vmatpush.msra.mxu0 0.0
    %4115 = vmatpush.msra.mxu0 0.0
    %4116 = vmatpush.msra.mxu0 0.0
    %4117 = vmatpush.msra.mxu0 0.0
    %4118 = vmatpush.msra.mxu0 0.0
    %4119 = vmatpush.msra.mxu0 0.0
    %4120 = vmatpush.msra.mxu0 0.0
    %4121 = vmatpush.msra.mxu0 0.0
    %4122 = vmatpush.msra.mxu0 0.0
    %v4123 = vand.u32 %v447, 4294901760
    %4124 = vmatpush.msra.mxu0 %v4123
    %v4125 = vand.u32 %v446, 4294901760
    %4126 = vmatpush.msra.mxu0 %v4125
    %v4127 = vand.u32 %v3971, 4294901760
    %4128 = vmatmul.f32.gmra.mxu0 %v4127
    %v4129 = vpop.f32.mrf.mxu0
    %v4130 = vadd.f32 %v4107, %v4129
    %4131 = vdwg.mxu0
    %v4132 = vsel %vm166, %v4130, -inf
    %4133 = vmax.xlane.f32.xlu0 %v4132
    %v4134 = vpop.xlane.xlu0 %4133
    %v4135 = vsub.f32 %v4130, %v4134
    %v4136 = vmul.f32 %v4135, 1.442695
    %v4137 = vpow.pop %v4136
    %v4138 = vsel %vm166, %v4137, 0.0
    %4139 = vadd.xlane.f32.xlu0 %v4138
    %v4140 = vpop.xlane.xlu0 %4139
    %v4141 = vlog2.pop %v4140
    %v4142 = vmul.f32 %v4141, 0.6931472
    %v4143 = vsub.f32 %v4135, %v4142
    %4144 = vst [vmem:[#allocation13 + $0x6] sm:$0x1] %v4143
    %4145 = vst [vmem:[#allocation13 + $0xd] sm:$0x2] %v4143
    %v4147 = vrot.slane %v3701, 6
    %4148 = vrot.lane.b32.xlu0 %v4147, 32
    %v4149 = vpop.permute.xlu0 %4148
    %v4150 = vsel %vm482, %v4149, 0
    %4152 = vmatpush.msra.mxu0 0.0
    %4153 = vmatpush.msra.mxu0 0.0
    %4154 = vmatpush.msra.mxu0 0.0
    %4155 = vmatpush.msra.mxu0 0.0
    %4156 = vmatpush.msra.mxu0 0.0
    %4157 = vmatpush.msra.mxu0 0.0
    %4158 = vmatpush.msra.mxu0 0.0
    %4159 = vmatpush.msra.mxu0 0.0
    %4160 = vmatpush.msra.mxu0 0.0
    %4161 = vmatpush.msra.mxu0 0.0
    %4162 = vmatpush.msra.mxu0 0.0
    %4163 = vmatpush.msra.mxu0 0.0
    %4164 = vmatpush.msra.mxu0 %v430
    %4165 = vmatpush.msra.mxu0 %v429
    %4166 = vmatpush.msra.mxu0 %v428
    %4167 = vmatpush.msra.mxu0 %v427
    %4168 = vmatmul.f32.gmra.mxu0 %v4150
    %v4169 = vpop.f32.mrf.mxu0
    %v4170 = vadd.f32 %v614, %v4169
    %4171 = vdwg.mxu0
    %4172 = vmatpush.msra.mxu0 0.0
    %4173 = vmatpush.msra.mxu0 0.0
    %4174 = vmatpush.msra.mxu0 0.0
    %4175 = vmatpush.msra.mxu0 0.0
    %4176 = vmatpush.msra.mxu0 0.0
    %4177 = vmatpush.msra.mxu0 0.0
    %4178 = vmatpush.msra.mxu0 0.0
    %4179 = vmatpush.msra.mxu0 0.0
    %4180 = vmatpush.msra.mxu0 0.0
    %4181 = vmatpush.msra.mxu0 0.0
    %4182 = vmatpush.msra.mxu0 0.0
    %4183 = vmatpush.msra.mxu0 0.0
    %4184 = vmatpush.msra.mxu0 %v438
    %4185 = vmatpush.msra.mxu0 %v437
    %4186 = vmatpush.msra.mxu0 %v436
    %4187 = vmatpush.msra.mxu0 %v435
    %4188 = vmatmul.f32.gmra.mxu0 %v3783
    %v4189 = vpop.f32.mrf.mxu0
    %v4190 = vadd.f32 0.0, %v4189
    %4191 = vdwg.mxu0
    %v4192 = vadd.f32 %v4170, %v4190
    %v4193 = vxor.u32 %v4192, 2147483648
    %v4194 = vmul.f32 %v4193, 1.442695
    %v4195 = vpow.pop %v4194
    %v4196 = vadd.f32 %v4195, 1.0
    %v4197 = vrcp.pop %v4196
    %v4198 = vmul.f32 %v4196, %v4197
    %v4199 = vsub.f32 1.0, %v4198
    %v4200 = vmul.f32 %v4197, %v4199
    %v4201 = vadd.f32 %v4197, %v4200
    %vm4202 = vweird.f32 %v4196
    %vm4203 = vweird.f32 %v4197
    %vm4204 = vmor %vm4202, %vm4203
    %v4205 = vsel %vm4204, %v4197, %v4201
    %v4206 = vand.u32 2147483647, %v4196
    %vm4207 = vcmp.eq.f32.partialorder %v4206, 8.507059e+37
    %v4208 = vand.u32 %v4196, 2147483648
    %v4209 = vor.u32 1.1754944e-38, %v4208
    %v4210 = vsel %vm4207, %v4209, %v4205
    %v4211 = vmul.f32 1.0, %v4210
    %v4212 = vtanh.pop %v4192
    %v4213 = vmul.f32 %v4211, %v3773
    %4215 = vrot.lane.b32.xlu0 %v4212, 64
    %v4216 = vpop.permute.xlu0 %4215
    %v4218 = vmul.f32 %v4211, %v4216
    %4220 = vrot.lane.b32.xlu0 %v4218, 32
    %v4221 = vpop.permute.xlu0 %4220
    %v4223 = vadd.f32 %v4213, %v4221
    %v4224 = vtanh.pop %v4223
    %4226 = vrot.lane.b32.xlu0 %v4224, 64
    %v4227 = vpop.permute.xlu0 %4226
    %v4229 = vmul.f32 %v4211, %v4227
    %4231 = vrot.lane.b32.xlu0 %v4229, 32
    %v4232 = vpop.permute.xlu0 %4231
    %v4233 = vsel %vm482, %v4232, 0
    %4235 = vmatpush.msra.mxu0 0.0
    %4236 = vmatpush.msra.mxu0 0.0
    %4237 = vmatpush.msra.mxu0 0.0
    %4238 = vmatpush.msra.mxu0 0.0
    %4239 = vmatpush.msra.mxu0 0.0
    %4240 = vmatpush.msra.mxu0 0.0
    %4241 = vmatpush.msra.mxu0 0.0
    %4242 = vmatpush.msra.mxu0 0.0
    %4243 = vmatpush.msra.mxu0 0.0
    %4244 = vmatpush.msra.mxu0 0.0
    %4245 = vmatpush.msra.mxu0 0.0
    %4246 = vmatpush.msra.mxu0 0.0
    %v4247 = vand.u32 %v444, 4294901760
    %4248 = vmatpush.msra.mxu0 %v4247
    %v4249 = vand.u32 %v443, 4294901760
    %4250 = vmatpush.msra.mxu0 %v4249
    %v4251 = vand.u32 %v442, 4294901760
    %4252 = vmatpush.msra.mxu0 %v4251
    %v4253 = vand.u32 %v441, 4294901760
    %4254 = vmatpush.msra.mxu0 %v4253
    %v4255 = vand.u32 %v4233, 4294901760
    %v4256 = vsub.f32 %v4233, %v4255
    %v4257 = vand.u32 %v4256, 4294901760
    %v4258 = vsub.f32 %v4256, %v4257
    %v4259 = vand.u32 %v4258, 4294901760
    %4260 = vmatmul.f32.gmra.mxu0 %v4259
    %v4261 = vpop.f32.mrf.mxu0
    %v4262 = vadd.f32 %v695, %v4261
    %4263 = vdwg.mxu0
    %4264 = vmatpush.msra.mxu0 0.0
    %4265 = vmatpush.msra.mxu0 0.0
    %4266 = vmatpush.msra.mxu0 0.0
    %4267 = vmatpush.msra.mxu0 0.0
    %4268 = vmatpush.msra.mxu0 0.0
    %4269 = vmatpush.msra.mxu0 0.0
    %4270 = vmatpush.msra.mxu0 0.0
    %4271 = vmatpush.msra.mxu0 0.0
    %4272 = vmatpush.msra.mxu0 0.0
    %4273 = vmatpush.msra.mxu0 0.0
    %4274 = vmatpush.msra.mxu0 0.0
    %4275 = vmatpush.msra.mxu0 0.0
    %v4276 = vand.u32 %v444, 4294901760
    %v4277 = vsub.f32 %v444, %v4276
    %v4278 = vand.u32 %v4277, 4294901760
    %v4279 = vsub.f32 %v4277, %v4278
    %v4280 = vand.u32 %v4279, 4294901760
    %4281 = vmatpush.msra.mxu0 %v4280
    %v4282 = vand.u32 %v443, 4294901760
    %v4283 = vsub.f32 %v443, %v4282
    %v4284 = vand.u32 %v4283, 4294901760
    %v4285 = vsub.f32 %v4283, %v4284
    %v4286 = vand.u32 %v4285, 4294901760
    %4287 = vmatpush.msra.mxu0 %v4286
    %v4288 = vand.u32 %v442, 4294901760
    %v4289 = vsub.f32 %v442, %v4288
    %v4290 = vand.u32 %v4289, 4294901760
    %v4291 = vsub.f32 %v4289, %v4290
    %v4292 = vand.u32 %v4291, 4294901760
    %4293 = vmatpush.msra.mxu0 %v4292
    %v4294 = vand.u32 %v441, 4294901760
    %v4295 = vsub.f32 %v441, %v4294
    %v4296 = vand.u32 %v4295, 4294901760
    %v4297 = vsub.f32 %v4295, %v4296
    %v4298 = vand.u32 %v4297, 4294901760
    %4299 = vmatpush.msra.mxu0 %v4298
    %v4300 = vand.u32 %v4233, 4294901760
    %4301 = vmatmul.f32.gmra.mxu0 %v4300
    %v4302 = vpop.f32.mrf.mxu0
    %v4303 = vadd.f32 %v4262, %v4302
    %4304 = vdwg.mxu0
    %4305 = vmatpush.msra.mxu0 0.0
    %4306 = vmatpush.msra.mxu0 0.0
    %4307 = vmatpush.msra.mxu0 0.0
    %4308 = vmatpush.msra.mxu0 0.0
    %4309 = vmatpush.msra.mxu0 0.0
    %4310 = vmatpush.msra.mxu0 0.0
    %4311 = vmatpush.msra.mxu0 0.0
    %4312 = vmatpush.msra.mxu0 0.0
    %4313 = vmatpush.msra.mxu0 0.0
    %4314 = vmatpush.msra.mxu0 0.0
    %4315 = vmatpush.msra.mxu0 0.0
    %4316 = vmatpush.msra.mxu0 0.0
    %v4317 = vand.u32 %v444, 4294901760
    %v4318 = vsub.f32 %v444, %v4317
    %4319 = vmatpush.msra.mxu0 %v4318
    %v4320 = vand.u32 %v443, 4294901760
    %v4321 = vsub.f32 %v443, %v4320
    %4322 = vmatpush.msra.mxu0 %v4321
    %v4323 = vand.u32 %v442, 4294901760
    %v4324 = vsub.f32 %v442, %v4323
    %4325 = vmatpush.msra.mxu0 %v4324
    %v4326 = vand.u32 %v441, 4294901760
    %v4327 = vsub.f32 %v441, %v4326
    %4328 = vmatpush.msra.mxu0 %v4327
    %v4329 = vand.u32 %v4233, 4294901760
    %v4330 = vsub.f32 %v4233, %v4329
    %4331 = vmatmul.f32.gmra.mxu0 %v4330
    %v4332 = vpop.f32.mrf.mxu0
    %v4333 = vadd.f32 %v4303, %v4332
    %4334 = vdwg.mxu0
    %4335 = vmatpush.msra.mxu0 0.0
    %4336 = vmatpush.msra.mxu0 0.0
    %4337 = vmatpush.msra.mxu0 0.0
    %4338 = vmatpush.msra.mxu0 0.0
    %4339 = vmatpush.msra.mxu0 0.0
    %4340 = vmatpush.msra.mxu0 0.0
    %4341 = vmatpush.msra.mxu0 0.0
    %4342 = vmatpush.msra.mxu0 0.0
    %4343 = vmatpush.msra.mxu0 0.0
    %4344 = vmatpush.msra.mxu0 0.0
    %4345 = vmatpush.msra.mxu0 0.0
    %4346 = vmatpush.msra.mxu0 0.0
    %v4347 = vand.u32 %v444, 4294901760
    %4348 = vmatpush.msra.mxu0 %v4347
    %v4349 = vand.u32 %v443, 4294901760
    %4350 = vmatpush.msra.mxu0 %v4349
    %v4351 = vand.u32 %v442, 4294901760
    %4352 = vmatpush.msra.mxu0 %v4351
    %v4353 = vand.u32 %v441, 4294901760
    %4354 = vmatpush.msra.mxu0 %v4353
    %v4355 = vand.u32 %v4233, 4294901760
    %v4356 = vsub.f32 %v4233, %v4355
    %v4357 = vand.u32 %v4356, 4294901760
    %4358 = vmatmul.f32.gmra.mxu0 %v4357
    %v4359 = vpop.f32.mrf.mxu0
    %v4360 = vadd.f32 %v4333, %v4359
    %4361 = vdwg.mxu0
    %4362 = vmatpush.msra.mxu0 0.0
    %4363 = vmatpush.msra.mxu0 0.0
    %4364 = vmatpush.msra.mxu0 0.0
    %4365 = vmatpush.msra.mxu0 0.0
    %4366 = vmatpush.msra.mxu0 0.0
    %4367 = vmatpush.msra.mxu0 0.0
    %4368 = vmatpush.msra.mxu0 0.0
    %4369 = vmatpush.msra.mxu0 0.0
    %4370 = vmatpush.msra.mxu0 0.0
    %4371 = vmatpush.msra.mxu0 0.0
    %4372 = vmatpush.msra.mxu0 0.0
    %4373 = vmatpush.msra.mxu0 0.0
    %v4374 = vand.u32 %v444, 4294901760
    %v4375 = vsub.f32 %v444, %v4374
    %v4376 = vand.u32 %v4375, 4294901760
    %4377 = vmatpush.msra.mxu0 %v4376
    %v4378 = vand.u32 %v443, 4294901760
    %v4379 = vsub.f32 %v443, %v4378
    %v4380 = vand.u32 %v4379, 4294901760
    %4381 = vmatpush.msra.mxu0 %v4380
    %v4382 = vand.u32 %v442, 4294901760
    %v4383 = vsub.f32 %v442, %v4382
    %v4384 = vand.u32 %v4383, 4294901760
    %4385 = vmatpush.msra.mxu0 %v4384
    %v4386 = vand.u32 %v441, 4294901760
    %v4387 = vsub.f32 %v441, %v4386
    %v4388 = vand.u32 %v4387, 4294901760
    %4389 = vmatpush.msra.mxu0 %v4388
    %v4390 = vand.u32 %v4233, 4294901760
    %4391 = vmatmul.f32.gmra.mxu0 %v4390
    %v4392 = vpop.f32.mrf.mxu0
    %v4393 = vadd.f32 %v4360, %v4392
    %4394 = vdwg.mxu0
    %4395 = vmatpush.msra.mxu0 0.0
    %4396 = vmatpush.msra.mxu0 0.0
    %4397 = vmatpush.msra.mxu0 0.0
    %4398 = vmatpush.msra.mxu0 0.0
    %4399 = vmatpush.msra.mxu0 0.0
    %4400 = vmatpush.msra.mxu0 0.0
    %4401 = vmatpush.msra.mxu0 0.0
    %4402 = vmatpush.msra.mxu0 0.0
    %4403 = vmatpush.msra.mxu0 0.0
    %4404 = vmatpush.msra.mxu0 0.0
    %4405 = vmatpush.msra.mxu0 0.0
    %4406 = vmatpush.msra.mxu0 0.0
    %v4407 = vand.u32 %v444, 4294901760
    %4408 = vmatpush.msra.mxu0 %v4407
    %v4409 = vand.u32 %v443, 4294901760
    %4410 = vmatpush.msra.mxu0 %v4409
    %v4411 = vand.u32 %v442, 4294901760
    %4412 = vmatpush.msra.mxu0 %v4411
    %v4413 = vand.u32 %v441, 4294901760
    %4414 = vmatpush.msra.mxu0 %v4413
    %v4415 = vand.u32 %v4233, 4294901760
    %4416 = vmatmul.f32.gmra.mxu0 %v4415
    %v4417 = vpop.f32.mrf.mxu0
    %v4418 = vadd.f32 %v4393, %v4417
    %4419 = vdwg.mxu0
    %v4421 = vsel %vm452, %v4418, 0
    %4423 = vmatpush.msra.mxu0 0.0
    %4424 = vmatpush.msra.mxu0 0.0
    %4425 = vmatpush.msra.mxu0 0.0
    %4426 = vmatpush.msra.mxu0 0.0
    %4427 = vmatpush.msra.mxu0 0.0
    %4428 = vmatpush.msra.mxu0 0.0
    %4429 = vmatpush.msra.mxu0 0.0
    %4430 = vmatpush.msra.mxu0 0.0
    %4431 = vmatpush.msra.mxu0 0.0
    %4432 = vmatpush.msra.mxu0 0.0
    %4433 = vmatpush.msra.mxu0 0.0
    %4434 = vmatpush.msra.mxu0 0.0
    %4435 = vmatpush.msra.mxu0 0.0
    %4436 = vmatpush.msra.mxu0 0.0
    %v4437 = vand.u32 %v447, 4294901760
    %4438 = vmatpush.msra.mxu0 %v4437
    %v4439 = vand.u32 %v446, 4294901760
    %4440 = vmatpush.msra.mxu0 %v4439
    %v4441 = vand.u32 %v4421, 4294901760
    %v4442 = vsub.f32 %v4421, %v4441
    %v4443 = vand.u32 %v4442, 4294901760
    %v4444 = vsub.f32 %v4442, %v4443
    %v4445 = vand.u32 %v4444, 4294901760
    %4446 = vmatmul.f32.gmra.mxu0 %v4445
    %v4447 = vpop.f32.mrf.mxu0
    %v4448 = vadd.f32 %v888, %v4447
    %4449 = vdwg.mxu0
    %4450 = vmatpush.msra.mxu0 0.0
    %4451 = vmatpush.msra.mxu0 0.0
    %4452 = vmatpush.msra.mxu0 0.0
    %4453 = vmatpush.msra.mxu0 0.0
    %4454 = vmatpush.msra.mxu0 0.0
    %4455 = vmatpush.msra.mxu0 0.0
    %4456 = vmatpush.msra.mxu0 0.0
    %4457 = vmatpush.msra.mxu0 0.0
    %4458 = vmatpush.msra.mxu0 0.0
    %4459 = vmatpush.msra.mxu0 0.0
    %4460 = vmatpush.msra.mxu0 0.0
    %4461 = vmatpush.msra.mxu0 0.0
    %4462 = vmatpush.msra.mxu0 0.0
    %4463 = vmatpush.msra.mxu0 0.0
    %v4464 = vand.u32 %v447, 4294901760
    %v4465 = vsub.f32 %v447, %v4464
    %v4466 = vand.u32 %v4465, 4294901760
    %v4467 = vsub.f32 %v4465, %v4466
    %v4468 = vand.u32 %v4467, 4294901760
    %4469 = vmatpush.msra.mxu0 %v4468
    %v4470 = vand.u32 %v446, 4294901760
    %v4471 = vsub.f32 %v446, %v4470
    %v4472 = vand.u32 %v4471, 4294901760
    %v4473 = vsub.f32 %v4471, %v4472
    %v4474 = vand.u32 %v4473, 4294901760
    %4475 = vmatpush.msra.mxu0 %v4474
    %v4476 = vand.u32 %v4421, 4294901760
    %4477 = vmatmul.f32.gmra.mxu0 %v4476
    %v4478 = vpop.f32.mrf.mxu0
    %v4479 = vadd.f32 %v4448, %v4478
    %4480 = vdwg.mxu0
    %4481 = vmatpush.msra.mxu0 0.0
    %4482 = vmatpush.msra.mxu0 0.0
    %4483 = vmatpush.msra.mxu0 0.0
    %4484 = vmatpush.msra.mxu0 0.0
    %4485 = vmatpush.msra.mxu0 0.0
    %4486 = vmatpush.msra.mxu0 0.0
    %4487 = vmatpush.msra.mxu0 0.0
    %4488 = vmatpush.msra.mxu0 0.0
    %4489 = vmatpush.msra.mxu0 0.0
    %4490 = vmatpush.msra.mxu0 0.0
    %4491 = vmatpush.msra.mxu0 0.0
    %4492 = vmatpush.msra.mxu0 0.0
    %4493 = vmatpush.msra.mxu0 0.0
    %4494 = vmatpush.msra.mxu0 0.0
    %v4495 = vand.u32 %v447, 4294901760
    %v4496 = vsub.f32 %v447, %v4495
    %4497 = vmatpush.msra.mxu0 %v4496
    %v4498 = vand.u32 %v446, 4294901760
    %v4499 = vsub.f32 %v446, %v4498
    %4500 = vmatpush.msra.mxu0 %v4499
    %v4501 = vand.u32 %v4421, 4294901760
    %v4502 = vsub.f32 %v4421, %v4501
    %4503 = vmatmul.f32.gmra.mxu0 %v4502
    %v4504 = vpop.f32.mrf.mxu0
    %v4505 = vadd.f32 %v4479, %v4504
    %4506 = vdwg.mxu0
    %4507 = vmatpush.msra.mxu0 0.0
    %4508 = vmatpush.msra.mxu0 0.0
    %4509 = vmatpush.msra.mxu0 0.0
    %4510 = vmatpush.msra.mxu0 0.0
    %4511 = vmatpush.msra.mxu0 0.0
    %4512 = vmatpush.msra.mxu0 0.0
    %4513 = vmatpush.msra.mxu0 0.0
    %4514 = vmatpush.msra.mxu0 0.0
    %4515 = vmatpush.msra.mxu0 0.0
    %4516 = vmatpush.msra.mxu0 0.0
    %4517 = vmatpush.msra.mxu0 0.0
    %4518 = vmatpush.msra.mxu0 0.0
    %4519 = vmatpush.msra.mxu0 0.0
    %4520 = vmatpush.msra.mxu0 0.0
    %v4521 = vand.u32 %v447, 4294901760
    %4522 = vmatpush.msra.mxu0 %v4521
    %v4523 = vand.u32 %v446, 4294901760
    %4524 = vmatpush.msra.mxu0 %v4523
    %v4525 = vand.u32 %v4421, 4294901760
    %v4526 = vsub.f32 %v4421, %v4525
    %v4527 = vand.u32 %v4526, 4294901760
    %4528 = vmatmul.f32.gmra.mxu0 %v4527
    %v4529 = vpop.f32.mrf.mxu0
    %v4530 = vadd.f32 %v4505, %v4529
    %4531 = vdwg.mxu0
    %4532 = vmatpush.msra.mxu0 0.0
    %4533 = vmatpush.msra.mxu0 0.0
    %4534 = vmatpush.msra.mxu0 0.0
    %4535 = vmatpush.msra.mxu0 0.0
    %4536 = vmatpush.msra.mxu0 0.0
    %4537 = vmatpush.msra.mxu0 0.0
    %4538 = vmatpush.msra.mxu0 0.0
    %4539 = vmatpush.msra.mxu0 0.0
    %4540 = vmatpush.msra.mxu0 0.0
    %4541 = vmatpush.msra.mxu0 0.0
    %4542 = vmatpush.msra.mxu0 0.0
    %4543 = vmatpush.msra.mxu0 0.0
    %4544 = vmatpush.msra.mxu0 0.0
    %4545 = vmatpush.msra.mxu0 0.0
    %v4546 = vand.u32 %v447, 4294901760
    %v4547 = vsub.f32 %v447, %v4546
    %v4548 = vand.u32 %v4547, 4294901760
    %4549 = vmatpush.msra.mxu0 %v4548
    %v4550 = vand.u32 %v446, 4294901760
    %v4551 = vsub.f32 %v446, %v4550
    %v4552 = vand.u32 %v4551, 4294901760
    %4553 = vmatpush.msra.mxu0 %v4552
    %v4554 = vand.u32 %v4421, 4294901760
    %4555 = vmatmul.f32.gmra.mxu0 %v4554
    %v4556 = vpop.f32.mrf.mxu0
    %v4557 = vadd.f32 %v4530, %v4556
    %4558 = vdwg.mxu0
    %4559 = vmatpush.msra.mxu0 0.0
    %4560 = vmatpush.msra.mxu0 0.0
    %4561 = vmatpush.msra.mxu0 0.0
    %4562 = vmatpush.msra.mxu0 0.0
    %4563 = vmatpush.msra.mxu0 0.0
    %4564 = vmatpush.msra.mxu0 0.0
    %4565 = vmatpush.msra.mxu0 0.0
    %4566 = vmatpush.msra.mxu0 0.0
    %4567 = vmatpush.msra.mxu0 0.0
    %4568 = vmatpush.msra.mxu0 0.0
    %4569 = vmatpush.msra.mxu0 0.0
    %4570 = vmatpush.msra.mxu0 0.0
    %4571 = vmatpush.msra.mxu0 0.0
    %4572 = vmatpush.msra.mxu0 0.0
    %v4573 = vand.u32 %v447, 4294901760
    %4574 = vmatpush.msra.mxu0 %v4573
    %v4575 = vand.u32 %v446, 4294901760
    %4576 = vmatpush.msra.mxu0 %v4575
    %v4577 = vand.u32 %v4421, 4294901760
    %4578 = vmatmul.f32.gmra.mxu0 %v4577
    %v4579 = vpop.f32.mrf.mxu0
    %v4580 = vadd.f32 %v4557, %v4579
    %4581 = vdwg.mxu0
    %v4582 = vsel %vm166, %v4580, -inf
    %4583 = vmax.xlane.f32.xlu0 %v4582
    %v4584 = vpop.xlane.xlu0 %4583
    %v4585 = vsub.f32 %v4580, %v4584
    %v4586 = vmul.f32 %v4585, 1.442695
    %v4587 = vpow.pop %v4586
    %v4588 = vsel %vm166, %v4587, 0.0
    %4589 = vadd.xlane.f32.xlu0 %v4588
    %v4590 = vpop.xlane.xlu0 %4589
    %v4591 = vlog2.pop %v4590
    %v4592 = vmul.f32 %v4591, 0.6931472
    %v4593 = vsub.f32 %v4585, %v4592
    %4594 = vst [vmem:[#allocation13 + $0x7] sm:$0x1] %v4593
    %4595 = vst [vmem:[#allocation13 + $0xe] sm:$0x2] %v4593
    // Predicated region
    $region74: #{lstmlm_forward.1} parent=1 // pred_check
      _
    $region75: #{lstmlm_forward.1} parent=1 // pred_check_branch
      %4597 = sbr.rel (0) target = $region77
    $region76: #{lstmlm_forward.1} parent=1 // pred_region
      %4599 = vsyncadd [#allocation4], 0
      %s4600 = sshll.u32 [#allocation13], 4
      %s4601 = int_to_ptr.vmem [resolvable:$true] %s4600
      %s4602 = sshll.u32 %s12, 4
      %s4603 = int_to_ptr.hbm [resolvable:$true] %s4602
      %4608 = dma.vmem_to_hbm [thread:$0]  %s4601, 256, %s4603, [#allocation4], 128, 128, 8
    $region77: #{lstmlm_forward.1} parent=1 // pred_fallthru
      _
    // Predicated region
    $region78: #{lstmlm_forward.1} parent=1 // pred_check
      _
    $region79: #{lstmlm_forward.1} parent=1 // pred_check_branch
      %4610 = sbr.rel (0) target = $region81
    $region80: #{lstmlm_forward.1} parent=1 // pred_region
      %4612 = dma.done [#allocation4], 256
    $region81: #{lstmlm_forward.1} parent=1 // pred_fallthru
      _
    %4613 = vsyncpa [#allocation3], 1
    %4614 = vsyncpa [#allocation6], 1
    %4615 = vsyncpa [#allocation9], 1
    %4616 = vsyncpa [#allocation12], 1
    %4617 = vsyncpa [#allocation4], 1

</llo_original>
